<compile_context>
chip_gen: v7x
topology: tpu7x:2x2x1
jax: 0.10.0
libtpu: 0.0.40
codegen_flags: <defaults>
</compile_context>

<pallas_src>
import functools
import math

import jax
import jax.numpy as jnp
from jax.experimental import pallas as pl
from jax.experimental.pallas import tpu as pltpu


def _layernorm(v, w, b, eps=1e-5):
    mu = jnp.mean(v, axis=-1, keepdims=True)
    var = jnp.mean((v - mu) ** 2, axis=-1, keepdims=True)
    return (v - mu) * jax.lax.rsqrt(var + eps) * w + b


def _gelu_exact(z):
    # torch.nn.GELU() default = exact erf-based GELU
    return 0.5 * z * (1.0 + jax.lax.erf(z * (1.0 / math.sqrt(2.0))))


def cablock_kernel(n_heads, head_dim, batch, seq_q, seq_kv,
                   x_ref, cond_ref,
                   ln_w_ref, ln_b_ref,
                   wq_ref, bq_ref, wkv_ref, bkv_ref,
                   wo_ref, bo_ref,
                   ffln_w_ref, ffln_b_ref,
                   w1_ref, b1_ref, w2_ref, b2_ref,
                   out_ref,
                   attn_scr):
    """One grid step == one MHA layer; the residual stream lives in out_ref."""
    f32 = jnp.float32
    bf16 = jnp.bfloat16
    H, D = n_heads, head_dim
    B, L, Lc = batch, seq_q, seq_kv
    C = H * D

    # Layer 0: seed the resident residual stream from the input.
    @pl.when(pl.program_id(0) == 0)
    def _():
        out_ref[...] = x_ref[...]

    x = out_ref[...]                          # [B*L, C]  f32 residual stream
    cond = cond_ref[...]                      # [B*Lc, Dc] raw cond (Linear folded)

    # ---- pre-attention LayerNorm (f32) ----
    x_ln = _layernorm(x, ln_w_ref[0], ln_b_ref[0])

    # ---- projections: bf16 operands, f32 accumulation on the MXU ----
    # 1/sqrt(D) already folded into wq / bq; cond Linear folded into wkv / bkv.
    q = jnp.dot(x_ln.astype(bf16), wq_ref[0],
                preferred_element_type=f32) + bq_ref[0]               # [B*L, C]
    kv = jnp.dot(cond.astype(bf16), wkv_ref[0],
                 preferred_element_type=f32) + bkv_ref[0]             # [B*Lc, 2C]
    q_bf = q.astype(bf16)
    kv_bf = kv.astype(bf16)

    # ---- per (batch, head) attention ----
    # Head outputs are written at their output-column offset into the VMEM
    # scratch; the out-projection is then ONE K=C matmul (no per-head K=D
    # matmuls, no f32 accumulator adds).
    # TODO(synk): batch heads via dot_general / pad D & Lc to 128 for
    # production shapes instead of this Python loop.
    for b in range(B):
        q_b = q_bf[b * L:(b + 1) * L, :]          # [L, C]
        kv_b = kv_bf[b * Lc:(b + 1) * Lc, :]      # [Lc, 2C]
        for h in range(H):
            lo = h * D
            qh = q_b[:, lo:lo + D]                # [L, D]
            kh = kv_b[:, lo:lo + D]               # [Lc, D]
            vh = kv_b[:, C + lo:C + lo + D]       # [Lc, D]

            # scores: transpose expressed in dot dimension numbers
            s = jnp.einsum('ld,md->lm', qh, kh,
                           preferred_element_type=f32)                # [L, Lc]
            s = s - jnp.max(s, axis=-1, keepdims=True)
            p = jnp.exp(s)
            p = p * pl.reciprocal(jnp.sum(p, axis=-1, keepdims=True),
                                  approx=True)

            o_h = jnp.dot(p.astype(bf16), vh,
                          preferred_element_type=f32)                 # [L, D]
            attn_scr[b * L:(b + 1) * L, lo:lo + D] = o_h

    # ---- single out-projection (K = C) + bias + residual ----
    attn = jnp.dot(attn_scr[...].astype(bf16), wo_ref[0],
                   preferred_element_type=f32)
    h1 = attn + bo_ref[0] + x

    # ---- feed-forward: LN -> Linear -> GELU -> Linear, + residual ----
    h1_ln = _layernorm(h1, ffln_w_ref[0], ffln_b_ref[0])
    z = jnp.dot(h1_ln.astype(bf16), w1_ref[0],
                preferred_element_type=f32) + b1_ref[0]
    z = _gelu_exact(z)
    z = jnp.dot(z.astype(bf16), w2_ref[0],
                preferred_element_type=f32) + b2_ref[0]

    out_ref[...] = (z + h1).astype(out_ref.dtype)


def prepare_params(params, n_heads):
    """Fold / transpose / cast / stack the PyTorch-layout parameters ONCE
    (outside the forward jit)."""
    layers = params["layers"]
    lin_w = params["linear_weight"]          # [C, d_cond]
    lin_b = params["linear_bias"]            # [C]
    C = layers[0]["ln_weight"].shape[0]
    D = C // n_heads
    scale = 1.0 / math.sqrt(D)
    bf = jnp.bfloat16
    lin_wT = lin_w.T                         # [d_cond, C]

    keys = ["ln_w", "ln_b", "wq", "bq", "wkv", "bkv", "wo", "bo",
            "ffln_w", "ffln_b", "w1", "b1", "w2", "b2"]
    stk = {k: [] for k in keys}

    for layer in layers:
        in_w = layer["in_proj_weight"]       # [3C, C] (out, in) torch layout
        in_b = layer["in_proj_bias"]         # [3C]
        wq = in_w[:C].T * scale              # fold q-scale into weight
        bq = in_b[:C] * scale
        wk = in_w[C:2 * C].T                 # [C, C]
        wv = in_w[2 * C:].T                  # [C, C]
        bk = in_b[C:2 * C]
        bv = in_b[2 * C:]

        # Fold the CABlock cond Linear (d_cond -> C) into the K/V projections:
        #   k = (cond @ W_lin.T + b_lin) @ Wk + bk
        #     = cond @ (W_lin.T @ Wk) + (b_lin @ Wk + bk)
        wkv = jnp.concatenate([lin_wT @ wk, lin_wT @ wv], axis=1)         # [Dc, 2C]
        bkv = jnp.concatenate([lin_b @ wk + bk, lin_b @ wv + bv], axis=0)  # [2C]

        stk["ln_w"].append(layer["ln_weight"].reshape(1, C))
        stk["ln_b"].append(layer["ln_bias"].reshape(1, C))
        stk["wq"].append(wq.astype(bf))
        stk["bq"].append(bq.reshape(1, C))
        stk["wkv"].append(wkv.astype(bf))
        stk["bkv"].append(bkv.reshape(1, 2 * C))
        stk["wo"].append(layer["out_proj_weight"].T.astype(bf))
        stk["bo"].append(layer["out_proj_bias"].reshape(1, C))
        stk["ffln_w"].append(layer["ff_ln_weight"].reshape(1, C))
        stk["ffln_b"].append(layer["ff_ln_bias"].reshape(1, C))
        stk["w1"].append(layer["ff_w1"].T.astype(bf))
        stk["b1"].append(layer["ff_b1"].reshape(1, C))
        stk["w2"].append(layer["ff_w2"].T.astype(bf))
        stk["b2"].append(layer["ff_b2"].reshape(1, C))

    # leading layer axis -> pipelined weight DMA across the layer grid
    return {k: jnp.stack(v, axis=0) for k, v in stk.items()}


@functools.partial(jax.jit, static_argnames=("n_heads",))
def cablock_forward(x, cond, prepared, n_heads):
    """x: [B, C, S, S] f32. cond: [B, Lc, d_cond] f32. prepared: prepare_params()."""
    B, C, S1, S2 = x.shape
    L = S1 * S2
    Lc, Dc = cond.shape[1], cond.shape[2]
    NL = prepared["wq"].shape[0]
    H = n_heads
    D = C // H

    # view(B, C, -1).swapaxes(1, 2) -> flatten batch into rows: [B*L, C]
    x_flat = jnp.transpose(x.reshape(B, C, L), (0, 2, 1)).reshape(B * L, C)
    cond_flat = cond.reshape(B * Lc, Dc)

    kernel = functools.partial(cablock_kernel, H, D, B, L, Lc)

    def lvec(n):   # per-layer [NL, 1, n] vector, one layer per grid step
        return pl.BlockSpec((1, 1, n), lambda l: (l, 0, 0))

    def lmat(r, c):  # per-layer [NL, r, c] matrix
        return pl.BlockSpec((1, r, c), lambda l: (l, 0, 0))

    # ---- cost estimate (whole fused call) ----
    flops_layer = (2 * B * L * C * C                 # q projection
                   + 2 * B * Lc * Dc * 2 * C         # fused k|v projection
                   + B * H * 4 * L * Lc * D          # scores + p@v
                   + 2 * B * L * C * C               # single out-projection
                   + 4 * B * L * C * C)              # feed-forward (2 matmuls)
    transc_layer = B * H * L * Lc + B * L * C        # softmax exp + GELU erf
    w_bytes_layer = 2 * (4 * C * C + Dc * 2 * C) + 4 * (12 * C)
    bytes_accessed = 4 * B * L * C * 2 + 4 * B * Lc * Dc + NL * w_bytes_layer

    # ---- VMEM budget from actual buffer sizes (v7x has only 64 MiB) ----
    act_bytes = 4 * B * L * C * 3 + 4 * B * Lc * Dc      # x + out + scratch + cond
    vmem_limit = int(min(64 * 1024 * 1024,
                         max(16 * 1024 * 1024,
                             4 * (act_bytes + 2 * w_bytes_layer))))

    out_flat = pl.pallas_call(
        kernel,
        out_shape=jax.ShapeDtypeStruct((B * L, C), x.dtype),
        grid=(NL,),
        in_specs=[
            pl.BlockSpec((B * L, C), lambda l: (0, 0)),       # x (layer-invariant)
            pl.BlockSpec((B * Lc, Dc), lambda l: (0, 0)),     # raw cond
            lvec(C), lvec(C),                                 # ln1 w, b
            lmat(C, C), lvec(C),                              # wq, bq (scale folded)
            lmat(Dc, 2 * C), lvec(2 * C),                     # fused wkv, bkv
            lmat(C, C), lvec(C),                              # wo, bo
            lvec(C), lvec(C),                                 # ff ln w, b
            lmat(C, C), lvec(C),                              # w1, b1
            lmat(C, C), lvec(C),                              # w2, b2
        ],
        # constant block index across the layer axis -> residual stream stays
        # resident in VMEM between layers
        out_specs=pl.BlockSpec((B * L, C), lambda l: (0, 0)),
        scratch_shapes=[pltpu.VMEM((B * L, C), jnp.float32)],  # head-output slab
        compiler_params=pltpu.CompilerParams(
            dimension_semantics=("arbitrary",),               # layers are sequential
            vmem_limit_bytes=vmem_limit),
        cost_estimate=pl.CostEstimate(
            flops=int(NL * flops_layer),
            transcendentals=int(NL * transc_layer),
            bytes_accessed=int(bytes_accessed)),
    )(x_flat, cond_flat,
      prepared["ln_w"], prepared["ln_b"],
      prepared["wq"], prepared["bq"], prepared["wkv"], prepared["bkv"],
      prepared["wo"], prepared["bo"],
      prepared["ffln_w"], prepared["ffln_b"],
      prepared["w1"], prepared["b1"], prepared["w2"], prepared["b2"])

    # swapaxes(2, 1).view(B, C, S, S)
    return jnp.transpose(out_flat.reshape(B, L, C), (0, 2, 1)).reshape(B, C, S1, S2)


def init_params(key, channels, n_layers, d_cond):
    """Deterministic synthetic parameters matching the PyTorch module shapes."""
    C = channels

    def uni(k, shape, fan_in):
        s = 1.0 / math.sqrt(fan_in)
        return jax.random.uniform(k, shape, jnp.float32, -s, s)

    keys = jax.random.split(key, n_layers + 1)
    layers = []
    for i in range(n_layers):
        ks = jax.random.split(keys[i], 8)
        layers.append({
            "ln_weight": jnp.ones((C,), jnp.float32),
            "ln_bias": jnp.zeros((C,), jnp.float32),
            "in_proj_weight": uni(ks[0], (3 * C, C), C),
            "in_proj_bias": uni(ks[1], (3 * C,), C),
            "out_proj_weight": uni(ks[2], (C, C), C),
            "out_proj_bias": uni(ks[3], (C,), C),
            "ff_ln_weight": jnp.ones((C,), jnp.float32),
            "ff_ln_bias": jnp.zeros((C,), jnp.float32),
            "ff_w1": uni(ks[4], (C, C), C),
            "ff_b1": uni(ks[5], (C,), C),
            "ff_w2": uni(ks[6], (C, C), C),
            "ff_b2": uni(ks[7], (C,), C),
        })
    kl = jax.random.split(keys[-1], 2)
    return {
        "linear_weight": uni(kl[0], (C, d_cond), d_cond),
        "linear_bias": uni(kl[1], (C,), d_cond),
        "layers": layers,
    }


if __name__ == "__main__":
    # x: [B, C, S, S]; cond: [B, Lc, d_cond]
    B, C, S = 2, 32, 8          # L = S*S = 64 tokens of C = 32 channels
    H, N_LAYERS = 4, 2
    D_COND, L_COND = 16, 8

    key = jax.random.PRNGKey(0)
    kx, kc, kp = jax.random.split(key, 3)
    x = jax.random.normal(kx, (B, C, S, S), jnp.float32)
    cond = jax.random.normal(kc, (B, L_COND, D_COND), jnp.float32)
    params = init_params(kp, C, N_LAYERS, D_COND)

    # weight folding / stacking hoisted out of the forward (done once)
    prepared = prepare_params(params, n_heads=H)

    out = cablock_forward(x, cond, prepared, n_heads=H)
    jax.block_until_ready(out)
    assert out.shape == (B, C, S, S) and out.dtype == jnp.float32
    print("KERNEL_OK")
</pallas_src>

<mosaic_0001>
module attributes {stable_mosaic.version = 11 : i64} {
  func.func @cablock_kernel(%arg0: i32, %arg1: memref<128x32xf32, #tpu.memory_space<vmem>>, %arg2: memref<16x16xf32, #tpu.memory_space<vmem>>, %arg3: memref<1x1x32xf32, #tpu.memory_space<vmem>>, %arg4: memref<1x1x32xf32, #tpu.memory_space<vmem>>, %arg5: memref<1x32x32xbf16, #tpu.memory_space<vmem>>, %arg6: memref<1x1x32xf32, #tpu.memory_space<vmem>>, %arg7: memref<1x16x64xbf16, #tpu.memory_space<vmem>>, %arg8: memref<1x1x64xf32, #tpu.memory_space<vmem>>, %arg9: memref<1x32x32xbf16, #tpu.memory_space<vmem>>, %arg10: memref<1x1x32xf32, #tpu.memory_space<vmem>>, %arg11: memref<1x1x32xf32, #tpu.memory_space<vmem>>, %arg12: memref<1x1x32xf32, #tpu.memory_space<vmem>>, %arg13: memref<1x32x32xbf16, #tpu.memory_space<vmem>>, %arg14: memref<1x1x32xf32, #tpu.memory_space<vmem>>, %arg15: memref<1x32x32xbf16, #tpu.memory_space<vmem>>, %arg16: memref<1x1x32xf32, #tpu.memory_space<vmem>>, %arg17: memref<128x32xf32, #tpu.memory_space<vmem>>, %arg18: memref<128x32xf32, #tpu.memory_space<vmem>>) attributes {dimension_semantics = [#tpu.dimension_semantics<arbitrary>], iteration_bounds = array<i64: 2>, scalar_prefetch = 0 : i64, scratch_operands = 1 : i64, tpu.core_type = #tpu.core_type<tc>, window_params = [{pipeline_mode = #tpu.pipeline_mode<synchronous>, transform_indices = @transform_0, window_bounds = array<i64: 128, 32>}, {pipeline_mode = #tpu.pipeline_mode<synchronous>, transform_indices = @transform_1, window_bounds = array<i64: 16, 16>}, {transform_indices = @transform_2, window_bounds = array<i64: 1, 1, 32>}, {transform_indices = @transform_3, window_bounds = array<i64: 1, 1, 32>}, {transform_indices = @transform_4, window_bounds = array<i64: 1, 32, 32>}, {transform_indices = @transform_5, window_bounds = array<i64: 1, 1, 32>}, {transform_indices = @transform_6, window_bounds = array<i64: 1, 16, 64>}, {transform_indices = @transform_7, window_bounds = array<i64: 1, 1, 64>}, {transform_indices = @transform_8, window_bounds = array<i64: 1, 32, 32>}, {transform_indices = @transform_9, window_bounds = array<i64: 1, 1, 32>}, {transform_indices = @transform_10, window_bounds = array<i64: 1, 1, 32>}, {transform_indices = @transform_11, window_bounds = array<i64: 1, 1, 32>}, {transform_indices = @transform_12, window_bounds = array<i64: 1, 32, 32>}, {transform_indices = @transform_13, window_bounds = array<i64: 1, 1, 32>}, {transform_indices = @transform_14, window_bounds = array<i64: 1, 32, 32>}, {transform_indices = @transform_15, window_bounds = array<i64: 1, 1, 32>}, {pipeline_mode = #tpu.pipeline_mode<synchronous>, transform_indices = @transform_16, window_bounds = array<i64: 128, 32>}]} {
    %c0_i32 = arith.constant 0 : i32
    %0 = arith.cmpi eq, %arg0, %c0_i32 : i32
    %1 = arith.extui %0 : i1 to i32
    %c0_i32_0 = arith.constant 0 : i32
    %2 = arith.cmpi ne, %1, %c0_i32_0 : i32
    scf.if %2 {
      %c0_111 = arith.constant 0 : index
      %c0_112 = arith.constant 0 : index
      %251 = vector.load %arg1[%c0_111, %c0_112] : memref<128x32xf32, #tpu.memory_space<vmem>>, vector<128x32xf32>
      %c0_113 = arith.constant 0 : index
      %c0_114 = arith.constant 0 : index
      %252 = vector.load %arg17[%c0_113, %c0_114] : memref<128x32xf32, #tpu.memory_space<vmem>>, vector<128x32xf32>
      tpu.vector_store %arg17[%c0_113, %c0_114], %251 {strides = array<i32>} : memref<128x32xf32, #tpu.memory_space<vmem>>, vector<128x32xf32>,
    } else {
    }
    %c0 = arith.constant 0 : index
    %c0_1 = arith.constant 0 : index
    %3 = vector.load %arg17[%c0, %c0_1] : memref<128x32xf32, #tpu.memory_space<vmem>>, vector<128x32xf32>
    %c0_2 = arith.constant 0 : index
    %c0_3 = arith.constant 0 : index
    %4 = vector.load %arg2[%c0_2, %c0_3] : memref<16x16xf32, #tpu.memory_space<vmem>>, vector<16x16xf32>
    %c0_4 = arith.constant 0 : index
    %c0_5 = arith.constant 0 : index
    %c0_6 = arith.constant 0 : index
    %5 = vector.load %arg3[%c0_4, %c0_5, %c0_6] : memref<1x1x32xf32, #tpu.memory_space<vmem>>, vector<1x1x32xf32>
    %6 = vector.shape_cast %5 : vector<1x1x32xf32> to vector<1x32xf32>
    %c0_7 = arith.constant 0 : index
    %c0_8 = arith.constant 0 : index
    %c0_9 = arith.constant 0 : index
    %7 = vector.load %arg4[%c0_7, %c0_8, %c0_9] : memref<1x1x32xf32, #tpu.memory_space<vmem>>, vector<1x1x32xf32>
    %8 = vector.shape_cast %7 : vector<1x1x32xf32> to vector<1x32xf32>
    %cst = arith.constant dense<0.000000e+00> : vector<128xf32>
    %9 = vector.multi_reduction <add>, %3, %cst [1] : vector<128x32xf32> to vector<128xf32>
    %10 = vector.shape_cast %9 : vector<128xf32> to vector<128x1xf32>
    %cst_10 = arith.constant 3.200000e+01 : f32
    %11 = vector.broadcast %cst_10 : f32 to vector<128x1xf32>
    %12 = arith.divf %10, %11 : vector<128x1xf32>
    %13 = vector.broadcast %12 : vector<128x1xf32> to vector<128x32xf32>
    %14 = arith.subf %3, %13 : vector<128x32xf32>
    %15 = arith.mulf %14, %14 : vector<128x32xf32>
    %cst_11 = arith.constant dense<0.000000e+00> : vector<128xf32>
    %16 = vector.multi_reduction <add>, %15, %cst_11 [1] : vector<128x32xf32> to vector<128xf32>
    %17 = vector.shape_cast %16 : vector<128xf32> to vector<128x1xf32>
    %cst_12 = arith.constant 3.200000e+01 : f32
    %18 = vector.broadcast %cst_12 : f32 to vector<128x1xf32>
    %19 = arith.divf %17, %18 : vector<128x1xf32>
    %20 = vector.broadcast %12 : vector<128x1xf32> to vector<128x32xf32>
    %21 = arith.subf %3, %20 : vector<128x32xf32>
    %cst_13 = arith.constant 9.99999974E-6 : f32
    %22 = vector.broadcast %cst_13 : f32 to vector<128x1xf32>
    %23 = arith.addf %19, %22 : vector<128x1xf32>
    %24 = math.rsqrt %23 : vector<128x1xf32>
    %25 = vector.broadcast %24 : vector<128x1xf32> to vector<128x32xf32>
    %26 = arith.mulf %21, %25 : vector<128x32xf32>
    %27 = vector.broadcast %6 : vector<1x32xf32> to vector<128x32xf32>
    %28 = arith.mulf %26, %27 : vector<128x32xf32>
    %29 = vector.broadcast %8 : vector<1x32xf32> to vector<128x32xf32>
    %30 = arith.addf %28, %29 : vector<128x32xf32>
    %31 = arith.truncf %30 : vector<128x32xf32> to vector<128x32xbf16>
    %c0_14 = arith.constant 0 : index
    %c0_15 = arith.constant 0 : index
    %c0_16 = arith.constant 0 : index
    %32 = vector.load %arg5[%c0_14, %c0_15, %c0_16] : memref<1x32x32xbf16, #tpu.memory_space<vmem>>, vector<1x32x32xbf16>
    %33 = vector.shape_cast %32 : vector<1x32x32xbf16> to vector<32x32xbf16>
    %cst_17 = arith.constant dense<0.000000e+00> : vector<128x32xf32>
    %34 = tpu.matmul %31, %33, %cst_17 {dimension_numbers = #tpu.dot_dimension_numbers<[1], [0], [0], [1], [0, 0, 1, 1], [], []>} : vector<128x32xbf16>, vector<32x32xbf16>, vector<128x32xf32> -> vector<128x32xf32>
    %c0_18 = arith.constant 0 : index
    %c0_19 = arith.constant 0 : index
    %c0_20 = arith.constant 0 : index
    %35 = vector.load %arg6[%c0_18, %c0_19, %c0_20] : memref<1x1x32xf32, #tpu.memory_space<vmem>>, vector<1x1x32xf32>
    %36 = vector.shape_cast %35 : vector<1x1x32xf32> to vector<1x32xf32>
    %37 = vector.broadcast %36 : vector<1x32xf32> to vector<128x32xf32>
    %38 = arith.addf %34, %37 : vector<128x32xf32>
    %39 = arith.truncf %4 : vector<16x16xf32> to vector<16x16xbf16>
    %c0_21 = arith.constant 0 : index
    %c0_22 = arith.constant 0 : index
    %c0_23 = arith.constant 0 : index
    %40 = vector.load %arg7[%c0_21, %c0_22, %c0_23] : memref<1x16x64xbf16, #tpu.memory_space<vmem>>, vector<1x16x64xbf16>
    %41 = vector.shape_cast %40 : vector<1x16x64xbf16> to vector<16x64xbf16>
    %cst_24 = arith.constant dense<0.000000e+00> : vector<16x64xf32>
    %42 = tpu.matmul %39, %41, %cst_24 {dimension_numbers = #tpu.dot_dimension_numbers<[1], [0], [0], [1], [0, 0, 1, 1], [], []>} : vector<16x16xbf16>, vector<16x64xbf16>, vector<16x64xf32> -> vector<16x64xf32>
    %c0_25 = arith.constant 0 : index
    %c0_26 = arith.constant 0 : index
    %c0_27 = arith.constant 0 : index
    %43 = vector.load %arg8[%c0_25, %c0_26, %c0_27] : memref<1x1x64xf32, #tpu.memory_space<vmem>>, vector<1x1x64xf32>
    %44 = vector.shape_cast %43 : vector<1x1x64xf32> to vector<1x64xf32>
    %45 = vector.broadcast %44 : vector<1x64xf32> to vector<16x64xf32>
    %46 = arith.addf %42, %45 : vector<16x64xf32>
    %47 = arith.truncf %38 : vector<128x32xf32> to vector<128x32xbf16>
    %48 = arith.truncf %46 : vector<16x64xf32> to vector<16x64xbf16>
    %49 = vector.extract_strided_slice %47 {offsets = [0, 0], sizes = [64, 32], strides = [1, 1]} : vector<128x32xbf16> to vector<64x32xbf16>
    %50 = vector.extract_strided_slice %48 {offsets = [0, 0], sizes = [8, 64], strides = [1, 1]} : vector<16x64xbf16> to vector<8x64xbf16>
    %51 = vector.extract_strided_slice %49 {offsets = [0, 0], sizes = [64, 8], strides = [1, 1]} : vector<64x32xbf16> to vector<64x8xbf16>
    %52 = vector.extract_strided_slice %50 {offsets = [0, 0], sizes = [8, 8], strides = [1, 1]} : vector<8x64xbf16> to vector<8x8xbf16>
    %53 = vector.extract_strided_slice %50 {offsets = [0, 32], sizes = [8, 8], strides = [1, 1]} : vector<8x64xbf16> to vector<8x8xbf16>
    "tpu.trace_start"() <{level = 10 : i32, message = "ld,md->lm"}> : () -> ()
    %cst_28 = arith.constant dense<0.000000e+00> : vector<64x8xf32>
    %54 = tpu.matmul %51, %52, %cst_28 {dimension_numbers = #tpu.dot_dimension_numbers<[1], [1], [0], [0], [0, 0, 1, 0], [], []>} : vector<64x8xbf16>, vector<8x8xbf16>, vector<64x8xf32> -> vector<64x8xf32>
    "tpu.trace_stop"() : () -> ()
    %cst_29 = arith.constant dense<0xFF800000> : vector<64xf32>
    %55 = vector.multi_reduction <maximumf>, %54, %cst_29 [1] : vector<64x8xf32> to vector<64xf32>
    %56 = vector.shape_cast %55 : vector<64xf32> to vector<64x1xf32>
    %57 = vector.broadcast %56 : vector<64x1xf32> to vector<64x8xf32>
    %58 = arith.subf %54, %57 : vector<64x8xf32>
    %59 = math.exp %58 : vector<64x8xf32>
    %cst_30 = arith.constant dense<0.000000e+00> : vector<64xf32>
    %60 = vector.multi_reduction <add>, %59, %cst_30 [1] : vector<64x8xf32> to vector<64xf32>
    %61 = vector.shape_cast %60 : vector<64xf32> to vector<64x1xf32>
    %62 = tpu.reciprocal %61 {approx = true} : vector<64x1xf32> -> vector<64x1xf32>
    %63 = vector.broadcast %62 : vector<64x1xf32> to vector<64x8xf32>
    %64 = arith.mulf %59, %63 : vector<64x8xf32>
    %65 = arith.truncf %64 : vector<64x8xf32> to vector<64x8xbf16>
    %cst_31 = arith.constant dense<0.000000e+00> : vector<64x8xf32>
    %66 = tpu.matmul %65, %53, %cst_31 {dimension_numbers = #tpu.dot_dimension_numbers<[1], [0], [0], [1], [0, 0, 1, 1], [], []>} : vector<64x8xbf16>, vector<8x8xbf16>, vector<64x8xf32> -> vector<64x8xf32>
    %c0_32 = arith.constant 0 : index
    %c0_33 = arith.constant 0 : index
    %67 = vector.load %arg18[%c0_32, %c0_33] : memref<128x32xf32, #tpu.memory_space<vmem>>, vector<64x8xf32>
    tpu.vector_store %arg18[%c0_32, %c0_33], %66 {strides = array<i32>} : memref<128x32xf32, #tpu.memory_space<vmem>>, vector<64x8xf32>,
    %68 = vector.extract_strided_slice %49 {offsets = [0, 8], sizes = [64, 8], strides = [1, 1]} : vector<64x32xbf16> to vector<64x8xbf16>
    %69 = vector.extract_strided_slice %50 {offsets = [0, 8], sizes = [8, 8], strides = [1, 1]} : vector<8x64xbf16> to vector<8x8xbf16>
    %70 = vector.extract_strided_slice %50 {offsets = [0, 40], sizes = [8, 8], strides = [1, 1]} : vector<8x64xbf16> to vector<8x8xbf16>
    "tpu.trace_start"() <{level = 10 : i32, message = "ld,md->lm"}> : () -> ()
    %cst_34 = arith.constant dense<0.000000e+00> : vector<64x8xf32>
    %71 = tpu.matmul %68, %69, %cst_34 {dimension_numbers = #tpu.dot_dimension_numbers<[1], [1], [0], [0], [0, 0, 1, 0], [], []>} : vector<64x8xbf16>, vector<8x8xbf16>, vector<64x8xf32> -> vector<64x8xf32>
    "tpu.trace_stop"() : () -> ()
    %cst_35 = arith.constant dense<0xFF800000> : vector<64xf32>
    %72 = vector.multi_reduction <maximumf>, %71, %cst_35 [1] : vector<64x8xf32> to vector<64xf32>
    %73 = vector.shape_cast %72 : vector<64xf32> to vector<64x1xf32>
    %74 = vector.broadcast %73 : vector<64x1xf32> to vector<64x8xf32>
    %75 = arith.subf %71, %74 : vector<64x8xf32>
    %76 = math.exp %75 : vector<64x8xf32>
    %cst_36 = arith.constant dense<0.000000e+00> : vector<64xf32>
    %77 = vector.multi_reduction <add>, %76, %cst_36 [1] : vector<64x8xf32> to vector<64xf32>
    %78 = vector.shape_cast %77 : vector<64xf32> to vector<64x1xf32>
    %79 = tpu.reciprocal %78 {approx = true} : vector<64x1xf32> -> vector<64x1xf32>
    %80 = vector.broadcast %79 : vector<64x1xf32> to vector<64x8xf32>
    %81 = arith.mulf %76, %80 : vector<64x8xf32>
    %82 = arith.truncf %81 : vector<64x8xf32> to vector<64x8xbf16>
    %cst_37 = arith.constant dense<0.000000e+00> : vector<64x8xf32>
    %83 = tpu.matmul %82, %70, %cst_37 {dimension_numbers = #tpu.dot_dimension_numbers<[1], [0], [0], [1], [0, 0, 1, 1], [], []>} : vector<64x8xbf16>, vector<8x8xbf16>, vector<64x8xf32> -> vector<64x8xf32>
    %c0_38 = arith.constant 0 : index
    %c8 = arith.constant 8 : index
    %84 = vector.load %arg18[%c0_38, %c8] : memref<128x32xf32, #tpu.memory_space<vmem>>, vector<64x8xf32>
    tpu.vector_store %arg18[%c0_38, %c8], %83 {strides = array<i32>} : memref<128x32xf32, #tpu.memory_space<vmem>>, vector<64x8xf32>,
    %85 = vector.extract_strided_slice %49 {offsets = [0, 16], sizes = [64, 8], strides = [1, 1]} : vector<64x32xbf16> to vector<64x8xbf16>
    %86 = vector.extract_strided_slice %50 {offsets = [0, 16], sizes = [8, 8], strides = [1, 1]} : vector<8x64xbf16> to vector<8x8xbf16>
    %87 = vector.extract_strided_slice %50 {offsets = [0, 48], sizes = [8, 8], strides = [1, 1]} : vector<8x64xbf16> to vector<8x8xbf16>
    "tpu.trace_start"() <{level = 10 : i32, message = "ld,md->lm"}> : () -> ()
    %cst_39 = arith.constant dense<0.000000e+00> : vector<64x8xf32>
    %88 = tpu.matmul %85, %86, %cst_39 {dimension_numbers = #tpu.dot_dimension_numbers<[1], [1], [0], [0], [0, 0, 1, 0], [], []>} : vector<64x8xbf16>, vector<8x8xbf16>, vector<64x8xf32> -> vector<64x8xf32>
    "tpu.trace_stop"() : () -> ()
    %cst_40 = arith.constant dense<0xFF800000> : vector<64xf32>
    %89 = vector.multi_reduction <maximumf>, %88, %cst_40 [1] : vector<64x8xf32> to vector<64xf32>
    %90 = vector.shape_cast %89 : vector<64xf32> to vector<64x1xf32>
    %91 = vector.broadcast %90 : vector<64x1xf32> to vector<64x8xf32>
    %92 = arith.subf %88, %91 : vector<64x8xf32>
    %93 = math.exp %92 : vector<64x8xf32>
    %cst_41 = arith.constant dense<0.000000e+00> : vector<64xf32>
    %94 = vector.multi_reduction <add>, %93, %cst_41 [1] : vector<64x8xf32> to vector<64xf32>
    %95 = vector.shape_cast %94 : vector<64xf32> to vector<64x1xf32>
    %96 = tpu.reciprocal %95 {approx = true} : vector<64x1xf32> -> vector<64x1xf32>
    %97 = vector.broadcast %96 : vector<64x1xf32> to vector<64x8xf32>
    %98 = arith.mulf %93, %97 : vector<64x8xf32>
    %99 = arith.truncf %98 : vector<64x8xf32> to vector<64x8xbf16>
    %cst_42 = arith.constant dense<0.000000e+00> : vector<64x8xf32>
    %100 = tpu.matmul %99, %87, %cst_42 {dimension_numbers = #tpu.dot_dimension_numbers<[1], [0], [0], [1], [0, 0, 1, 1], [], []>} : vector<64x8xbf16>, vector<8x8xbf16>, vector<64x8xf32> -> vector<64x8xf32>
    %c0_43 = arith.constant 0 : index
    %c16 = arith.constant 16 : index
    %101 = vector.load %arg18[%c0_43, %c16] : memref<128x32xf32, #tpu.memory_space<vmem>>, vector<64x8xf32>
    tpu.vector_store %arg18[%c0_43, %c16], %100 {strides = array<i32>} : memref<128x32xf32, #tpu.memory_space<vmem>>, vector<64x8xf32>,
    %102 = vector.extract_strided_slice %49 {offsets = [0, 24], sizes = [64, 8], strides = [1, 1]} : vector<64x32xbf16> to vector<64x8xbf16>
    %103 = vector.extract_strided_slice %50 {offsets = [0, 24], sizes = [8, 8], strides = [1, 1]} : vector<8x64xbf16> to vector<8x8xbf16>
    %104 = vector.extract_strided_slice %50 {offsets = [0, 56], sizes = [8, 8], strides = [1, 1]} : vector<8x64xbf16> to vector<8x8xbf16>
    "tpu.trace_start"() <{level = 10 : i32, message = "ld,md->lm"}> : () -> ()
    %cst_44 = arith.constant dense<0.000000e+00> : vector<64x8xf32>
    %105 = tpu.matmul %102, %103, %cst_44 {dimension_numbers = #tpu.dot_dimension_numbers<[1], [1], [0], [0], [0, 0, 1, 0], [], []>} : vector<64x8xbf16>, vector<8x8xbf16>, vector<64x8xf32> -> vector<64x8xf32>
    "tpu.trace_stop"() : () -> ()
    %cst_45 = arith.constant dense<0xFF800000> : vector<64xf32>
    %106 = vector.multi_reduction <maximumf>, %105, %cst_45 [1] : vector<64x8xf32> to vector<64xf32>
    %107 = vector.shape_cast %106 : vector<64xf32> to vector<64x1xf32>
    %108 = vector.broadcast %107 : vector<64x1xf32> to vector<64x8xf32>
    %109 = arith.subf %105, %108 : vector<64x8xf32>
    %110 = math.exp %109 : vector<64x8xf32>
    %cst_46 = arith.constant dense<0.000000e+00> : vector<64xf32>
    %111 = vector.multi_reduction <add>, %110, %cst_46 [1] : vector<64x8xf32> to vector<64xf32>
    %112 = vector.shape_cast %111 : vector<64xf32> to vector<64x1xf32>
    %113 = tpu.reciprocal %112 {approx = true} : vector<64x1xf32> -> vector<64x1xf32>
    %114 = vector.broadcast %113 : vector<64x1xf32> to vector<64x8xf32>
    %115 = arith.mulf %110, %114 : vector<64x8xf32>
    %116 = arith.truncf %115 : vector<64x8xf32> to vector<64x8xbf16>
    %cst_47 = arith.constant dense<0.000000e+00> : vector<64x8xf32>
    %117 = tpu.matmul %116, %104, %cst_47 {dimension_numbers = #tpu.dot_dimension_numbers<[1], [0], [0], [1], [0, 0, 1, 1], [], []>} : vector<64x8xbf16>, vector<8x8xbf16>, vector<64x8xf32> -> vector<64x8xf32>
    %c0_48 = arith.constant 0 : index
    %c24 = arith.constant 24 : index
    %118 = vector.load %arg18[%c0_48, %c24] : memref<128x32xf32, #tpu.memory_space<vmem>>, vector<64x8xf32>
    tpu.vector_store %arg18[%c0_48, %c24], %117 {strides = array<i32>} : memref<128x32xf32, #tpu.memory_space<vmem>>, vector<64x8xf32>,
    %119 = vector.extract_strided_slice %47 {offsets = [64, 0], sizes = [64, 32], strides = [1, 1]} : vector<128x32xbf16> to vector<64x32xbf16>
    %120 = vector.extract_strided_slice %48 {offsets = [8, 0], sizes = [8, 64], strides = [1, 1]} : vector<16x64xbf16> to vector<8x64xbf16>
    %121 = vector.extract_strided_slice %119 {offsets = [0, 0], sizes = [64, 8], strides = [1, 1]} : vector<64x32xbf16> to vector<64x8xbf16>
    %122 = vector.extract_strided_slice %120 {offsets = [0, 0], sizes = [8, 8], strides = [1, 1]} : vector<8x64xbf16> to vector<8x8xbf16>
    %123 = vector.extract_strided_slice %120 {offsets = [0, 32], sizes = [8, 8], strides = [1, 1]} : vector<8x64xbf16> to vector<8x8xbf16>
    "tpu.trace_start"() <{level = 10 : i32, message = "ld,md->lm"}> : () -> ()
    %cst_49 = arith.constant dense<0.000000e+00> : vector<64x8xf32>
    %124 = tpu.matmul %121, %122, %cst_49 {dimension_numbers = #tpu.dot_dimension_numbers<[1], [1], [0], [0], [0, 0, 1, 0], [], []>} : vector<64x8xbf16>, vector<8x8xbf16>, vector<64x8xf32> -> vector<64x8xf32>
    "tpu.trace_stop"() : () -> ()
    %cst_50 = arith.constant dense<0xFF800000> : vector<64xf32>
    %125 = vector.multi_reduction <maximumf>, %124, %cst_50 [1] : vector<64x8xf32> to vector<64xf32>
    %126 = vector.shape_cast %125 : vector<64xf32> to vector<64x1xf32>
    %127 = vector.broadcast %126 : vector<64x1xf32> to vector<64x8xf32>
    %128 = arith.subf %124, %127 : vector<64x8xf32>
    %129 = math.exp %128 : vector<64x8xf32>
    %cst_51 = arith.constant dense<0.000000e+00> : vector<64xf32>
    %130 = vector.multi_reduction <add>, %129, %cst_51 [1] : vector<64x8xf32> to vector<64xf32>
    %131 = vector.shape_cast %130 : vector<64xf32> to vector<64x1xf32>
    %132 = tpu.reciprocal %131 {approx = true} : vector<64x1xf32> -> vector<64x1xf32>
    %133 = vector.broadcast %132 : vector<64x1xf32> to vector<64x8xf32>
    %134 = arith.mulf %129, %133 : vector<64x8xf32>
    %135 = arith.truncf %134 : vector<64x8xf32> to vector<64x8xbf16>
    %cst_52 = arith.constant dense<0.000000e+00> : vector<64x8xf32>
    %136 = tpu.matmul %135, %123, %cst_52 {dimension_numbers = #tpu.dot_dimension_numbers<[1], [0], [0], [1], [0, 0, 1, 1], [], []>} : vector<64x8xbf16>, vector<8x8xbf16>, vector<64x8xf32> -> vector<64x8xf32>
    %c64 = arith.constant 64 : index
    %c0_53 = arith.constant 0 : index
    %137 = vector.load %arg18[%c64, %c0_53] : memref<128x32xf32, #tpu.memory_space<vmem>>, vector<64x8xf32>
    tpu.vector_store %arg18[%c64, %c0_53], %136 {strides = array<i32>} : memref<128x32xf32, #tpu.memory_space<vmem>>, vector<64x8xf32>,
    %138 = vector.extract_strided_slice %119 {offsets = [0, 8], sizes = [64, 8], strides = [1, 1]} : vector<64x32xbf16> to vector<64x8xbf16>
    %139 = vector.extract_strided_slice %120 {offsets = [0, 8], sizes = [8, 8], strides = [1, 1]} : vector<8x64xbf16> to vector<8x8xbf16>
    %140 = vector.extract_strided_slice %120 {offsets = [0, 40], sizes = [8, 8], strides = [1, 1]} : vector<8x64xbf16> to vector<8x8xbf16>
    "tpu.trace_start"() <{level = 10 : i32, message = "ld,md->lm"}> : () -> ()
    %cst_54 = arith.constant dense<0.000000e+00> : vector<64x8xf32>
    %141 = tpu.matmul %138, %139, %cst_54 {dimension_numbers = #tpu.dot_dimension_numbers<[1], [1], [0], [0], [0, 0, 1, 0], [], []>} : vector<64x8xbf16>, vector<8x8xbf16>, vector<64x8xf32> -> vector<64x8xf32>
    "tpu.trace_stop"() : () -> ()
    %cst_55 = arith.constant dense<0xFF800000> : vector<64xf32>
    %142 = vector.multi_reduction <maximumf>, %141, %cst_55 [1] : vector<64x8xf32> to vector<64xf32>
    %143 = vector.shape_cast %142 : vector<64xf32> to vector<64x1xf32>
    %144 = vector.broadcast %143 : vector<64x1xf32> to vector<64x8xf32>
    %145 = arith.subf %141, %144 : vector<64x8xf32>
    %146 = math.exp %145 : vector<64x8xf32>
    %cst_56 = arith.constant dense<0.000000e+00> : vector<64xf32>
    %147 = vector.multi_reduction <add>, %146, %cst_56 [1] : vector<64x8xf32> to vector<64xf32>
    %148 = vector.shape_cast %147 : vector<64xf32> to vector<64x1xf32>
    %149 = tpu.reciprocal %148 {approx = true} : vector<64x1xf32> -> vector<64x1xf32>
    %150 = vector.broadcast %149 : vector<64x1xf32> to vector<64x8xf32>
    %151 = arith.mulf %146, %150 : vector<64x8xf32>
    %152 = arith.truncf %151 : vector<64x8xf32> to vector<64x8xbf16>
    %cst_57 = arith.constant dense<0.000000e+00> : vector<64x8xf32>
    %153 = tpu.matmul %152, %140, %cst_57 {dimension_numbers = #tpu.dot_dimension_numbers<[1], [0], [0], [1], [0, 0, 1, 1], [], []>} : vector<64x8xbf16>, vector<8x8xbf16>, vector<64x8xf32> -> vector<64x8xf32>
    %c64_58 = arith.constant 64 : index
    %c8_59 = arith.constant 8 : index
    %154 = vector.load %arg18[%c64_58, %c8_59] : memref<128x32xf32, #tpu.memory_space<vmem>>, vector<64x8xf32>
    tpu.vector_store %arg18[%c64_58, %c8_59], %153 {strides = array<i32>} : memref<128x32xf32, #tpu.memory_space<vmem>>, vector<64x8xf32>,
    %155 = vector.extract_strided_slice %119 {offsets = [0, 16], sizes = [64, 8], strides = [1, 1]} : vector<64x32xbf16> to vector<64x8xbf16>
    %156 = vector.extract_strided_slice %120 {offsets = [0, 16], sizes = [8, 8], strides = [1, 1]} : vector<8x64xbf16> to vector<8x8xbf16>
    %157 = vector.extract_strided_slice %120 {offsets = [0, 48], sizes = [8, 8], strides = [1, 1]} : vector<8x64xbf16> to vector<8x8xbf16>
    "tpu.trace_start"() <{level = 10 : i32, message = "ld,md->lm"}> : () -> ()
    %cst_60 = arith.constant dense<0.000000e+00> : vector<64x8xf32>
    %158 = tpu.matmul %155, %156, %cst_60 {dimension_numbers = #tpu.dot_dimension_numbers<[1], [1], [0], [0], [0, 0, 1, 0], [], []>} : vector<64x8xbf16>, vector<8x8xbf16>, vector<64x8xf32> -> vector<64x8xf32>
    "tpu.trace_stop"() : () -> ()
    %cst_61 = arith.constant dense<0xFF800000> : vector<64xf32>
    %159 = vector.multi_reduction <maximumf>, %158, %cst_61 [1] : vector<64x8xf32> to vector<64xf32>
    %160 = vector.shape_cast %159 : vector<64xf32> to vector<64x1xf32>
    %161 = vector.broadcast %160 : vector<64x1xf32> to vector<64x8xf32>
    %162 = arith.subf %158, %161 : vector<64x8xf32>
    %163 = math.exp %162 : vector<64x8xf32>
    %cst_62 = arith.constant dense<0.000000e+00> : vector<64xf32>
    %164 = vector.multi_reduction <add>, %163, %cst_62 [1] : vector<64x8xf32> to vector<64xf32>
    %165 = vector.shape_cast %164 : vector<64xf32> to vector<64x1xf32>
    %166 = tpu.reciprocal %165 {approx = true} : vector<64x1xf32> -> vector<64x1xf32>
    %167 = vector.broadcast %166 : vector<64x1xf32> to vector<64x8xf32>
    %168 = arith.mulf %163, %167 : vector<64x8xf32>
    %169 = arith.truncf %168 : vector<64x8xf32> to vector<64x8xbf16>
    %cst_63 = arith.constant dense<0.000000e+00> : vector<64x8xf32>
    %170 = tpu.matmul %169, %157, %cst_63 {dimension_numbers = #tpu.dot_dimension_numbers<[1], [0], [0], [1], [0, 0, 1, 1], [], []>} : vector<64x8xbf16>, vector<8x8xbf16>, vector<64x8xf32> -> vector<64x8xf32>
    %c64_64 = arith.constant 64 : index
    %c16_65 = arith.constant 16 : index
    %171 = vector.load %arg18[%c64_64, %c16_65] : memref<128x32xf32, #tpu.memory_space<vmem>>, vector<64x8xf32>
    tpu.vector_store %arg18[%c64_64, %c16_65], %170 {strides = array<i32>} : memref<128x32xf32, #tpu.memory_space<vmem>>, vector<64x8xf32>,
    %172 = vector.extract_strided_slice %119 {offsets = [0, 24], sizes = [64, 8], strides = [1, 1]} : vector<64x32xbf16> to vector<64x8xbf16>
    %173 = vector.extract_strided_slice %120 {offsets = [0, 24], sizes = [8, 8], strides = [1, 1]} : vector<8x64xbf16> to vector<8x8xbf16>
    %174 = vector.extract_strided_slice %120 {offsets = [0, 56], sizes = [8, 8], strides = [1, 1]} : vector<8x64xbf16> to vector<8x8xbf16>
    "tpu.trace_start"() <{level = 10 : i32, message = "ld,md->lm"}> : () -> ()
    %cst_66 = arith.constant dense<0.000000e+00> : vector<64x8xf32>
    %175 = tpu.matmul %172, %173, %cst_66 {dimension_numbers = #tpu.dot_dimension_numbers<[1], [1], [0], [0], [0, 0, 1, 0], [], []>} : vector<64x8xbf16>, vector<8x8xbf16>, vector<64x8xf32> -> vector<64x8xf32>
    "tpu.trace_stop"() : () -> ()
    %cst_67 = arith.constant dense<0xFF800000> : vector<64xf32>
    %176 = vector.multi_reduction <maximumf>, %175, %cst_67 [1] : vector<64x8xf32> to vector<64xf32>
    %177 = vector.shape_cast %176 : vector<64xf32> to vector<64x1xf32>
    %178 = vector.broadcast %177 : vector<64x1xf32> to vector<64x8xf32>
    %179 = arith.subf %175, %178 : vector<64x8xf32>
    %180 = math.exp %179 : vector<64x8xf32>
    %cst_68 = arith.constant dense<0.000000e+00> : vector<64xf32>
    %181 = vector.multi_reduction <add>, %180, %cst_68 [1] : vector<64x8xf32> to vector<64xf32>
    %182 = vector.shape_cast %181 : vector<64xf32> to vector<64x1xf32>
    %183 = tpu.reciprocal %182 {approx = true} : vector<64x1xf32> -> vector<64x1xf32>
    %184 = vector.broadcast %183 : vector<64x1xf32> to vector<64x8xf32>
    %185 = arith.mulf %180, %184 : vector<64x8xf32>
    %186 = arith.truncf %185 : vector<64x8xf32> to vector<64x8xbf16>
    %cst_69 = arith.constant dense<0.000000e+00> : vector<64x8xf32>
    %187 = tpu.matmul %186, %174, %cst_69 {dimension_numbers = #tpu.dot_dimension_numbers<[1], [0], [0], [1], [0, 0, 1, 1], [], []>} : vector<64x8xbf16>, vector<8x8xbf16>, vector<64x8xf32> -> vector<64x8xf32>
    %c64_70 = arith.constant 64 : index
    %c24_71 = arith.constant 24 : index
    %188 = vector.load %arg18[%c64_70, %c24_71] : memref<128x32xf32, #tpu.memory_space<vmem>>, vector<64x8xf32>
    tpu.vector_store %arg18[%c64_70, %c24_71], %187 {strides = array<i32>} : memref<128x32xf32, #tpu.memory_space<vmem>>, vector<64x8xf32>,
    %c0_72 = arith.constant 0 : index
    %c0_73 = arith.constant 0 : index
    %189 = vector.load %arg18[%c0_72, %c0_73] : memref<128x32xf32, #tpu.memory_space<vmem>>, vector<128x32xf32>
    %190 = arith.truncf %189 : vector<128x32xf32> to vector<128x32xbf16>
    %c0_74 = arith.constant 0 : index
    %c0_75 = arith.constant 0 : index
    %c0_76 = arith.constant 0 : index
    %191 = vector.load %arg9[%c0_74, %c0_75, %c0_76] : memref<1x32x32xbf16, #tpu.memory_space<vmem>>, vector<1x32x32xbf16>
    %192 = vector.shape_cast %191 : vector<1x32x32xbf16> to vector<32x32xbf16>
    %cst_77 = arith.constant dense<0.000000e+00> : vector<128x32xf32>
    %193 = tpu.matmul %190, %192, %cst_77 {dimension_numbers = #tpu.dot_dimension_numbers<[1], [0], [0], [1], [0, 0, 1, 1], [], []>} : vector<128x32xbf16>, vector<32x32xbf16>, vector<128x32xf32> -> vector<128x32xf32>
    %c0_78 = arith.constant 0 : index
    %c0_79 = arith.constant 0 : index
    %c0_80 = arith.constant 0 : index
    %194 = vector.load %arg10[%c0_78, %c0_79, %c0_80] : memref<1x1x32xf32, #tpu.memory_space<vmem>>, vector<1x1x32xf32>
    %195 = vector.shape_cast %194 : vector<1x1x32xf32> to vector<1x32xf32>
    %196 = vector.broadcast %195 : vector<1x32xf32> to vector<128x32xf32>
    %197 = arith.addf %193, %196 : vector<128x32xf32>
    %198 = arith.addf %197, %3 : vector<128x32xf32>
    %c0_81 = arith.constant 0 : index
    %c0_82 = arith.constant 0 : index
    %c0_83 = arith.constant 0 : index
    %199 = vector.load %arg11[%c0_81, %c0_82, %c0_83] : memref<1x1x32xf32, #tpu.memory_space<vmem>>, vector<1x1x32xf32>
    %200 = vector.shape_cast %199 : vector<1x1x32xf32> to vector<1x32xf32>
    %c0_84 = arith.constant 0 : index
    %c0_85 = arith.constant 0 : index
    %c0_86 = arith.constant 0 : index
    %201 = vector.load %arg12[%c0_84, %c0_85, %c0_86] : memref<1x1x32xf32, #tpu.memory_space<vmem>>, vector<1x1x32xf32>
    %202 = vector.shape_cast %201 : vector<1x1x32xf32> to vector<1x32xf32>
    %cst_87 = arith.constant dense<0.000000e+00> : vector<128xf32>
    %203 = vector.multi_reduction <add>, %198, %cst_87 [1] : vector<128x32xf32> to vector<128xf32>
    %204 = vector.shape_cast %203 : vector<128xf32> to vector<128x1xf32>
    %cst_88 = arith.constant 3.200000e+01 : f32
    %205 = vector.broadcast %cst_88 : f32 to vector<128x1xf32>
    %206 = arith.divf %204, %205 : vector<128x1xf32>
    %207 = vector.broadcast %206 : vector<128x1xf32> to vector<128x32xf32>
    %208 = arith.subf %198, %207 : vector<128x32xf32>
    %209 = arith.mulf %208, %208 : vector<128x32xf32>
    %cst_89 = arith.constant dense<0.000000e+00> : vector<128xf32>
    %210 = vector.multi_reduction <add>, %209, %cst_89 [1] : vector<128x32xf32> to vector<128xf32>
    %211 = vector.shape_cast %210 : vector<128xf32> to vector<128x1xf32>
    %cst_90 = arith.constant 3.200000e+01 : f32
    %212 = vector.broadcast %cst_90 : f32 to vector<128x1xf32>
    %213 = arith.divf %211, %212 : vector<128x1xf32>
    %214 = vector.broadcast %206 : vector<128x1xf32> to vector<128x32xf32>
    %215 = arith.subf %198, %214 : vector<128x32xf32>
    %cst_91 = arith.constant 9.99999974E-6 : f32
    %216 = vector.broadcast %cst_91 : f32 to vector<128x1xf32>
    %217 = arith.addf %213, %216 : vector<128x1xf32>
    %218 = math.rsqrt %217 : vector<128x1xf32>
    %219 = vector.broadcast %218 : vector<128x1xf32> to vector<128x32xf32>
    %220 = arith.mulf %215, %219 : vector<128x32xf32>
    %221 = vector.broadcast %200 : vector<1x32xf32> to vector<128x32xf32>
    %222 = arith.mulf %220, %221 : vector<128x32xf32>
    %223 = vector.broadcast %202 : vector<1x32xf32> to vector<128x32xf32>
    %224 = arith.addf %222, %223 : vector<128x32xf32>
    %225 = arith.truncf %224 : vector<128x32xf32> to vector<128x32xbf16>
    %c0_92 = arith.constant 0 : index
    %c0_93 = arith.constant 0 : index
    %c0_94 = arith.constant 0 : index
    %226 = vector.load %arg13[%c0_92, %c0_93, %c0_94] : memref<1x32x32xbf16, #tpu.memory_space<vmem>>, vector<1x32x32xbf16>
    %227 = vector.shape_cast %226 : vector<1x32x32xbf16> to vector<32x32xbf16>
    %cst_95 = arith.constant dense<0.000000e+00> : vector<128x32xf32>
    %228 = tpu.matmul %225, %227, %cst_95 {dimension_numbers = #tpu.dot_dimension_numbers<[1], [0], [0], [1], [0, 0, 1, 1], [], []>} : vector<128x32xbf16>, vector<32x32xbf16>, vector<128x32xf32> -> vector<128x32xf32>
    %c0_96 = arith.constant 0 : index
    %c0_97 = arith.constant 0 : index
    %c0_98 = arith.constant 0 : index
    %229 = vector.load %arg14[%c0_96, %c0_97, %c0_98] : memref<1x1x32xf32, #tpu.memory_space<vmem>>, vector<1x1x32xf32>
    %230 = vector.shape_cast %229 : vector<1x1x32xf32> to vector<1x32xf32>
    %231 = vector.broadcast %230 : vector<1x32xf32> to vector<128x32xf32>
    %232 = arith.addf %228, %231 : vector<128x32xf32>
    %cst_99 = arith.constant 5.000000e-01 : f32
    %233 = vector.broadcast %cst_99 : f32 to vector<128x32xf32>
    %234 = arith.mulf %233, %232 : vector<128x32xf32>
    %cst_100 = arith.constant 0.707106769 : f32
    %235 = vector.broadcast %cst_100 : f32 to vector<128x32xf32>
    %236 = arith.mulf %232, %235 : vector<128x32xf32>
    %237 = math.erf %236 : vector<128x32xf32>
    %cst_101 = arith.constant 1.000000e+00 : f32
    %238 = vector.broadcast %cst_101 : f32 to vector<128x32xf32>
    %239 = arith.addf %238, %237 : vector<128x32xf32>
    %240 = arith.mulf %234, %239 : vector<128x32xf32>
    %241 = arith.truncf %240 : vector<128x32xf32> to vector<128x32xbf16>
    %c0_102 = arith.constant 0 : index
    %c0_103 = arith.constant 0 : index
    %c0_104 = arith.constant 0 : index
    %242 = vector.load %arg15[%c0_102, %c0_103, %c0_104] : memref<1x32x32xbf16, #tpu.memory_space<vmem>>, vector<1x32x32xbf16>
    %243 = vector.shape_cast %242 : vector<1x32x32xbf16> to vector<32x32xbf16>
    %cst_105 = arith.constant dense<0.000000e+00> : vector<128x32xf32>
    %244 = tpu.matmul %241, %243, %cst_105 {dimension_numbers = #tpu.dot_dimension_numbers<[1], [0], [0], [1], [0, 0, 1, 1], [], []>} : vector<128x32xbf16>, vector<32x32xbf16>, vector<128x32xf32> -> vector<128x32xf32>
    %c0_106 = arith.constant 0 : index
    %c0_107 = arith.constant 0 : index
    %c0_108 = arith.constant 0 : index
    %245 = vector.load %arg16[%c0_106, %c0_107, %c0_108] : memref<1x1x32xf32, #tpu.memory_space<vmem>>, vector<1x1x32xf32>
    %246 = vector.shape_cast %245 : vector<1x1x32xf32> to vector<1x32xf32>
    %247 = vector.broadcast %246 : vector<1x32xf32> to vector<128x32xf32>
    %248 = arith.addf %244, %247 : vector<128x32xf32>
    %249 = arith.addf %248, %198 : vector<128x32xf32>
    %c0_109 = arith.constant 0 : index
    %c0_110 = arith.constant 0 : index
    %250 = vector.load %arg17[%c0_109, %c0_110] : memref<128x32xf32, #tpu.memory_space<vmem>>, vector<128x32xf32>
    tpu.vector_store %arg17[%c0_109, %c0_110], %249 {strides = array<i32>} : memref<128x32xf32, #tpu.memory_space<vmem>>, vector<128x32xf32>,
    return
  }
  func.func @transform_0(%arg0: i32) -> (i32, i32) {
    %c0_i32 = arith.constant 0 : i32
    %c0_i32_0 = arith.constant 0 : i32
    %c0_i32_1 = arith.constant 0 : i32
    return %c0_i32, %c0_i32_0 : i32, i32
  }
  func.func @transform_1(%arg0: i32) -> (i32, i32) {
    %c0_i32 = arith.constant 0 : i32
    %c0_i32_0 = arith.constant 0 : i32
    %c0_i32_1 = arith.constant 0 : i32
    return %c0_i32, %c0_i32_0 : i32, i32
  }
  func.func @transform_2(%arg0: i32) -> (i32, i32, i32) {
    %c0_i32 = arith.constant 0 : i32
    %c0_i32_0 = arith.constant 0 : i32
    %c0_i32_1 = arith.constant 0 : i32
    return %arg0, %c0_i32, %c0_i32_0 : i32, i32, i32
  }
  func.func @transform_3(%arg0: i32) -> (i32, i32, i32) {
    %c0_i32 = arith.constant 0 : i32
    %c0_i32_0 = arith.constant 0 : i32
    %c0_i32_1 = arith.constant 0 : i32
    return %arg0, %c0_i32, %c0_i32_0 : i32, i32, i32
  }
  func.func @transform_4(%arg0: i32) -> (i32, i32, i32) {
    %c0_i32 = arith.constant 0 : i32
    %c0_i32_0 = arith.constant 0 : i32
    %c0_i32_1 = arith.constant 0 : i32
    return %arg0, %c0_i32, %c0_i32_0 : i32, i32, i32
  }
  func.func @transform_5(%arg0: i32) -> (i32, i32, i32) {
    %c0_i32 = arith.constant 0 : i32
    %c0_i32_0 = arith.constant 0 : i32
    %c0_i32_1 = arith.constant 0 : i32
    return %arg0, %c0_i32, %c0_i32_0 : i32, i32, i32
  }
  func.func @transform_6(%arg0: i32) -> (i32, i32, i32) {
    %c0_i32 = arith.constant 0 : i32
    %c0_i32_0 = arith.constant 0 : i32
    %c0_i32_1 = arith.constant 0 : i32
    return %arg0, %c0_i32, %c0_i32_0 : i32, i32, i32
  }
  func.func @transform_7(%arg0: i32) -> (i32, i32, i32) {
    %c0_i32 = arith.constant 0 : i32
    %c0_i32_0 = arith.constant 0 : i32
    %c0_i32_1 = arith.constant 0 : i32
    return %arg0, %c0_i32, %c0_i32_0 : i32, i32, i32
  }
  func.func @transform_8(%arg0: i32) -> (i32, i32, i32) {
    %c0_i32 = arith.constant 0 : i32
    %c0_i32_0 = arith.constant 0 : i32
    %c0_i32_1 = arith.constant 0 : i32
    return %arg0, %c0_i32, %c0_i32_0 : i32, i32, i32
  }
  func.func @transform_9(%arg0: i32) -> (i32, i32, i32) {
    %c0_i32 = arith.constant 0 : i32
    %c0_i32_0 = arith.constant 0 : i32
    %c0_i32_1 = arith.constant 0 : i32
    return %arg0, %c0_i32, %c0_i32_0 : i32, i32, i32
  }
  func.func @transform_10(%arg0: i32) -> (i32, i32, i32) {
    %c0_i32 = arith.constant 0 : i32
    %c0_i32_0 = arith.constant 0 : i32
    %c0_i32_1 = arith.constant 0 : i32
    return %arg0, %c0_i32, %c0_i32_0 : i32, i32, i32
  }
  func.func @transform_11(%arg0: i32) -> (i32, i32, i32) {
    %c0_i32 = arith.constant 0 : i32
    %c0_i32_0 = arith.constant 0 : i32
    %c0_i32_1 = arith.constant 0 : i32
    return %arg0, %c0_i32, %c0_i32_0 : i32, i32, i32
  }
  func.func @transform_12(%arg0: i32) -> (i32, i32, i32) {
    %c0_i32 = arith.constant 0 : i32
    %c0_i32_0 = arith.constant 0 : i32
    %c0_i32_1 = arith.constant 0 : i32
    return %arg0, %c0_i32, %c0_i32_0 : i32, i32, i32
  }
  func.func @transform_13(%arg0: i32) -> (i32, i32, i32) {
    %c0_i32 = arith.constant 0 : i32
    %c0_i32_0 = arith.constant 0 : i32
    %c0_i32_1 = arith.constant 0 : i32
    return %arg0, %c0_i32, %c0_i32_0 : i32, i32, i32
  }
  func.func @transform_14(%arg0: i32) -> (i32, i32, i32) {
    %c0_i32 = arith.constant 0 : i32
    %c0_i32_0 = arith.constant 0 : i32
    %c0_i32_1 = arith.constant 0 : i32
    return %arg0, %c0_i32, %c0_i32_0 : i32, i32, i32
  }
  func.func @transform_15(%arg0: i32) -> (i32, i32, i32) {
    %c0_i32 = arith.constant 0 : i32
    %c0_i32_0 = arith.constant 0 : i32
    %c0_i32_1 = arith.constant 0 : i32
    return %arg0, %c0_i32, %c0_i32_0 : i32, i32, i32
  }
  func.func @transform_16(%arg0: i32) -> (i32, i32) {
    %c0_i32 = arith.constant 0 : i32
    %c0_i32_0 = arith.constant 0 : i32
    %c0_i32_1 = arith.constant 0 : i32
    return %c0_i32, %c0_i32_0 : i32, i32
  }
}

</mosaic_0001>

<llo_original>
// kernel: cablock_forward.1
$region0: #{cablock_forward.1}
  #allocation0 [shape = 'u32[]', space=smem, size = 0x4, offset = 0x4, fixed_abs, tag = 'smem constant byte address 0x4 - core index']
  #allocation1 [shape = 'u32[144,128]{1,0:T(1,128)}', space=vmem, size = 0x12000, scoped, tag = 'internal scratch']
  #allocation2 [shape = 'f32[128,32]{1,0:T(8,128)}', space=vmem, size = 0x10000, scoped, tag = 'scratch operand']
  %s0 = inlined_call_operand.hbm [shape: f32[128,32], index: 0, kind: input, shape index: {}]
  %s1 = inlined_call_operand.hbm [shape: f32[16,16], index: 1, kind: input, shape index: {}]
  %s2 = inlined_call_operand.hbm [shape: f32[2,1,32], index: 2, kind: input, shape index: {}]
  %s3 = inlined_call_operand.hbm [shape: f32[2,1,32], index: 3, kind: input, shape index: {}]
  %s4 = inlined_call_operand.vmem [shape: bf16[2,32,32], index: 4, kind: input, shape index: {}]
  %s5 = inlined_call_operand.hbm [shape: f32[2,1,32], index: 5, kind: input, shape index: {}]
  %s6 = inlined_call_operand.hbm [shape: bf16[2,16,64], index: 6, kind: input, shape index: {}]
  %s7 = inlined_call_operand.hbm [shape: f32[2,1,64], index: 7, kind: input, shape index: {}]
  %s8 = inlined_call_operand.vmem [shape: bf16[2,32,32], index: 8, kind: input, shape index: {}]
  %s9 = inlined_call_operand.hbm [shape: f32[2,1,32], index: 9, kind: input, shape index: {}]
  %s10 = inlined_call_operand.hbm [shape: f32[2,1,32], index: 10, kind: input, shape index: {}]
  %s11 = inlined_call_operand.hbm [shape: f32[2,1,32], index: 11, kind: input, shape index: {}]
  %s12 = inlined_call_operand.hbm [shape: bf16[2,32,32], index: 12, kind: input, shape index: {}]
  %s13 = inlined_call_operand.hbm [shape: f32[2,1,32], index: 13, kind: input, shape index: {}]
  %s14 = inlined_call_operand.hbm [shape: bf16[2,32,32], index: 14, kind: input, shape index: {}]
  %s15 = inlined_call_operand.hbm [shape: f32[2,1,32], index: 15, kind: input, shape index: {}]
  %s16 = inlined_call_operand.hbm [shape: f32[128,32], index: 16, kind: output, shape index: {}]
  %s17 = sld [smem:[#allocation0]]
  $region157: #{cablock_forward.1} parent=0
    _
  %s19 = ssub.s32 1, %s17
  %s20 = scalar_select 0, %s19, %s17
  $region1: #{cablock_forward.1} parent=0
    #allocation3 [shape = 'u8[65536]{0}', space=vmem, size = 0x10000, scoped, tag = 'input window, operand 0, single buffered']
    #allocation4 [shape = 's32[2]{0}', space=sflag, size = 0x8, scoped, tag = 'scoped memory for cablock_forward.1']
    #allocation5 [shape = 's32[2]{0}', space=sflag, size = 0x8, scoped, tag = 'scoped memory for cablock_forward.1']
    #allocation6 [shape = 'u8[8192]{0}', space=vmem, size = 0x2000, scoped, tag = 'input window, operand 1, single buffered']
    #allocation7 [shape = 's32[1]{0}', space=sflag, size = 0x4, scoped, tag = 'scoped memory for cablock_forward.1']
    #allocation8 [shape = 'u8[1024]{0}', space=vmem, size = 0x400, scoped, tag = 'input window, operand 2']
    #allocation9 [shape = 'u8[1024]{0}', space=vmem, size = 0x400, scoped, tag = 'input window, operand 3']
    #allocation10 [shape = 'u8[1024]{0}', space=vmem, size = 0x400, scoped, tag = 'input window, operand 5']
    #allocation11 [shape = 'u8[8192]{0}', space=vmem, size = 0x2000, scoped, tag = 'input window, operand 6']
    #allocation12 [shape = 'u8[1024]{0}', space=vmem, size = 0x400, scoped, tag = 'input window, operand 7']
    #allocation13 [shape = 'u8[1024]{0}', space=vmem, size = 0x400, scoped, tag = 'input window, operand 9']
    #allocation14 [shape = 'u8[1024]{0}', space=vmem, size = 0x400, scoped, tag = 'input window, operand 10']
    #allocation15 [shape = 'u8[1024]{0}', space=vmem, size = 0x400, scoped, tag = 'input window, operand 11']
    #allocation16 [shape = 'u8[16384]{0}', space=vmem, size = 0x4000, scoped, tag = 'input window, operand 12']
    #allocation17 [shape = 'u8[1024]{0}', space=vmem, size = 0x400, scoped, tag = 'input window, operand 13']
    #allocation18 [shape = 'u8[16384]{0}', space=vmem, size = 0x4000, scoped, tag = 'input window, operand 14']
    #allocation19 [shape = 'u8[1024]{0}', space=vmem, size = 0x400, scoped, tag = 'input window, operand 15']
    #allocation20 [shape = 'u8[65536]{0}', space=vmem, size = 0x10000, scoped, tag = 'output window, operand 0, single buffered']
    %21 = vsyncpa [#allocation4], 0
    %22 = vsyncpa [#allocation7], 0
    %23 = vsyncpa [#allocation5], 0
    loop: start=0, step=1, limit=4
    $region2: #{cablock_forward.1} parent=1 // loop_pre_header
      _
    $region3: #{cablock_forward.1} parent=1 // loop_header
      %s25 = sphi 0, %s29
      %p26 = scmp.ge.s32.totalorder %s25, 4
      %s33 = sphi 0, %s33
      %s35 = sphi 0, %s33
      %s36 = sphi 0, %s35
      %s50 = sphi 0, %s36
      %s54 = sphi 0, %s54
      %s56 = sphi 0, %s54
      %s57 = sphi 0, %s56
      %s71 = sphi 0, %s57
      %s77 = sphi 0, %s79
      %s80 = sphi 0, %s77
      %s81 = sphi 0, %s80
      %s97 = sphi 0, %s81
      %s103 = sphi 0, %s105
      %s106 = sphi 0, %s103
      %s107 = sphi 0, %s106
      %s123 = sphi 0, %s107
      %s129 = sphi 0, %s131
      %s132 = sphi 0, %s129
      %s133 = sphi 0, %s132
      %s149 = sphi 0, %s133
      %s155 = sphi 0, %s157
      %s158 = sphi 0, %s155
      %s159 = sphi 0, %s158
      %s175 = sphi 0, %s159
      %s181 = sphi 0, %s183
      %s184 = sphi 0, %s181
      %s185 = sphi 0, %s184
      %s201 = sphi 0, %s185
      %s207 = sphi 0, %s209
      %s210 = sphi 0, %s207
      %s211 = sphi 0, %s210
      %s227 = sphi 0, %s211
      %s233 = sphi 0, %s235
      %s236 = sphi 0, %s233
      %s237 = sphi 0, %s236
      %s253 = sphi 0, %s237
      %s259 = sphi 0, %s261
      %s262 = sphi 0, %s259
      %s263 = sphi 0, %s262
      %s279 = sphi 0, %s263
      %s285 = sphi 0, %s287
      %s288 = sphi 0, %s285
      %s289 = sphi 0, %s288
      %s305 = sphi 0, %s289
      %s311 = sphi 0, %s313
      %s314 = sphi 0, %s311
      %s315 = sphi 0, %s314
      %s331 = sphi 0, %s315
      %s337 = sphi 0, %s339
      %s340 = sphi 0, %s337
      %s341 = sphi 0, %s340
      %s357 = sphi 0, %s341
      %s363 = sphi 0, %s365
      %s366 = sphi 0, %s363
      %s367 = sphi 0, %s366
      %s383 = sphi 0, %s367
      %s389 = sphi 0, %s391
      %s392 = sphi 0, %s389
      %s393 = sphi 0, %s392
      %s409 = sphi 0, %s393
      %s415 = sphi 0, %s417
      %s418 = sphi 0, %s415
      %s419 = sphi 0, %s418
      %s435 = sphi 0, %s419
      %s439 = sphi 0, %s439
      %s441 = sphi 0, %s439
      %s442 = sphi 0, %s441
      %s456 = sphi 0, %s442
    $region4: #{cablock_forward.1} parent=1 // loop_header_branch
      %28 = sbr.rel (%p26) target = $region8
    $region5: #{cablock_forward.1} parent=1 // loop_body
      %s30 = ssub.s32 %s25, 1
      %s31 = ssub.s32 %s25, 2
      %s32 = sadd.s32 %s25, 1
      %s34 = sadd.s32 %s33, 1
      %p37 = scmp.eq.s32.totalorder %s25, 1
      %p38 = scmp.ne.s32.totalorder %s33, %s35
      %p39 = scmp.eq.s32.totalorder %s25, 0
      %p40 = por %p38, %p39
      %p41 = scmp.ne.s32.totalorder %s33, %s35
      %p42 = scmp.eq.s32.totalorder %s30, 1
      %p43 = por %p41, %p42
      %p44 = scmp.ne.s32.totalorder %s35, %s36
      %p45 = scmp.eq.s32.totalorder %s30, 0
      %p46 = por %p44, %p45
      %p47 = scmp.ne.s32.totalorder %s35, %s36
      %p48 = scmp.eq.s32.totalorder %s31, 1
      %p49 = por %p47, %p48
      %p51 = scmp.ne.s32.totalorder %s36, %s50
      %p52 = scmp.eq.s32.totalorder %s31, 0
      %p53 = por %p51, %p52
      %s55 = sadd.s32 %s54, 1
      %p58 = scmp.eq.s32.totalorder %s25, 1
      %p59 = scmp.ne.s32.totalorder %s54, %s56
      %p60 = scmp.eq.s32.totalorder %s25, 0
      %p61 = por %p59, %p60
      %p62 = scmp.ne.s32.totalorder %s54, %s56
      %p63 = scmp.eq.s32.totalorder %s30, 1
      %p64 = por %p62, %p63
      %p65 = scmp.ne.s32.totalorder %s56, %s57
      %p66 = scmp.eq.s32.totalorder %s30, 0
      %p67 = por %p65, %p66
      %p68 = scmp.ne.s32.totalorder %s56, %s57
      %p69 = scmp.eq.s32.totalorder %s31, 1
      %p70 = por %p68, %p69
      %p72 = scmp.ne.s32.totalorder %s57, %s71
      %p73 = scmp.eq.s32.totalorder %s31, 0
      %p74 = por %p72, %p73
      %s75 = ssub.s32 %s25, %s32
      %p76 = scmp.eq.s32.totalorder %s75, 0
      %s78 = sadd.s32 %s77, 1
      %s79 = scalar_select %p76, %s77, %s78
      %p82 = pneg %p76
      %p83 = scmp.eq.s32.totalorder %s25, 1
      %p84 = por %p82, %p83
      %p85 = scmp.ne.s32.totalorder %s77, %s80
      %p86 = scmp.eq.s32.totalorder %s25, 0
      %p87 = por %p85, %p86
      %p88 = scmp.ne.s32.totalorder %s77, %s80
      %p89 = scmp.eq.s32.totalorder %s30, 1
      %p90 = por %p88, %p89
      %p91 = scmp.ne.s32.totalorder %s80, %s81
      %p92 = scmp.eq.s32.totalorder %s30, 0
      %p93 = por %p91, %p92
      %p94 = scmp.ne.s32.totalorder %s80, %s81
      %p95 = scmp.eq.s32.totalorder %s31, 1
      %p96 = por %p94, %p95
      %p98 = scmp.ne.s32.totalorder %s81, %s97
      %p99 = scmp.eq.s32.totalorder %s31, 0
      %p100 = por %p98, %p99
      %s101 = ssub.s32 %s25, %s32
      %p102 = scmp.eq.s32.totalorder %s101, 0
      %s104 = sadd.s32 %s103, 1
      %s105 = scalar_select %p102, %s103, %s104
      %p108 = pneg %p102
      %p109 = scmp.eq.s32.totalorder %s25, 1
      %p110 = por %p108, %p109
      %p111 = scmp.ne.s32.totalorder %s103, %s106
      %p112 = scmp.eq.s32.totalorder %s25, 0
      %p113 = por %p111, %p112
      %p114 = scmp.ne.s32.totalorder %s103, %s106
      %p115 = scmp.eq.s32.totalorder %s30, 1
      %p116 = por %p114, %p115
      %p117 = scmp.ne.s32.totalorder %s106, %s107
      %p118 = scmp.eq.s32.totalorder %s30, 0
      %p119 = por %p117, %p118
      %p120 = scmp.ne.s32.totalorder %s106, %s107
      %p121 = scmp.eq.s32.totalorder %s31, 1
      %p122 = por %p120, %p121
      %p124 = scmp.ne.s32.totalorder %s107, %s123
      %p125 = scmp.eq.s32.totalorder %s31, 0
      %p126 = por %p124, %p125
      %s127 = ssub.s32 %s25, %s32
      %p128 = scmp.eq.s32.totalorder %s127, 0
      %s130 = sadd.s32 %s129, 1
      %s131 = scalar_select %p128, %s129, %s130
      %p134 = pneg %p128
      %p135 = scmp.eq.s32.totalorder %s25, 1
      %p136 = por %p134, %p135
      %p137 = scmp.ne.s32.totalorder %s129, %s132
      %p138 = scmp.eq.s32.totalorder %s25, 0
      %p139 = por %p137, %p138
      %p140 = scmp.ne.s32.totalorder %s129, %s132
      %p141 = scmp.eq.s32.totalorder %s30, 1
      %p142 = por %p140, %p141
      %p143 = scmp.ne.s32.totalorder %s132, %s133
      %p144 = scmp.eq.s32.totalorder %s30, 0
      %p145 = por %p143, %p144
      %p146 = scmp.ne.s32.totalorder %s132, %s133
      %p147 = scmp.eq.s32.totalorder %s31, 1
      %p148 = por %p146, %p147
      %p150 = scmp.ne.s32.totalorder %s133, %s149
      %p151 = scmp.eq.s32.totalorder %s31, 0
      %p152 = por %p150, %p151
      %s153 = ssub.s32 %s25, %s32
      %p154 = scmp.eq.s32.totalorder %s153, 0
      %s156 = sadd.s32 %s155, 1
      %s157 = scalar_select %p154, %s155, %s156
      %p160 = pneg %p154
      %p161 = scmp.eq.s32.totalorder %s25, 1
      %p162 = por %p160, %p161
      %p163 = scmp.ne.s32.totalorder %s155, %s158
      %p164 = scmp.eq.s32.totalorder %s25, 0
      %p165 = por %p163, %p164
      %p166 = scmp.ne.s32.totalorder %s155, %s158
      %p167 = scmp.eq.s32.totalorder %s30, 1
      %p168 = por %p166, %p167
      %p169 = scmp.ne.s32.totalorder %s158, %s159
      %p170 = scmp.eq.s32.totalorder %s30, 0
      %p171 = por %p169, %p170
      %p172 = scmp.ne.s32.totalorder %s158, %s159
      %p173 = scmp.eq.s32.totalorder %s31, 1
      %p174 = por %p172, %p173
      %p176 = scmp.ne.s32.totalorder %s159, %s175
      %p177 = scmp.eq.s32.totalorder %s31, 0
      %p178 = por %p176, %p177
      %s179 = ssub.s32 %s25, %s32
      %p180 = scmp.eq.s32.totalorder %s179, 0
      %s182 = sadd.s32 %s181, 1
      %s183 = scalar_select %p180, %s181, %s182
      %p186 = pneg %p180
      %p187 = scmp.eq.s32.totalorder %s25, 1
      %p188 = por %p186, %p187
      %p189 = scmp.ne.s32.totalorder %s181, %s184
      %p190 = scmp.eq.s32.totalorder %s25, 0
      %p191 = por %p189, %p190
      %p192 = scmp.ne.s32.totalorder %s181, %s184
      %p193 = scmp.eq.s32.totalorder %s30, 1
      %p194 = por %p192, %p193
      %p195 = scmp.ne.s32.totalorder %s184, %s185
      %p196 = scmp.eq.s32.totalorder %s30, 0
      %p197 = por %p195, %p196
      %p198 = scmp.ne.s32.totalorder %s184, %s185
      %p199 = scmp.eq.s32.totalorder %s31, 1
      %p200 = por %p198, %p199
      %p202 = scmp.ne.s32.totalorder %s185, %s201
      %p203 = scmp.eq.s32.totalorder %s31, 0
      %p204 = por %p202, %p203
      %s205 = ssub.s32 %s25, %s32
      %p206 = scmp.eq.s32.totalorder %s205, 0
      %s208 = sadd.s32 %s207, 1
      %s209 = scalar_select %p206, %s207, %s208
      %p212 = pneg %p206
      %p213 = scmp.eq.s32.totalorder %s25, 1
      %p214 = por %p212, %p213
      %p215 = scmp.ne.s32.totalorder %s207, %s210
      %p216 = scmp.eq.s32.totalorder %s25, 0
      %p217 = por %p215, %p216
      %p218 = scmp.ne.s32.totalorder %s207, %s210
      %p219 = scmp.eq.s32.totalorder %s30, 1
      %p220 = por %p218, %p219
      %p221 = scmp.ne.s32.totalorder %s210, %s211
      %p222 = scmp.eq.s32.totalorder %s30, 0
      %p223 = por %p221, %p222
      %p224 = scmp.ne.s32.totalorder %s210, %s211
      %p225 = scmp.eq.s32.totalorder %s31, 1
      %p226 = por %p224, %p225
      %p228 = scmp.ne.s32.totalorder %s211, %s227
      %p229 = scmp.eq.s32.totalorder %s31, 0
      %p230 = por %p228, %p229
      %s231 = ssub.s32 %s25, %s32
      %p232 = scmp.eq.s32.totalorder %s231, 0
      %s234 = sadd.s32 %s233, 1
      %s235 = scalar_select %p232, %s233, %s234
      %p238 = pneg %p232
      %p239 = scmp.eq.s32.totalorder %s25, 1
      %p240 = por %p238, %p239
      %p241 = scmp.ne.s32.totalorder %s233, %s236
      %p242 = scmp.eq.s32.totalorder %s25, 0
      %p243 = por %p241, %p242
      %p244 = scmp.ne.s32.totalorder %s233, %s236
      %p245 = scmp.eq.s32.totalorder %s30, 1
      %p246 = por %p244, %p245
      %p247 = scmp.ne.s32.totalorder %s236, %s237
      %p248 = scmp.eq.s32.totalorder %s30, 0
      %p249 = por %p247, %p248
      %p250 = scmp.ne.s32.totalorder %s236, %s237
      %p251 = scmp.eq.s32.totalorder %s31, 1
      %p252 = por %p250, %p251
      %p254 = scmp.ne.s32.totalorder %s237, %s253
      %p255 = scmp.eq.s32.totalorder %s31, 0
      %p256 = por %p254, %p255
      %s257 = ssub.s32 %s25, %s32
      %p258 = scmp.eq.s32.totalorder %s257, 0
      %s260 = sadd.s32 %s259, 1
      %s261 = scalar_select %p258, %s259, %s260
      %p264 = pneg %p258
      %p265 = scmp.eq.s32.totalorder %s25, 1
      %p266 = por %p264, %p265
      %p267 = scmp.ne.s32.totalorder %s259, %s262
      %p268 = scmp.eq.s32.totalorder %s25, 0
      %p269 = por %p267, %p268
      %p270 = scmp.ne.s32.totalorder %s259, %s262
      %p271 = scmp.eq.s32.totalorder %s30, 1
      %p272 = por %p270, %p271
      %p273 = scmp.ne.s32.totalorder %s262, %s263
      %p274 = scmp.eq.s32.totalorder %s30, 0
      %p275 = por %p273, %p274
      %p276 = scmp.ne.s32.totalorder %s262, %s263
      %p277 = scmp.eq.s32.totalorder %s31, 1
      %p278 = por %p276, %p277
      %p280 = scmp.ne.s32.totalorder %s263, %s279
      %p281 = scmp.eq.s32.totalorder %s31, 0
      %p282 = por %p280, %p281
      %s283 = ssub.s32 %s25, %s32
      %p284 = scmp.eq.s32.totalorder %s283, 0
      %s286 = sadd.s32 %s285, 1
      %s287 = scalar_select %p284, %s285, %s286
      %p290 = pneg %p284
      %p291 = scmp.eq.s32.totalorder %s25, 1
      %p292 = por %p290, %p291
      %p293 = scmp.ne.s32.totalorder %s285, %s288
      %p294 = scmp.eq.s32.totalorder %s25, 0
      %p295 = por %p293, %p294
      %p296 = scmp.ne.s32.totalorder %s285, %s288
      %p297 = scmp.eq.s32.totalorder %s30, 1
      %p298 = por %p296, %p297
      %p299 = scmp.ne.s32.totalorder %s288, %s289
      %p300 = scmp.eq.s32.totalorder %s30, 0
      %p301 = por %p299, %p300
      %p302 = scmp.ne.s32.totalorder %s288, %s289
      %p303 = scmp.eq.s32.totalorder %s31, 1
      %p304 = por %p302, %p303
      %p306 = scmp.ne.s32.totalorder %s289, %s305
      %p307 = scmp.eq.s32.totalorder %s31, 0
      %p308 = por %p306, %p307
      %s309 = ssub.s32 %s25, %s32
      %p310 = scmp.eq.s32.totalorder %s309, 0
      %s312 = sadd.s32 %s311, 1
      %s313 = scalar_select %p310, %s311, %s312
      %p316 = pneg %p310
      %p317 = scmp.eq.s32.totalorder %s25, 1
      %p318 = por %p316, %p317
      %p319 = scmp.ne.s32.totalorder %s311, %s314
      %p320 = scmp.eq.s32.totalorder %s25, 0
      %p321 = por %p319, %p320
      %p322 = scmp.ne.s32.totalorder %s311, %s314
      %p323 = scmp.eq.s32.totalorder %s30, 1
      %p324 = por %p322, %p323
      %p325 = scmp.ne.s32.totalorder %s314, %s315
      %p326 = scmp.eq.s32.totalorder %s30, 0
      %p327 = por %p325, %p326
      %p328 = scmp.ne.s32.totalorder %s314, %s315
      %p329 = scmp.eq.s32.totalorder %s31, 1
      %p330 = por %p328, %p329
      %p332 = scmp.ne.s32.totalorder %s315, %s331
      %p333 = scmp.eq.s32.totalorder %s31, 0
      %p334 = por %p332, %p333
      %s335 = ssub.s32 %s25, %s32
      %p336 = scmp.eq.s32.totalorder %s335, 0
      %s338 = sadd.s32 %s337, 1
      %s339 = scalar_select %p336, %s337, %s338
      %p342 = pneg %p336
      %p343 = scmp.eq.s32.totalorder %s25, 1
      %p344 = por %p342, %p343
      %p345 = scmp.ne.s32.totalorder %s337, %s340
      %p346 = scmp.eq.s32.totalorder %s25, 0
      %p347 = por %p345, %p346
      %p348 = scmp.ne.s32.totalorder %s337, %s340
      %p349 = scmp.eq.s32.totalorder %s30, 1
      %p350 = por %p348, %p349
      %p351 = scmp.ne.s32.totalorder %s340, %s341
      %p352 = scmp.eq.s32.totalorder %s30, 0
      %p353 = por %p351, %p352
      %p354 = scmp.ne.s32.totalorder %s340, %s341
      %p355 = scmp.eq.s32.totalorder %s31, 1
      %p356 = por %p354, %p355
      %p358 = scmp.ne.s32.totalorder %s341, %s357
      %p359 = scmp.eq.s32.totalorder %s31, 0
      %p360 = por %p358, %p359
      %s361 = ssub.s32 %s25, %s32
      %p362 = scmp.eq.s32.totalorder %s361, 0
      %s364 = sadd.s32 %s363, 1
      %s365 = scalar_select %p362, %s363, %s364
      %p368 = pneg %p362
      %p369 = scmp.eq.s32.totalorder %s25, 1
      %p370 = por %p368, %p369
      %p371 = scmp.ne.s32.totalorder %s363, %s366
      %p372 = scmp.eq.s32.totalorder %s25, 0
      %p373 = por %p371, %p372
      %p374 = scmp.ne.s32.totalorder %s363, %s366
      %p375 = scmp.eq.s32.totalorder %s30, 1
      %p376 = por %p374, %p375
      %p377 = scmp.ne.s32.totalorder %s366, %s367
      %p378 = scmp.eq.s32.totalorder %s30, 0
      %p379 = por %p377, %p378
      %p380 = scmp.ne.s32.totalorder %s366, %s367
      %p381 = scmp.eq.s32.totalorder %s31, 1
      %p382 = por %p380, %p381
      %p384 = scmp.ne.s32.totalorder %s367, %s383
      %p385 = scmp.eq.s32.totalorder %s31, 0
      %p386 = por %p384, %p385
      %s387 = ssub.s32 %s25, %s32
      %p388 = scmp.eq.s32.totalorder %s387, 0
      %s390 = sadd.s32 %s389, 1
      %s391 = scalar_select %p388, %s389, %s390
      %p394 = pneg %p388
      %p395 = scmp.eq.s32.totalorder %s25, 1
      %p396 = por %p394, %p395
      %p397 = scmp.ne.s32.totalorder %s389, %s392
      %p398 = scmp.eq.s32.totalorder %s25, 0
      %p399 = por %p397, %p398
      %p400 = scmp.ne.s32.totalorder %s389, %s392
      %p401 = scmp.eq.s32.totalorder %s30, 1
      %p402 = por %p400, %p401
      %p403 = scmp.ne.s32.totalorder %s392, %s393
      %p404 = scmp.eq.s32.totalorder %s30, 0
      %p405 = por %p403, %p404
      %p406 = scmp.ne.s32.totalorder %s392, %s393
      %p407 = scmp.eq.s32.totalorder %s31, 1
      %p408 = por %p406, %p407
      %p410 = scmp.ne.s32.totalorder %s393, %s409
      %p411 = scmp.eq.s32.totalorder %s31, 0
      %p412 = por %p410, %p411
      %s413 = ssub.s32 %s25, %s32
      %p414 = scmp.eq.s32.totalorder %s413, 0
      %s416 = sadd.s32 %s415, 1
      %s417 = scalar_select %p414, %s415, %s416
      %p420 = pneg %p414
      %p421 = scmp.eq.s32.totalorder %s25, 1
      %p422 = por %p420, %p421
      %p423 = scmp.ne.s32.totalorder %s415, %s418
      %p424 = scmp.eq.s32.totalorder %s25, 0
      %p425 = por %p423, %p424
      %p426 = scmp.ne.s32.totalorder %s415, %s418
      %p427 = scmp.eq.s32.totalorder %s30, 1
      %p428 = por %p426, %p427
      %p429 = scmp.ne.s32.totalorder %s418, %s419
      %p430 = scmp.eq.s32.totalorder %s30, 0
      %p431 = por %p429, %p430
      %p432 = scmp.ne.s32.totalorder %s418, %s419
      %p433 = scmp.eq.s32.totalorder %s31, 1
      %p434 = por %p432, %p433
      %p436 = scmp.ne.s32.totalorder %s419, %s435
      %p437 = scmp.eq.s32.totalorder %s31, 0
      %p438 = por %p436, %p437
      %s440 = sadd.s32 %s439, 1
      %p443 = scmp.eq.s32.totalorder %s25, 1
      %p444 = scmp.ne.s32.totalorder %s439, %s441
      %p445 = scmp.eq.s32.totalorder %s25, 0
      %p446 = por %p444, %p445
      %p447 = scmp.ne.s32.totalorder %s439, %s441
      %p448 = scmp.eq.s32.totalorder %s30, 1
      %p449 = por %p447, %p448
      %p450 = scmp.ne.s32.totalorder %s441, %s442
      %p451 = scmp.eq.s32.totalorder %s30, 0
      %p452 = por %p450, %p451
      %p453 = scmp.ne.s32.totalorder %s441, %s442
      %p454 = scmp.eq.s32.totalorder %s31, 1
      %p455 = por %p453, %p454
      %p457 = scmp.ne.s32.totalorder %s442, %s456
      %p458 = scmp.eq.s32.totalorder %s31, 0
      %p459 = por %p457, %p458
      %p460 = scmp.le.s32.totalorder 1, %s25
      %p461 = scmp.lt.s32.totalorder %s25, 3
      %p462 = pnand %p460, %p461
      %p463 = pneg %p462
      // Predicated region
      $region9: #{cablock_forward.1} parent=5 // pred_check
        _
      $region10: #{cablock_forward.1} parent=5 // pred_check_branch
        %465 = sbr.rel (%p462) target = $region12
      $region11: #{cablock_forward.1} parent=5 // pred_region
        %s466 = ssub.s32 %s25, 1
        // Predicated region
        $region13: #{cablock_forward.1} parent=11 // pred_check
          %p467 = pneg %p46
        $region14: #{cablock_forward.1} parent=11 // pred_check_branch
          %469 = sbr.rel (%p467) target = $region16
        $region15: #{cablock_forward.1} parent=11 // pred_region
          %s471 = ssub.s32 2048, 2048
          %472 = vsyncadd [#allocation4], %s471
          %s473 = sshll.u32 [#allocation3], 4
          %s474 = int_to_ptr.vmem [resolvable:$true] %s473
          %479 = dma.hbm_to_vmem [thread:$0]  %s0, 2048, %s474, [#allocation4], 128, 128, 8
        $region16: #{cablock_forward.1} parent=11 // pred_fallthru
          _
        // Predicated region
        $region17: #{cablock_forward.1} parent=11 // pred_check
          %p480 = pneg %p67
        $region18: #{cablock_forward.1} parent=11 // pred_check_branch
          %482 = sbr.rel (%p480) target = $region20
        $region19: #{cablock_forward.1} parent=11 // pred_region
          %s484 = ssub.s32 256, 256
          %485 = vsyncadd [#allocation7], %s484
          %s486 = sshll.u32 [#allocation6], 4
          %s487 = int_to_ptr.vmem [resolvable:$true] %s486
          %492 = dma.hbm_to_vmem [thread:$0]  %s1, 256, %s487, [#allocation7], 128, 128, 8
        $region20: #{cablock_forward.1} parent=11 // pred_fallthru
          _
      $region12: #{cablock_forward.1} parent=5 // pred_fallthru
        _
      %p493 = scmp.lt.s32.totalorder %s25, 2
      // Predicated region
      $region21: #{cablock_forward.1} parent=5 // pred_check
        %p494 = pneg %p493
      $region22: #{cablock_forward.1} parent=5 // pred_check_branch
        %496 = sbr.rel (%p494) target = $region24
      $region23: #{cablock_forward.1} parent=5 // pred_region
        // Predicated region
        $region25: #{cablock_forward.1} parent=23 // pred_check
          %p497 = pneg %p87
        $region26: #{cablock_forward.1} parent=23 // pred_check_branch
          %499 = sbr.rel (%p497) target = $region28
        $region27: #{cablock_forward.1} parent=23 // pred_region
          %s500 = sand.u32 %s25, 1
          %s501 = scalar_lea.sflag [#allocation4], %s500
          %s502 = sand.u32 %s77, 1
          %s503 = scalar_lea.vmem [#allocation8], %s502
          %s505 = ssub.s32 16, 16
          %506 = vsyncadd %s501, %s505
          %s507 = smul.addr %s25, 16
          %s508 = scalar_lea.hbm %s2, %s507
          %s510 = sshll.u32 %s503, 4
          %s511 = int_to_ptr.vmem [resolvable:$true] %s510
          %513 = dma.hbm_to_vmem [thread:$0]  %s508, 16, %s511, %s501
        $region28: #{cablock_forward.1} parent=23 // pred_fallthru
          _
        // Predicated region
        $region29: #{cablock_forward.1} parent=23 // pred_check
          %p514 = pneg %p113
        $region30: #{cablock_forward.1} parent=23 // pred_check_branch
          %516 = sbr.rel (%p514) target = $region32
        $region31: #{cablock_forward.1} parent=23 // pred_region
          %s517 = sand.u32 %s25, 1
          %s518 = scalar_lea.sflag [#allocation4], %s517
          %s519 = sand.u32 %s103, 1
          %s520 = scalar_lea.vmem [#allocation9], %s519
          %s522 = ssub.s32 16, 16
          %523 = vsyncadd %s518, %s522
          %s524 = smul.addr %s25, 16
          %s525 = scalar_lea.hbm %s3, %s524
          %s527 = sshll.u32 %s520, 4
          %s528 = int_to_ptr.vmem [resolvable:$true] %s527
          %530 = dma.hbm_to_vmem [thread:$0]  %s525, 16, %s528, %s518
        $region32: #{cablock_forward.1} parent=23 // pred_fallthru
          _
        // Predicated region
        $region33: #{cablock_forward.1} parent=23 // pred_check
          %p531 = pneg %p139
        $region34: #{cablock_forward.1} parent=23 // pred_check_branch
          %533 = sbr.rel (%p531) target = $region36
        $region35: #{cablock_forward.1} parent=23 // pred_region
          %p534 = scmp.lt.s32.totalorder %s25, 1
          %s535 = scalar_select %p534, %s25, 1
          %s536 = smul.addr %s535, 4
          %s537 = smul.addr %s536, 4
          %s538 = scalar_lea.vmem %s4, %s537
        $region36: #{cablock_forward.1} parent=23 // pred_fallthru
          _
        // Predicated region
        $region37: #{cablock_forward.1} parent=23 // pred_check
          %p539 = pneg %p165
        $region38: #{cablock_forward.1} parent=23 // pred_check_branch
          %541 = sbr.rel (%p539) target = $region40
        $region39: #{cablock_forward.1} parent=23 // pred_region
          %s542 = sand.u32 %s25, 1
          %s543 = scalar_lea.sflag [#allocation4], %s542
          %s544 = sand.u32 %s155, 1
          %s545 = scalar_lea.vmem [#allocation10], %s544
          %s547 = ssub.s32 16, 16
          %548 = vsyncadd %s543, %s547
          %s549 = smul.addr %s25, 16
          %s550 = scalar_lea.hbm %s5, %s549
          %s552 = sshll.u32 %s545, 4
          %s553 = int_to_ptr.vmem [resolvable:$true] %s552
          %555 = dma.hbm_to_vmem [thread:$0]  %s550, 16, %s553, %s543
        $region40: #{cablock_forward.1} parent=23 // pred_fallthru
          _
        // Predicated region
        $region41: #{cablock_forward.1} parent=23 // pred_check
          %p556 = pneg %p191
        $region42: #{cablock_forward.1} parent=23 // pred_check_branch
          %558 = sbr.rel (%p556) target = $region44
        $region43: #{cablock_forward.1} parent=23 // pred_region
          %s559 = sand.u32 %s25, 1
          %s560 = scalar_lea.sflag [#allocation4], %s559
          %s561 = sand.u32 %s181, 1
          %s562 = smul.addr %s561, 8
          %s563 = scalar_lea.vmem [#allocation11], %s562
          %s565 = ssub.s32 128, 128
          %566 = vsyncadd %s560, %s565
          %s567 = smul.addr %s25, 2
          %s568 = smul.addr %s567, 64
          %s569 = scalar_lea.hbm %s6, %s568
          %s570 = sshll.u32 %s563, 4
          %s571 = int_to_ptr.vmem [resolvable:$true] %s570
          %576 = dma.hbm_to_vmem [thread:$0]  %s569, 128, %s571, %s560, 64, 64, 4
        $region44: #{cablock_forward.1} parent=23 // pred_fallthru
          _
        // Predicated region
        $region45: #{cablock_forward.1} parent=23 // pred_check
          %p577 = pneg %p217
        $region46: #{cablock_forward.1} parent=23 // pred_check_branch
          %579 = sbr.rel (%p577) target = $region48
        $region47: #{cablock_forward.1} parent=23 // pred_region
          %s580 = sand.u32 %s25, 1
          %s581 = scalar_lea.sflag [#allocation4], %s580
          %s582 = sand.u32 %s207, 1
          %s583 = scalar_lea.vmem [#allocation12], %s582
          %s585 = ssub.s32 16, 16
          %586 = vsyncadd %s581, %s585
          %s587 = smul.addr %s25, 16
          %s588 = scalar_lea.hbm %s7, %s587
          %s590 = sshll.u32 %s583, 4
          %s591 = int_to_ptr.vmem [resolvable:$true] %s590
          %593 = dma.hbm_to_vmem [thread:$0]  %s588, 16, %s591, %s581
        $region48: #{cablock_forward.1} parent=23 // pred_fallthru
          _
        // Predicated region
        $region49: #{cablock_forward.1} parent=23 // pred_check
          %p594 = pneg %p243
        $region50: #{cablock_forward.1} parent=23 // pred_check_branch
          %596 = sbr.rel (%p594) target = $region52
        $region51: #{cablock_forward.1} parent=23 // pred_region
          %p597 = scmp.lt.s32.totalorder %s25, 1
          %s598 = scalar_select %p597, %s25, 1
          %s599 = smul.addr %s598, 4
          %s600 = smul.addr %s599, 4
          %s601 = scalar_lea.vmem %s8, %s600
        $region52: #{cablock_forward.1} parent=23 // pred_fallthru
          _
        // Predicated region
        $region53: #{cablock_forward.1} parent=23 // pred_check
          %p602 = pneg %p269
        $region54: #{cablock_forward.1} parent=23 // pred_check_branch
          %604 = sbr.rel (%p602) target = $region56
        $region55: #{cablock_forward.1} parent=23 // pred_region
          %s605 = sand.u32 %s25, 1
          %s606 = scalar_lea.sflag [#allocation4], %s605
          %s607 = sand.u32 %s259, 1
          %s608 = scalar_lea.vmem [#allocation13], %s607
          %s610 = ssub.s32 16, 16
          %611 = vsyncadd %s606, %s610
          %s612 = smul.addr %s25, 16
          %s613 = scalar_lea.hbm %s9, %s612
          %s615 = sshll.u32 %s608, 4
          %s616 = int_to_ptr.vmem [resolvable:$true] %s615
          %618 = dma.hbm_to_vmem [thread:$0]  %s613, 16, %s616, %s606
        $region56: #{cablock_forward.1} parent=23 // pred_fallthru
          _
        // Predicated region
        $region57: #{cablock_forward.1} parent=23 // pred_check
          %p619 = pneg %p295
        $region58: #{cablock_forward.1} parent=23 // pred_check_branch
          %621 = sbr.rel (%p619) target = $region60
        $region59: #{cablock_forward.1} parent=23 // pred_region
          %s622 = sand.u32 %s25, 1
          %s623 = scalar_lea.sflag [#allocation4], %s622
          %s624 = sand.u32 %s285, 1
          %s625 = scalar_lea.vmem [#allocation14], %s624
          %s627 = ssub.s32 16, 16
          %628 = vsyncadd %s623, %s627
          %s629 = smul.addr %s25, 16
          %s630 = scalar_lea.hbm %s10, %s629
          %s632 = sshll.u32 %s625, 4
          %s633 = int_to_ptr.vmem [resolvable:$true] %s632
          %635 = dma.hbm_to_vmem [thread:$0]  %s630, 16, %s633, %s623
        $region60: #{cablock_forward.1} parent=23 // pred_fallthru
          _
        // Predicated region
        $region61: #{cablock_forward.1} parent=23 // pred_check
          %p636 = pneg %p321
        $region62: #{cablock_forward.1} parent=23 // pred_check_branch
          %638 = sbr.rel (%p636) target = $region64
        $region63: #{cablock_forward.1} parent=23 // pred_region
          %s639 = sand.u32 %s25, 1
          %s640 = scalar_lea.sflag [#allocation4], %s639
          %s641 = sand.u32 %s311, 1
          %s642 = scalar_lea.vmem [#allocation15], %s641
          %s644 = ssub.s32 16, 16
          %645 = vsyncadd %s640, %s644
          %s646 = smul.addr %s25, 16
          %s647 = scalar_lea.hbm %s11, %s646
          %s649 = sshll.u32 %s642, 4
          %s650 = int_to_ptr.vmem [resolvable:$true] %s649
          %652 = dma.hbm_to_vmem [thread:$0]  %s647, 16, %s650, %s640
        $region64: #{cablock_forward.1} parent=23 // pred_fallthru
          _
        // Predicated region
        $region65: #{cablock_forward.1} parent=23 // pred_check
          %p653 = pneg %p347
        $region66: #{cablock_forward.1} parent=23 // pred_check_branch
          %655 = sbr.rel (%p653) target = $region68
        $region67: #{cablock_forward.1} parent=23 // pred_region
          %s656 = sand.u32 %s25, 1
          %s657 = scalar_lea.sflag [#allocation4], %s656
          %s658 = sand.u32 %s337, 1
          %s659 = smul.addr %s658, 16
          %s660 = scalar_lea.vmem [#allocation16], %s659
          %s662 = ssub.s32 256, 256
          %663 = vsyncadd %s657, %s662
          %s664 = smul.addr %s25, 4
          %s665 = smul.addr %s664, 64
          %s666 = scalar_lea.hbm %s12, %s665
          %s667 = sshll.u32 %s660, 4
          %s668 = int_to_ptr.vmem [resolvable:$true] %s667
          %673 = dma.hbm_to_vmem [thread:$0]  %s666, 256, %s668, %s657, 64, 64, 4
        $region68: #{cablock_forward.1} parent=23 // pred_fallthru
          _
        // Predicated region
        $region69: #{cablock_forward.1} parent=23 // pred_check
          %p674 = pneg %p373
        $region70: #{cablock_forward.1} parent=23 // pred_check_branch
          %676 = sbr.rel (%p674) target = $region72
        $region71: #{cablock_forward.1} parent=23 // pred_region
          %s677 = sand.u32 %s25, 1
          %s678 = scalar_lea.sflag [#allocation4], %s677
          %s679 = sand.u32 %s363, 1
          %s680 = scalar_lea.vmem [#allocation17], %s679
          %s682 = ssub.s32 16, 16
          %683 = vsyncadd %s678, %s682
          %s684 = smul.addr %s25, 16
          %s685 = scalar_lea.hbm %s13, %s684
          %s687 = sshll.u32 %s680, 4
          %s688 = int_to_ptr.vmem [resolvable:$true] %s687
          %690 = dma.hbm_to_vmem [thread:$0]  %s685, 16, %s688, %s678
        $region72: #{cablock_forward.1} parent=23 // pred_fallthru
          _
        // Predicated region
        $region73: #{cablock_forward.1} parent=23 // pred_check
          %p691 = pneg %p399
        $region74: #{cablock_forward.1} parent=23 // pred_check_branch
          %693 = sbr.rel (%p691) target = $region76
        $region75: #{cablock_forward.1} parent=23 // pred_region
          %s694 = sand.u32 %s25, 1
          %s695 = scalar_lea.sflag [#allocation4], %s694
          %s696 = sand.u32 %s389, 1
          %s697 = smul.addr %s696, 16
          %s698 = scalar_lea.vmem [#allocation18], %s697
          %s700 = ssub.s32 256, 256
          %701 = vsyncadd %s695, %s700
          %s702 = smul.addr %s25, 4
          %s703 = smul.addr %s702, 64
          %s704 = scalar_lea.hbm %s14, %s703
          %s705 = sshll.u32 %s698, 4
          %s706 = int_to_ptr.vmem [resolvable:$true] %s705
          %711 = dma.hbm_to_vmem [thread:$0]  %s704, 256, %s706, %s695, 64, 64, 4
        $region76: #{cablock_forward.1} parent=23 // pred_fallthru
          _
        // Predicated region
        $region77: #{cablock_forward.1} parent=23 // pred_check
          %p712 = pneg %p425
        $region78: #{cablock_forward.1} parent=23 // pred_check_branch
          %714 = sbr.rel (%p712) target = $region80
        $region79: #{cablock_forward.1} parent=23 // pred_region
          %s715 = sand.u32 %s25, 1
          %s716 = scalar_lea.sflag [#allocation4], %s715
          %s717 = sand.u32 %s415, 1
          %s718 = scalar_lea.vmem [#allocation19], %s717
          %s720 = ssub.s32 16, 16
          %721 = vsyncadd %s716, %s720
          %s722 = smul.addr %s25, 16
          %s723 = scalar_lea.hbm %s15, %s722
          %s725 = sshll.u32 %s718, 4
          %s726 = int_to_ptr.vmem [resolvable:$true] %s725
          %728 = dma.hbm_to_vmem [thread:$0]  %s723, 16, %s726, %s716
        $region80: #{cablock_forward.1} parent=23 // pred_fallthru
          _
      $region24: #{cablock_forward.1} parent=5 // pred_fallthru
        _
      %p729 = scmp.le.s32.totalorder 1, %s25
      %p730 = scmp.lt.s32.totalorder %s25, 3
      %p731 = pnand %p729, %p730
      %p732 = pneg %p731
      // Predicated region
      $region81: #{cablock_forward.1} parent=5 // pred_check
        _
      $region82: #{cablock_forward.1} parent=5 // pred_check_branch
        %734 = sbr.rel (%p731) target = $region84
      $region83: #{cablock_forward.1} parent=5 // pred_region
        %s735 = ssub.s32 %s25, 1
        // Predicated region
        $region85: #{cablock_forward.1} parent=83 // pred_check
          %p736 = pneg %p46
        $region86: #{cablock_forward.1} parent=83 // pred_check_branch
          %738 = sbr.rel (%p736) target = $region88
        $region87: #{cablock_forward.1} parent=83 // pred_region
          %739 = dma.done [#allocation4], 2048
        $region88: #{cablock_forward.1} parent=83 // pred_fallthru
          _
        // Predicated region
        $region89: #{cablock_forward.1} parent=83 // pred_check
          %p740 = pneg %p67
        $region90: #{cablock_forward.1} parent=83 // pred_check_branch
          %742 = sbr.rel (%p740) target = $region92
        $region91: #{cablock_forward.1} parent=83 // pred_region
          %743 = dma.done [#allocation7], 256
        $region92: #{cablock_forward.1} parent=83 // pred_fallthru
          _
        %s744 = sand.u32 %s30, 1
        %s745 = scalar_lea.sflag [#allocation4], %s744
        %s746 = sand.u32 %s80, 1
        %s747 = scalar_lea.vmem [#allocation8], %s746
        // Predicated region
        $region93: #{cablock_forward.1} parent=83 // pred_check
          %p748 = pneg %p93
        $region94: #{cablock_forward.1} parent=83 // pred_check_branch
          %750 = sbr.rel (%p748) target = $region96
        $region95: #{cablock_forward.1} parent=83 // pred_region
          %751 = dma.done %s745, 16
        $region96: #{cablock_forward.1} parent=83 // pred_fallthru
          _
        %s752 = sand.u32 %s30, 1
        %s753 = scalar_lea.sflag [#allocation4], %s752
        %s754 = sand.u32 %s106, 1
        %s755 = scalar_lea.vmem [#allocation9], %s754
        // Predicated region
        $region97: #{cablock_forward.1} parent=83 // pred_check
          %p756 = pneg %p119
        $region98: #{cablock_forward.1} parent=83 // pred_check_branch
          %758 = sbr.rel (%p756) target = $region100
        $region99: #{cablock_forward.1} parent=83 // pred_region
          %759 = dma.done %s753, 16
        $region100: #{cablock_forward.1} parent=83 // pred_fallthru
          _
        %s760 = sand.u32 %s30, 1
        %s761 = scalar_lea.sflag [#allocation4], %s760
        %s762 = sand.u32 %s158, 1
        %s763 = scalar_lea.vmem [#allocation10], %s762
        // Predicated region
        $region101: #{cablock_forward.1} parent=83 // pred_check
          %p764 = pneg %p171
        $region102: #{cablock_forward.1} parent=83 // pred_check_branch
          %766 = sbr.rel (%p764) target = $region104
        $region103: #{cablock_forward.1} parent=83 // pred_region
          %767 = dma.done %s761, 16
        $region104: #{cablock_forward.1} parent=83 // pred_fallthru
          _
        %s768 = sand.u32 %s30, 1
        %s769 = scalar_lea.sflag [#allocation4], %s768
        %s770 = sand.u32 %s184, 1
        %s771 = smul.addr %s770, 8
        %s772 = scalar_lea.vmem [#allocation11], %s771
        // Predicated region
        $region105: #{cablock_forward.1} parent=83 // pred_check
          %p773 = pneg %p197
        $region106: #{cablock_forward.1} parent=83 // pred_check_branch
          %775 = sbr.rel (%p773) target = $region108
        $region107: #{cablock_forward.1} parent=83 // pred_region
          %776 = dma.done %s769, 128
        $region108: #{cablock_forward.1} parent=83 // pred_fallthru
          _
        %s777 = sand.u32 %s30, 1
        %s778 = scalar_lea.sflag [#allocation4], %s777
        %s779 = sand.u32 %s210, 1
        %s780 = scalar_lea.vmem [#allocation12], %s779
        // Predicated region
        $region109: #{cablock_forward.1} parent=83 // pred_check
          %p781 = pneg %p223
        $region110: #{cablock_forward.1} parent=83 // pred_check_branch
          %783 = sbr.rel (%p781) target = $region112
        $region111: #{cablock_forward.1} parent=83 // pred_region
          %784 = dma.done %s778, 16
        $region112: #{cablock_forward.1} parent=83 // pred_fallthru
          _
        %s785 = sand.u32 %s30, 1
        %s786 = scalar_lea.sflag [#allocation4], %s785
        %s787 = sand.u32 %s262, 1
        %s788 = scalar_lea.vmem [#allocation13], %s787
        // Predicated region
        $region113: #{cablock_forward.1} parent=83 // pred_check
          %p789 = pneg %p275
        $region114: #{cablock_forward.1} parent=83 // pred_check_branch
          %791 = sbr.rel (%p789) target = $region116
        $region115: #{cablock_forward.1} parent=83 // pred_region
          %792 = dma.done %s786, 16
        $region116: #{cablock_forward.1} parent=83 // pred_fallthru
          _
        %s793 = sand.u32 %s30, 1
        %s794 = scalar_lea.sflag [#allocation4], %s793
        %s795 = sand.u32 %s288, 1
        %s796 = scalar_lea.vmem [#allocation14], %s795
        // Predicated region
        $region117: #{cablock_forward.1} parent=83 // pred_check
          %p797 = pneg %p301
        $region118: #{cablock_forward.1} parent=83 // pred_check_branch
          %799 = sbr.rel (%p797) target = $region120
        $region119: #{cablock_forward.1} parent=83 // pred_region
          %800 = dma.done %s794, 16
        $region120: #{cablock_forward.1} parent=83 // pred_fallthru
          _
        %s801 = sand.u32 %s30, 1
        %s802 = scalar_lea.sflag [#allocation4], %s801
        %s803 = sand.u32 %s314, 1
        %s804 = scalar_lea.vmem [#allocation15], %s803
        // Predicated region
        $region121: #{cablock_forward.1} parent=83 // pred_check
          %p805 = pneg %p327
        $region122: #{cablock_forward.1} parent=83 // pred_check_branch
          %807 = sbr.rel (%p805) target = $region124
        $region123: #{cablock_forward.1} parent=83 // pred_region
          %808 = dma.done %s802, 16
        $region124: #{cablock_forward.1} parent=83 // pred_fallthru
          _
        %s809 = sand.u32 %s30, 1
        %s810 = scalar_lea.sflag [#allocation4], %s809
        %s811 = sand.u32 %s340, 1
        %s812 = smul.addr %s811, 16
        %s813 = scalar_lea.vmem [#allocation16], %s812
        // Predicated region
        $region125: #{cablock_forward.1} parent=83 // pred_check
          %p814 = pneg %p353
        $region126: #{cablock_forward.1} parent=83 // pred_check_branch
          %816 = sbr.rel (%p814) target = $region128
        $region127: #{cablock_forward.1} parent=83 // pred_region
          %817 = dma.done %s810, 256
        $region128: #{cablock_forward.1} parent=83 // pred_fallthru
          _
        %s818 = sand.u32 %s30, 1
        %s819 = scalar_lea.sflag [#allocation4], %s818
        %s820 = sand.u32 %s366, 1
        %s821 = scalar_lea.vmem [#allocation17], %s820
        // Predicated region
        $region129: #{cablock_forward.1} parent=83 // pred_check
          %p822 = pneg %p379
        $region130: #{cablock_forward.1} parent=83 // pred_check_branch
          %824 = sbr.rel (%p822) target = $region132
        $region131: #{cablock_forward.1} parent=83 // pred_region
          %825 = dma.done %s819, 16
        $region132: #{cablock_forward.1} parent=83 // pred_fallthru
          _
        %s826 = sand.u32 %s30, 1
        %s827 = scalar_lea.sflag [#allocation4], %s826
        %s828 = sand.u32 %s392, 1
        %s829 = smul.addr %s828, 16
        %s830 = scalar_lea.vmem [#allocation18], %s829
        // Predicated region
        $region133: #{cablock_forward.1} parent=83 // pred_check
          %p831 = pneg %p405
        $region134: #{cablock_forward.1} parent=83 // pred_check_branch
          %833 = sbr.rel (%p831) target = $region136
        $region135: #{cablock_forward.1} parent=83 // pred_region
          %834 = dma.done %s827, 256
        $region136: #{cablock_forward.1} parent=83 // pred_fallthru
          _
        %s835 = sand.u32 %s30, 1
        %s836 = scalar_lea.sflag [#allocation4], %s835
        %s837 = sand.u32 %s418, 1
        %s838 = scalar_lea.vmem [#allocation19], %s837
        // Predicated region
        $region137: #{cablock_forward.1} parent=83 // pred_check
          %p839 = pneg %p431
        $region138: #{cablock_forward.1} parent=83 // pred_check_branch
          %841 = sbr.rel (%p839) target = $region140
        $region139: #{cablock_forward.1} parent=83 // pred_region
          %842 = dma.done %s836, 16
        $region140: #{cablock_forward.1} parent=83 // pred_fallthru
          _
        %p843 = pneg %p46
        %p844 = pneg %p43
        %p845 = pneg %p67
        %p846 = pneg %p64
        %s847 = sand.u32 %s30, 1
        %s848 = scalar_lea.sflag [#allocation4], %s847
        %s849 = sand.u32 %s80, 1
        %s850 = scalar_lea.vmem [#allocation8], %s849
        %p851 = pneg %p93
        %p852 = pneg %p90
        %s853 = sand.u32 %s30, 1
        %s854 = scalar_lea.sflag [#allocation4], %s853
        %s855 = sand.u32 %s106, 1
        %s856 = scalar_lea.vmem [#allocation9], %s855
        %p857 = pneg %p119
        %p858 = pneg %p116
        %p859 = scmp.lt.s32.totalorder %s30, 1
        %s860 = scalar_select %p859, %s30, 1
        %s861 = smul.addr %s860, 4
        %s862 = smul.addr %s861, 4
        %s863 = scalar_lea.vmem %s4, %s862
        %p864 = pneg %p145
        %p865 = pneg %p142
        %s866 = sand.u32 %s30, 1
        %s867 = scalar_lea.sflag [#allocation4], %s866
        %s868 = sand.u32 %s158, 1
        %s869 = scalar_lea.vmem [#allocation10], %s868
        %p870 = pneg %p171
        %p871 = pneg %p168
        %s872 = sand.u32 %s30, 1
        %s873 = scalar_lea.sflag [#allocation4], %s872
        %s874 = sand.u32 %s184, 1
        %s875 = smul.addr %s874, 8
        %s876 = scalar_lea.vmem [#allocation11], %s875
        %p877 = pneg %p197
        %p878 = pneg %p194
        %s879 = sand.u32 %s30, 1
        %s880 = scalar_lea.sflag [#allocation4], %s879
        %s881 = sand.u32 %s210, 1
        %s882 = scalar_lea.vmem [#allocation12], %s881
        %p883 = pneg %p223
        %p884 = pneg %p220
        %p885 = scmp.lt.s32.totalorder %s30, 1
        %s886 = scalar_select %p885, %s30, 1
        %s887 = smul.addr %s886, 4
        %s888 = smul.addr %s887, 4
        %s889 = scalar_lea.vmem %s8, %s888
        %p890 = pneg %p249
        %p891 = pneg %p246
        %s892 = sand.u32 %s30, 1
        %s893 = scalar_lea.sflag [#allocation4], %s892
        %s894 = sand.u32 %s262, 1
        %s895 = scalar_lea.vmem [#allocation13], %s894
        %p896 = pneg %p275
        %p897 = pneg %p272
        %s898 = sand.u32 %s30, 1
        %s899 = scalar_lea.sflag [#allocation4], %s898
        %s900 = sand.u32 %s288, 1
        %s901 = scalar_lea.vmem [#allocation14], %s900
        %p902 = pneg %p301
        %p903 = pneg %p298
        %s904 = sand.u32 %s30, 1
        %s905 = scalar_lea.sflag [#allocation4], %s904
        %s906 = sand.u32 %s314, 1
        %s907 = scalar_lea.vmem [#allocation15], %s906
        %p908 = pneg %p327
        %p909 = pneg %p324
        %s910 = sand.u32 %s30, 1
        %s911 = scalar_lea.sflag [#allocation4], %s910
        %s912 = sand.u32 %s340, 1
        %s913 = smul.addr %s912, 16
        %s914 = scalar_lea.vmem [#allocation16], %s913
        %p915 = pneg %p353
        %p916 = pneg %p350
        %s917 = sand.u32 %s30, 1
        %s918 = scalar_lea.sflag [#allocation4], %s917
        %s919 = sand.u32 %s366, 1
        %s920 = scalar_lea.vmem [#allocation17], %s919
        %p921 = pneg %p379
        %p922 = pneg %p376
        %s923 = sand.u32 %s30, 1
        %s924 = scalar_lea.sflag [#allocation4], %s923
        %s925 = sand.u32 %s392, 1
        %s926 = smul.addr %s925, 16
        %s927 = scalar_lea.vmem [#allocation18], %s926
        %p928 = pneg %p405
        %p929 = pneg %p402
        %s930 = sand.u32 %s30, 1
        %s931 = scalar_lea.sflag [#allocation4], %s930
        %s932 = sand.u32 %s418, 1
        %s933 = scalar_lea.vmem [#allocation19], %s932
        %p934 = pneg %p431
        %p935 = pneg %p428
        %p936 = pneg %p452
        %p937 = pneg %p449
        %p938 = scmp.lt.s32.totalorder %s30, 1
        %s939 = scalar_select %p938, %s30, 1
        %s940 = smul.addr %s939, 4
        %s941 = smul.addr %s940, 4
        %s942 = scalar_lea.vmem %s4, %s941
        %p943 = scmp.lt.s32.totalorder %s30, 1
        %s944 = scalar_select %p943, %s30, 1
        %s945 = smul.addr %s944, 4
        %s946 = smul.addr %s945, 4
        %s947 = scalar_lea.vmem %s8, %s946
        %p949 = scmp.eq.s32.totalorder %s30, 0
        // Predicated region
        $region141: #{cablock_forward.1} parent=83 // pred_check
          %p950 = pneg %p949
        $region142: #{cablock_forward.1} parent=83 // pred_check_branch
          %952 = sbr.rel (%p950) target = $region144
        $region143: #{cablock_forward.1} parent=83 // pred_region
          %v953 = vld [vmem:[#allocation3] sm:$0xff]
          %v954 = vld [vmem:[#allocation3 + $0x8] sm:$0xff]
          %v955 = vld [vmem:[#allocation3 + $0x10] sm:$0xff]
          %v956 = vld [vmem:[#allocation3 + $0x18] sm:$0xff]
          %v957 = vld [vmem:[#allocation3 + $0x20] sm:$0xff]
          %v958 = vld [vmem:[#allocation3 + $0x28] sm:$0xff]
          %v959 = vld [vmem:[#allocation3 + $0x30] sm:$0xff]
          %v960 = vld [vmem:[#allocation3 + $0x38] sm:$0xff]
          %v961 = vld [vmem:[#allocation3 + $0x40] sm:$0xff]
          %v962 = vld [vmem:[#allocation3 + $0x48] sm:$0xff]
          %v963 = vld [vmem:[#allocation3 + $0x50] sm:$0xff]
          %v964 = vld [vmem:[#allocation3 + $0x58] sm:$0xff]
          %v965 = vld [vmem:[#allocation3 + $0x60] sm:$0xff]
          %v966 = vld [vmem:[#allocation3 + $0x68] sm:$0xff]
          %v967 = vld [vmem:[#allocation3 + $0x70] sm:$0xff]
          %v968 = vld [vmem:[#allocation3 + $0x78] sm:$0xff]
          %vm969 = vcmask 261120
          %970 = vst.msk [vmem:[#allocation20] sm:$0xff] %vm969, %v953
          %971 = vst.msk [vmem:[#allocation20 + $0x8] sm:$0xff] %vm969, %v954
          %972 = vst.msk [vmem:[#allocation20 + $0x10] sm:$0xff] %vm969, %v955
          %973 = vst.msk [vmem:[#allocation20 + $0x18] sm:$0xff] %vm969, %v956
          %974 = vst.msk [vmem:[#allocation20 + $0x20] sm:$0xff] %vm969, %v957
          %975 = vst.msk [vmem:[#allocation20 + $0x28] sm:$0xff] %vm969, %v958
          %976 = vst.msk [vmem:[#allocation20 + $0x30] sm:$0xff] %vm969, %v959
          %977 = vst.msk [vmem:[#allocation20 + $0x38] sm:$0xff] %vm969, %v960
          %978 = vst.msk [vmem:[#allocation20 + $0x40] sm:$0xff] %vm969, %v961
          %979 = vst.msk [vmem:[#allocation20 + $0x48] sm:$0xff] %vm969, %v962
          %980 = vst.msk [vmem:[#allocation20 + $0x50] sm:$0xff] %vm969, %v963
          %981 = vst.msk [vmem:[#allocation20 + $0x58] sm:$0xff] %vm969, %v964
          %982 = vst.msk [vmem:[#allocation20 + $0x60] sm:$0xff] %vm969, %v965
          %983 = vst.msk [vmem:[#allocation20 + $0x68] sm:$0xff] %vm969, %v966
          %984 = vst.msk [vmem:[#allocation20 + $0x70] sm:$0xff] %vm969, %v967
          %985 = vst.msk [vmem:[#allocation20 + $0x78] sm:$0xff] %vm969, %v968
        $region144: #{cablock_forward.1} parent=83 // pred_fallthru
          _
        %v986 = vld [vmem:[#allocation20] sm:$0xff]
        %v987 = vld [vmem:[#allocation20 + $0x8] sm:$0xff]
        %v988 = vld [vmem:[#allocation20 + $0x10] sm:$0xff]
        %v989 = vld [vmem:[#allocation20 + $0x18] sm:$0xff]
        %v990 = vld [vmem:[#allocation20 + $0x20] sm:$0xff]
        %v991 = vld [vmem:[#allocation20 + $0x28] sm:$0xff]
        %v992 = vld [vmem:[#allocation20 + $0x30] sm:$0xff]
        %v993 = vld [vmem:[#allocation20 + $0x38] sm:$0xff]
        %v994 = vld [vmem:[#allocation20 + $0x40] sm:$0xff]
        %v995 = vld [vmem:[#allocation20 + $0x48] sm:$0xff]
        %v996 = vld [vmem:[#allocation20 + $0x50] sm:$0xff]
        %v997 = vld [vmem:[#allocation20 + $0x58] sm:$0xff]
        %v998 = vld [vmem:[#allocation20 + $0x60] sm:$0xff]
        %v999 = vld [vmem:[#allocation20 + $0x68] sm:$0xff]
        %v1000 = vld [vmem:[#allocation20 + $0x70] sm:$0xff]
        %v1001 = vld [vmem:[#allocation20 + $0x78] sm:$0xff]
        %v1002 = vld [vmem:[#allocation6] sm:$0xff]
        %v1003 = vld [vmem:[#allocation6 + $0x8] sm:$0xff]
        %v1004 = vld [vmem:[%s747] sm:$0x1]
        %v1005 = vld [vmem:[%s755] sm:$0x1]
        %vm1006 = vcmask 261120
        %v1007 = vsel %vm1006, %v986, 0.0
        %1008 = vadd.xlane.f32.xlu0 %v1007
        %v1009 = vpop.xlane.xlu0 %1008
        %v1010 = vsel %vm1006, %v987, 0.0
        %1011 = vadd.xlane.f32.xlu0 %v1010
        %v1012 = vpop.xlane.xlu0 %1011
        %v1013 = vsel %vm1006, %v988, 0.0
        %1014 = vadd.xlane.f32.xlu0 %v1013
        %v1015 = vpop.xlane.xlu0 %1014
        %v1016 = vsel %vm1006, %v989, 0.0
        %1017 = vadd.xlane.f32.xlu0 %v1016
        %v1018 = vpop.xlane.xlu0 %1017
        %v1019 = vsel %vm1006, %v990, 0.0
        %1020 = vadd.xlane.f32.xlu0 %v1019
        %v1021 = vpop.xlane.xlu0 %1020
        %v1022 = vsel %vm1006, %v991, 0.0
        %1023 = vadd.xlane.f32.xlu0 %v1022
        %v1024 = vpop.xlane.xlu0 %1023
        %v1025 = vsel %vm1006, %v992, 0.0
        %1026 = vadd.xlane.f32.xlu0 %v1025
        %v1027 = vpop.xlane.xlu0 %1026
        %v1028 = vsel %vm1006, %v993, 0.0
        %1029 = vadd.xlane.f32.xlu0 %v1028
        %v1030 = vpop.xlane.xlu0 %1029
        %v1031 = vsel %vm1006, %v994, 0.0
        %1032 = vadd.xlane.f32.xlu0 %v1031
        %v1033 = vpop.xlane.xlu0 %1032
        %v1034 = vsel %vm1006, %v995, 0.0
        %1035 = vadd.xlane.f32.xlu0 %v1034
        %v1036 = vpop.xlane.xlu0 %1035
        %v1037 = vsel %vm1006, %v996, 0.0
        %1038 = vadd.xlane.f32.xlu0 %v1037
        %v1039 = vpop.xlane.xlu0 %1038
        %v1040 = vsel %vm1006, %v997, 0.0
        %1041 = vadd.xlane.f32.xlu0 %v1040
        %v1042 = vpop.xlane.xlu0 %1041
        %v1043 = vsel %vm1006, %v998, 0.0
        %1044 = vadd.xlane.f32.xlu0 %v1043
        %v1045 = vpop.xlane.xlu0 %1044
        %v1046 = vsel %vm1006, %v999, 0.0
        %1047 = vadd.xlane.f32.xlu0 %v1046
        %v1048 = vpop.xlane.xlu0 %1047
        %v1049 = vsel %vm1006, %v1000, 0.0
        %1050 = vadd.xlane.f32.xlu0 %v1049
        %v1051 = vpop.xlane.xlu0 %1050
        %v1052 = vsel %vm1006, %v1001, 0.0
        %1053 = vadd.xlane.f32.xlu0 %v1052
        %v1054 = vpop.xlane.xlu0 %1053
        %v1055 = vrcp.pop 32.0
        %v1056 = vmul.f32 %v1009, %v1055
        %v1057 = vmul.f32 %v1012, %v1055
        %v1058 = vmul.f32 %v1015, %v1055
        %v1059 = vmul.f32 %v1018, %v1055
        %v1060 = vmul.f32 %v1021, %v1055
        %v1061 = vmul.f32 %v1024, %v1055
        %v1062 = vmul.f32 %v1027, %v1055
        %v1063 = vmul.f32 %v1030, %v1055
        %v1064 = vmul.f32 %v1033, %v1055
        %v1065 = vmul.f32 %v1036, %v1055
        %v1066 = vmul.f32 %v1039, %v1055
        %v1067 = vmul.f32 %v1042, %v1055
        %v1068 = vmul.f32 %v1045, %v1055
        %v1069 = vmul.f32 %v1048, %v1055
        %v1070 = vmul.f32 %v1051, %v1055
        %v1071 = vmul.f32 %v1054, %v1055
        %v1072 = vsub.f32 %v986, %v1056
        %v1073 = vsub.f32 %v987, %v1057
        %v1074 = vsub.f32 %v988, %v1058
        %v1075 = vsub.f32 %v989, %v1059
        %v1076 = vsub.f32 %v990, %v1060
        %v1077 = vsub.f32 %v991, %v1061
        %v1078 = vsub.f32 %v992, %v1062
        %v1079 = vsub.f32 %v993, %v1063
        %v1080 = vsub.f32 %v994, %v1064
        %v1081 = vsub.f32 %v995, %v1065
        %v1082 = vsub.f32 %v996, %v1066
        %v1083 = vsub.f32 %v997, %v1067
        %v1084 = vsub.f32 %v998, %v1068
        %v1085 = vsub.f32 %v999, %v1069
        %v1086 = vsub.f32 %v1000, %v1070
        %v1087 = vsub.f32 %v1001, %v1071
        %v1088 = vmul.f32 %v1072, %v1072
        %v1089 = vmul.f32 %v1073, %v1073
        %v1090 = vmul.f32 %v1074, %v1074
        %v1091 = vmul.f32 %v1075, %v1075
        %v1092 = vmul.f32 %v1076, %v1076
        %v1093 = vmul.f32 %v1077, %v1077
        %v1094 = vmul.f32 %v1078, %v1078
        %v1095 = vmul.f32 %v1079, %v1079
        %v1096 = vmul.f32 %v1080, %v1080
        %v1097 = vmul.f32 %v1081, %v1081
        %v1098 = vmul.f32 %v1082, %v1082
        %v1099 = vmul.f32 %v1083, %v1083
        %v1100 = vmul.f32 %v1084, %v1084
        %v1101 = vmul.f32 %v1085, %v1085
        %v1102 = vmul.f32 %v1086, %v1086
        %v1103 = vmul.f32 %v1087, %v1087
        %v1104 = vsel %vm1006, %v1088, 0.0
        %1105 = vadd.xlane.f32.xlu0 %v1104
        %v1106 = vpop.xlane.xlu0 %1105
        %v1107 = vsel %vm1006, %v1089, 0.0
        %1108 = vadd.xlane.f32.xlu0 %v1107
        %v1109 = vpop.xlane.xlu0 %1108
        %v1110 = vsel %vm1006, %v1090, 0.0
        %1111 = vadd.xlane.f32.xlu0 %v1110
        %v1112 = vpop.xlane.xlu0 %1111
        %v1113 = vsel %vm1006, %v1091, 0.0
        %1114 = vadd.xlane.f32.xlu0 %v1113
        %v1115 = vpop.xlane.xlu0 %1114
        %v1116 = vsel %vm1006, %v1092, 0.0
        %1117 = vadd.xlane.f32.xlu0 %v1116
        %v1118 = vpop.xlane.xlu0 %1117
        %v1119 = vsel %vm1006, %v1093, 0.0
        %1120 = vadd.xlane.f32.xlu0 %v1119
        %v1121 = vpop.xlane.xlu0 %1120
        %v1122 = vsel %vm1006, %v1094, 0.0
        %1123 = vadd.xlane.f32.xlu0 %v1122
        %v1124 = vpop.xlane.xlu0 %1123
        %v1125 = vsel %vm1006, %v1095, 0.0
        %1126 = vadd.xlane.f32.xlu0 %v1125
        %v1127 = vpop.xlane.xlu0 %1126
        %v1128 = vsel %vm1006, %v1096, 0.0
        %1129 = vadd.xlane.f32.xlu0 %v1128
        %v1130 = vpop.xlane.xlu0 %1129
        %v1131 = vsel %vm1006, %v1097, 0.0
        %1132 = vadd.xlane.f32.xlu0 %v1131
        %v1133 = vpop.xlane.xlu0 %1132
        %v1134 = vsel %vm1006, %v1098, 0.0
        %1135 = vadd.xlane.f32.xlu0 %v1134
        %v1136 = vpop.xlane.xlu0 %1135
        %v1137 = vsel %vm1006, %v1099, 0.0
        %1138 = vadd.xlane.f32.xlu0 %v1137
        %v1139 = vpop.xlane.xlu0 %1138
        %v1140 = vsel %vm1006, %v1100, 0.0
        %1141 = vadd.xlane.f32.xlu0 %v1140
        %v1142 = vpop.xlane.xlu0 %1141
        %v1143 = vsel %vm1006, %v1101, 0.0
        %1144 = vadd.xlane.f32.xlu0 %v1143
        %v1145 = vpop.xlane.xlu0 %1144
        %v1146 = vsel %vm1006, %v1102, 0.0
        %1147 = vadd.xlane.f32.xlu0 %v1146
        %v1148 = vpop.xlane.xlu0 %1147
        %v1149 = vsel %vm1006, %v1103, 0.0
        %1150 = vadd.xlane.f32.xlu0 %v1149
        %v1151 = vpop.xlane.xlu0 %1150
        %v1152 = vmul.f32 %v1106, %v1055
        %v1153 = vmul.f32 %v1109, %v1055
        %v1154 = vmul.f32 %v1112, %v1055
        %v1155 = vmul.f32 %v1115, %v1055
        %v1156 = vmul.f32 %v1118, %v1055
        %v1157 = vmul.f32 %v1121, %v1055
        %v1158 = vmul.f32 %v1124, %v1055
        %v1159 = vmul.f32 %v1127, %v1055
        %v1160 = vmul.f32 %v1130, %v1055
        %v1161 = vmul.f32 %v1133, %v1055
        %v1162 = vmul.f32 %v1136, %v1055
        %v1163 = vmul.f32 %v1139, %v1055
        %v1164 = vmul.f32 %v1142, %v1055
        %v1165 = vmul.f32 %v1145, %v1055
        %v1166 = vmul.f32 %v1148, %v1055
        %v1167 = vmul.f32 %v1151, %v1055
        %v1168 = vadd.f32 %v1152, 1e-05
        %v1169 = vadd.f32 %v1153, 1e-05
        %v1170 = vadd.f32 %v1154, 1e-05
        %v1171 = vadd.f32 %v1155, 1e-05
        %v1172 = vadd.f32 %v1156, 1e-05
        %v1173 = vadd.f32 %v1157, 1e-05
        %v1174 = vadd.f32 %v1158, 1e-05
        %v1175 = vadd.f32 %v1159, 1e-05
        %v1176 = vadd.f32 %v1160, 1e-05
        %v1177 = vadd.f32 %v1161, 1e-05
        %v1178 = vadd.f32 %v1162, 1e-05
        %v1179 = vadd.f32 %v1163, 1e-05
        %v1180 = vadd.f32 %v1164, 1e-05
        %v1181 = vadd.f32 %v1165, 1e-05
        %v1182 = vadd.f32 %v1166, 1e-05
        %v1183 = vadd.f32 %v1167, 1e-05
        %v1184 = vrsqrt.pop %v1168
        %v1185 = vrsqrt.pop %v1169
        %v1186 = vrsqrt.pop %v1170
        %v1187 = vrsqrt.pop %v1171
        %v1188 = vrsqrt.pop %v1172
        %v1189 = vrsqrt.pop %v1173
        %v1190 = vrsqrt.pop %v1174
        %v1191 = vrsqrt.pop %v1175
        %v1192 = vrsqrt.pop %v1176
        %v1193 = vrsqrt.pop %v1177
        %v1194 = vrsqrt.pop %v1178
        %v1195 = vrsqrt.pop %v1179
        %v1196 = vrsqrt.pop %v1180
        %v1197 = vrsqrt.pop %v1181
        %v1198 = vrsqrt.pop %v1182
        %v1199 = vrsqrt.pop %v1183
        %v1200 = vmul.f32 %v1072, %v1184
        %v1201 = vmul.f32 %v1073, %v1185
        %v1202 = vmul.f32 %v1074, %v1186
        %v1203 = vmul.f32 %v1075, %v1187
        %v1204 = vmul.f32 %v1076, %v1188
        %v1205 = vmul.f32 %v1077, %v1189
        %v1206 = vmul.f32 %v1078, %v1190
        %v1207 = vmul.f32 %v1079, %v1191
        %v1208 = vmul.f32 %v1080, %v1192
        %v1209 = vmul.f32 %v1081, %v1193
        %v1210 = vmul.f32 %v1082, %v1194
        %v1211 = vmul.f32 %v1083, %v1195
        %v1212 = vmul.f32 %v1084, %v1196
        %v1213 = vmul.f32 %v1085, %v1197
        %v1214 = vmul.f32 %v1086, %v1198
        %v1215 = vmul.f32 %v1087, %v1199
        %v1217 = vlaneseq
        %v1218 = vshrl.u32 %v1217, 7
        %v1219 = vsub.s32 0, %v1218
        %v1220 = vrot.slane %v1004, %v1219
        %v1222 = vmul.f32 %v1200, %v1220
        %v1223 = vmul.f32 %v1201, %v1220
        %v1224 = vmul.f32 %v1202, %v1220
        %v1225 = vmul.f32 %v1203, %v1220
        %v1226 = vmul.f32 %v1204, %v1220
        %v1227 = vmul.f32 %v1205, %v1220
        %v1228 = vmul.f32 %v1206, %v1220
        %v1229 = vmul.f32 %v1207, %v1220
        %v1230 = vmul.f32 %v1208, %v1220
        %v1231 = vmul.f32 %v1209, %v1220
        %v1232 = vmul.f32 %v1210, %v1220
        %v1233 = vmul.f32 %v1211, %v1220
        %v1234 = vmul.f32 %v1212, %v1220
        %v1235 = vmul.f32 %v1213, %v1220
        %v1236 = vmul.f32 %v1214, %v1220
        %v1237 = vmul.f32 %v1215, %v1220
        %v1239 = vlaneseq
        %v1240 = vshrl.u32 %v1239, 7
        %v1241 = vsub.s32 0, %v1240
        %v1242 = vrot.slane %v1005, %v1241
        %v1244 = vadd.f32 %v1222, %v1242
        %v1245 = vadd.f32 %v1223, %v1242
        %v1246 = vadd.f32 %v1224, %v1242
        %v1247 = vadd.f32 %v1225, %v1242
        %v1248 = vadd.f32 %v1226, %v1242
        %v1249 = vadd.f32 %v1227, %v1242
        %v1250 = vadd.f32 %v1228, %v1242
        %v1251 = vadd.f32 %v1229, %v1242
        %v1252 = vadd.f32 %v1230, %v1242
        %v1253 = vadd.f32 %v1231, %v1242
        %v1254 = vadd.f32 %v1232, %v1242
        %v1255 = vadd.f32 %v1233, %v1242
        %v1256 = vadd.f32 %v1234, %v1242
        %v1257 = vadd.f32 %v1235, %v1242
        %v1258 = vadd.f32 %v1236, %v1242
        %v1259 = vadd.f32 %v1237, %v1242
        %v1260 = vpack.c.bf16 %v1245, %v1244
        %v1261 = vpack.c.bf16 %v1247, %v1246
        %v1262 = vpack.c.bf16 %v1249, %v1248
        %v1263 = vpack.c.bf16 %v1251, %v1250
        %v1264 = vpack.c.bf16 %v1253, %v1252
        %v1265 = vpack.c.bf16 %v1255, %v1254
        %v1266 = vpack.c.bf16 %v1257, %v1256
        %v1267 = vpack.c.bf16 %v1259, %v1258
        %v1268 = vld [vmem:[%s942] sm:$0xf]
        %v1269 = vld [vmem:[%s942 + $0x4] sm:$0xf]
        %v1270 = vld [vmem:[%s942 + $0x8] sm:$0xf]
        %v1271 = vld [vmem:[%s942 + $0xc] sm:$0xf]
        %v1272 = vld [vmem:[%s763] sm:$0x1]
        %v1274 = vlaneseq
        %v1275 = vshrl.u32 %v1274, 7
        %v1276 = vsub.s32 0, %v1275
        %v1277 = vrot.slane %v1272, %v1276
        %v1283 = vunpack.c.l.b16 %v1268
        %v1284 = vunpack.c.l.b16 %v1269
        %v1285 = vunpack.c.l.b16 %v1270
        %v1286 = vunpack.c.l.b16 %v1271
        %v1287 = vpack.c.b16 %v1284, %v1283
        %v1288 = vpack.c.b16 %v1286, %v1285
        %v1292 = vsel %vm1006, %v1260, 0
        %v1295 = vsel %vm1006, %v1261, 0
        %v1298 = vsel %vm1006, %v1262, 0
        %v1301 = vsel %vm1006, %v1263, 0
        %v1304 = vsel %vm1006, %v1264, 0
        %v1307 = vsel %vm1006, %v1265, 0
        %v1310 = vsel %vm1006, %v1266, 0
        %v1313 = vsel %vm1006, %v1267, 0
        %1315 = vmatprep.subr.bf16.mxu0 0
        %1316 = vmatpush1.bf16.msra.mxu0 %v1287
        %1317 = vmatprep.subr.bf16.mxu0 0
        %1318 = vmatpush1.bf16.msra.mxu0 %v1288
        %1319 = vmatprep.subr.bf16.mxu0 0
        %1320 = vmatpush1.bf16.msra.mxu0 0
        %1321 = vmatprep.subr.bf16.mxu0 0
        %1322 = vmatpush1.bf16.msra.mxu0 0
        %1323 = vmatprep.subr.bf16.mxu0 0
        %1324 = vmatpush1.bf16.msra.mxu0 0
        %1325 = vmatprep.subr.bf16.mxu0 0
        %1326 = vmatpush1.bf16.msra.mxu0 0
        %1327 = vmatprep.subr.bf16.mxu0 0
        %1328 = vmatpush1.bf16.msra.mxu0 0
        %1329 = vmatprep.subr.bf16.mxu0 0
        %1330 = vmatpush1.bf16.msra.mxu0 0
        %1331 = vmatprep.subr.bf16.mxu0 0
        %1332 = vmatpush1.bf16.msra.mxu0 0
        %1333 = vmatprep.subr.bf16.mxu0 0
        %1334 = vmatpush1.bf16.msra.mxu0 0
        %1335 = vmatprep.subr.bf16.mxu0 0
        %1336 = vmatpush1.bf16.msra.mxu0 0
        %1337 = vmatprep.subr.bf16.mxu0 0
        %1338 = vmatpush1.bf16.msra.mxu0 0
        %1339 = vmatprep.subr.bf16.mxu0 0
        %1340 = vmatpush1.bf16.msra.mxu0 0
        %1341 = vmatprep.subr.bf16.mxu0 0
        %1342 = vmatpush1.bf16.msra.mxu0 0
        %1343 = vmatprep.subr.bf16.mxu0 0
        %1344 = vmatpush1.bf16.msra.mxu0 0
        %1345 = vmatprep.subr.bf16.mxu0 0
        %1346 = vmatpush1.bf16.msra.mxu0 0
        %1347 = vmatprep.mubr.bf16.mxu0 0
        %1348 = vmatmul.mubr.bf16.gmra.mrb[0].mxu0 %v1292
        %v1349 = vpop.f32.mrb[0].mxu0
        %v1350 = vadd.f32 %v1277, %v1349
        %v1351 = vpop.f32.mrb[0].mxu0
        %v1352 = vpop.f32.mrb[0].mxu0
        %v1353 = vadd.f32 %v1277, %v1352
        %v1354 = vpop.f32.mrb[0].mxu0
        %1355 = vmatprep.mubr.bf16.mxu0 0
        %1356 = vmatmul.mubr.bf16.gmra.mrb[0].mxu0 %v1295
        %v1357 = vpop.f32.mrb[0].mxu0
        %v1358 = vadd.f32 %v1277, %v1357
        %v1359 = vpop.f32.mrb[0].mxu0
        %v1360 = vpop.f32.mrb[0].mxu0
        %v1361 = vadd.f32 %v1277, %v1360
        %v1362 = vpop.f32.mrb[0].mxu0
        %1363 = vmatprep.mubr.bf16.mxu0 0
        %1364 = vmatmul.mubr.bf16.gmra.mrb[0].mxu0 %v1298
        %v1365 = vpop.f32.mrb[0].mxu0
        %v1366 = vadd.f32 %v1277, %v1365
        %v1367 = vpop.f32.mrb[0].mxu0
        %v1368 = vpop.f32.mrb[0].mxu0
        %v1369 = vadd.f32 %v1277, %v1368
        %v1370 = vpop.f32.mrb[0].mxu0
        %1371 = vmatprep.mubr.bf16.mxu0 0
        %1372 = vmatmul.mubr.bf16.gmra.mrb[0].mxu0 %v1301
        %v1373 = vpop.f32.mrb[0].mxu0
        %v1374 = vadd.f32 %v1277, %v1373
        %v1375 = vpop.f32.mrb[0].mxu0
        %v1376 = vpop.f32.mrb[0].mxu0
        %v1377 = vadd.f32 %v1277, %v1376
        %v1378 = vpop.f32.mrb[0].mxu0
        %1379 = vmatprep.mubr.bf16.mxu0 0
        %1380 = vmatmul.mubr.bf16.gmra.mrb[0].mxu0 %v1304
        %v1381 = vpop.f32.mrb[0].mxu0
        %v1382 = vadd.f32 %v1277, %v1381
        %v1383 = vpop.f32.mrb[0].mxu0
        %v1384 = vpop.f32.mrb[0].mxu0
        %v1385 = vadd.f32 %v1277, %v1384
        %v1386 = vpop.f32.mrb[0].mxu0
        %1387 = vmatprep.mubr.bf16.mxu0 0
        %1388 = vmatmul.mubr.bf16.gmra.mrb[0].mxu0 %v1307
        %v1389 = vpop.f32.mrb[0].mxu0
        %v1390 = vadd.f32 %v1277, %v1389
        %v1391 = vpop.f32.mrb[0].mxu0
        %v1392 = vpop.f32.mrb[0].mxu0
        %v1393 = vadd.f32 %v1277, %v1392
        %v1394 = vpop.f32.mrb[0].mxu0
        %1395 = vmatprep.mubr.bf16.mxu0 0
        %1396 = vmatmul.mubr.bf16.gmra.mrb[0].mxu0 %v1310
        %v1397 = vpop.f32.mrb[0].mxu0
        %v1398 = vadd.f32 %v1277, %v1397
        %v1399 = vpop.f32.mrb[0].mxu0
        %v1400 = vpop.f32.mrb[0].mxu0
        %v1401 = vadd.f32 %v1277, %v1400
        %v1402 = vpop.f32.mrb[0].mxu0
        %1403 = vmatprep.mubr.bf16.mxu0 0
        %1404 = vmatmul.mubr.bf16.gmra.mrb[0].mxu0 %v1313
        %v1405 = vpop.f32.mrb[0].mxu0
        %v1406 = vadd.f32 %v1277, %v1405
        %v1407 = vpop.f32.mrb[0].mxu0
        %v1408 = vpop.f32.mrb[0].mxu0
        %v1409 = vadd.f32 %v1277, %v1408
        %v1410 = vpop.f32.mrb[0].mxu0
        %1411 = vdwg.mxu0
        %v1412 = vpack.c.bf16 %v1003, %v1002
        %v1413 = vld [vmem:[%s772] sm:$0xf]
        %v1414 = vld [vmem:[%s772 + $0x4] sm:$0xf]
        %v1415 = vld [vmem:[%s780] sm:$0x1]
        %v1417 = vlaneseq
        %v1418 = vshrl.u32 %v1417, 7
        %v1419 = vsub.s32 0, %v1418
        %v1420 = vrot.slane %v1415, %v1419
        %v1424 = vunpack.c.l.b16 %v1413
        %v1425 = vunpack.c.l.b16 %v1414
        %v1426 = vpack.c.b16 %v1425, %v1424
        %vm1428 = vcmask 130048
        %v1430 = vsel %vm1428, %v1412, 0
        %1432 = vmatprep.subr.bf16.mxu0 0
        %1433 = vmatpush1.bf16.msra.mxu0 %v1426
        %1434 = vmatprep.subr.bf16.mxu0 0
        %1435 = vmatpush1.bf16.msra.mxu0 0
        %1436 = vmatprep.subr.bf16.mxu0 0
        %1437 = vmatpush1.bf16.msra.mxu0 0
        %1438 = vmatprep.subr.bf16.mxu0 0
        %1439 = vmatpush1.bf16.msra.mxu0 0
        %1440 = vmatprep.subr.bf16.mxu0 0
        %1441 = vmatpush1.bf16.msra.mxu0 0
        %1442 = vmatprep.subr.bf16.mxu0 0
        %1443 = vmatpush1.bf16.msra.mxu0 0
        %1444 = vmatprep.subr.bf16.mxu0 0
        %1445 = vmatpush1.bf16.msra.mxu0 0
        %1446 = vmatprep.subr.bf16.mxu0 0
        %1447 = vmatpush1.bf16.msra.mxu0 0
        %1448 = vmatprep.subr.bf16.mxu0 0
        %1449 = vmatpush1.bf16.msra.mxu0 0
        %1450 = vmatprep.subr.bf16.mxu0 0
        %1451 = vmatpush1.bf16.msra.mxu0 0
        %1452 = vmatprep.subr.bf16.mxu0 0
        %1453 = vmatpush1.bf16.msra.mxu0 0
        %1454 = vmatprep.subr.bf16.mxu0 0
        %1455 = vmatpush1.bf16.msra.mxu0 0
        %1456 = vmatprep.subr.bf16.mxu0 0
        %1457 = vmatpush1.bf16.msra.mxu0 0
        %1458 = vmatprep.subr.bf16.mxu0 0
        %1459 = vmatpush1.bf16.msra.mxu0 0
        %1460 = vmatprep.subr.bf16.mxu0 0
        %1461 = vmatpush1.bf16.msra.mxu0 0
        %1462 = vmatprep.subr.bf16.mxu0 0
        %1463 = vmatpush1.bf16.msra.mxu0 0
        %1464 = vmatprep.mubr.bf16.mxu0 0
        %1465 = vmatmul.mubr.bf16.gmra.mrb[0].mxu0 %v1430
        %v1466 = vpop.f32.mrb[0].mxu0
        %v1467 = vadd.f32 %v1420, %v1466
        %v1468 = vpop.f32.mrb[0].mxu0
        %v1469 = vpop.f32.mrb[0].mxu0
        %v1470 = vadd.f32 %v1420, %v1469
        %v1471 = vpop.f32.mrb[0].mxu0
        %1472 = vdwg.mxu0
        %v1473 = vpack.c.bf16 %v1353, %v1350
        %v1474 = vpack.c.bf16 %v1361, %v1358
        %v1475 = vpack.c.bf16 %v1369, %v1366
        %v1476 = vpack.c.bf16 %v1377, %v1374
        %v1477 = vpack.c.bf16 %v1385, %v1382
        %v1478 = vpack.c.bf16 %v1393, %v1390
        %v1479 = vpack.c.bf16 %v1401, %v1398
        %v1480 = vpack.c.bf16 %v1409, %v1406
        %v1481 = vpack.c.bf16 %v1470, %v1467
        %vm1482 = vcmask 64512
        %v1484 = vsel %vm1482, %v1473, 0
        %v1487 = vsel %vm1482, %v1474, 0
        %v1490 = vsel %vm1482, %v1475, 0
        %v1493 = vsel %vm1482, %v1476, 0
        %v1496 = vsel %vm1482, %v1481, 0
        %1498 = vmatprep.subr.bf16.mxu0 0
        %1499 = vmatpush1.bf16.xpose.msra.mxu0 %v1496
        %1500 = vmatprep.subr.bf16.mxu0 0
        %1501 = vmatpush1.bf16.xpose.msra.mxu0 0
        %1502 = vmatprep.subr.bf16.mxu0 0
        %1503 = vmatpush1.bf16.xpose.msra.mxu0 0
        %1504 = vmatprep.subr.bf16.mxu0 0
        %1505 = vmatpush1.bf16.xpose.msra.mxu0 0
        %1506 = vmatprep.subr.bf16.mxu0 0
        %1507 = vmatpush1.bf16.xpose.msra.mxu0 0
        %1508 = vmatprep.subr.bf16.mxu0 0
        %1509 = vmatpush1.bf16.xpose.msra.mxu0 0
        %1510 = vmatprep.subr.bf16.mxu0 0
        %1511 = vmatpush1.bf16.xpose.msra.mxu0 0
        %1512 = vmatprep.subr.bf16.mxu0 0
        %1513 = vmatpush1.bf16.xpose.msra.mxu0 0
        %1514 = vmatprep.subr.bf16.mxu0 0
        %1515 = vmatpush1.bf16.xpose.msra.mxu0 0
        %1516 = vmatprep.subr.bf16.mxu0 0
        %1517 = vmatpush1.bf16.xpose.msra.mxu0 0
        %1518 = vmatprep.subr.bf16.mxu0 0
        %1519 = vmatpush1.bf16.xpose.msra.mxu0 0
        %1520 = vmatprep.subr.bf16.mxu0 0
        %1521 = vmatpush1.bf16.xpose.msra.mxu0 0
        %1522 = vmatprep.subr.bf16.mxu0 0
        %1523 = vmatpush1.bf16.xpose.msra.mxu0 0
        %1524 = vmatprep.subr.bf16.mxu0 0
        %1525 = vmatpush1.bf16.xpose.msra.mxu0 0
        %1526 = vmatprep.subr.bf16.mxu0 0
        %1527 = vmatpush1.bf16.xpose.msra.mxu0 0
        %1528 = vmatprep.subr.bf16.mxu0 0
        %1529 = vmatpush1.bf16.xpose.msra.mxu0 0
        %1530 = vmatprep.mubr.bf16.mxu0 0
        %1531 = vmatmul.mubr.bf16.gmra.mrb[0].mxu0 %v1484
        %v1532 = vpop.f32.mrb[0].mxu0
        %v1533 = vadd.f32 0.0, %v1532
        %v1534 = vpop.f32.mrb[0].mxu0
        %v1535 = vpop.f32.mrb[0].mxu0
        %v1536 = vadd.f32 0.0, %v1535
        %v1537 = vpop.f32.mrb[0].mxu0
        %1538 = vmatprep.mubr.bf16.mxu0 0
        %1539 = vmatmul.mubr.bf16.gmra.mrb[0].mxu0 %v1487
        %v1540 = vpop.f32.mrb[0].mxu0
        %v1541 = vadd.f32 0.0, %v1540
        %v1542 = vpop.f32.mrb[0].mxu0
        %v1543 = vpop.f32.mrb[0].mxu0
        %v1544 = vadd.f32 0.0, %v1543
        %v1545 = vpop.f32.mrb[0].mxu0
        %1546 = vmatprep.mubr.bf16.mxu0 0
        %1547 = vmatmul.mubr.bf16.gmra.mrb[0].mxu0 %v1490
        %v1548 = vpop.f32.mrb[0].mxu0
        %v1549 = vadd.f32 0.0, %v1548
        %v1550 = vpop.f32.mrb[0].mxu0
        %v1551 = vpop.f32.mrb[0].mxu0
        %v1552 = vadd.f32 0.0, %v1551
        %v1553 = vpop.f32.mrb[0].mxu0
        %1554 = vmatprep.mubr.bf16.mxu0 0
        %1555 = vmatmul.mubr.bf16.gmra.mrb[0].mxu0 %v1493
        %v1556 = vpop.f32.mrb[0].mxu0
        %v1557 = vadd.f32 0.0, %v1556
        %v1558 = vpop.f32.mrb[0].mxu0
        %v1559 = vpop.f32.mrb[0].mxu0
        %v1560 = vadd.f32 0.0, %v1559
        %v1561 = vpop.f32.mrb[0].mxu0
        %1562 = vdwg.mxu0
        %v1563 = vsel %vm1482, %v1533, -inf
        %1564 = vmax.xlane.f32.xlu0 %v1563
        %v1565 = vpop.xlane.xlu0 %1564
        %v1566 = vsel %vm1482, %v1536, -inf
        %1567 = vmax.xlane.f32.xlu0 %v1566
        %v1568 = vpop.xlane.xlu0 %1567
        %v1569 = vsel %vm1482, %v1541, -inf
        %1570 = vmax.xlane.f32.xlu0 %v1569
        %v1571 = vpop.xlane.xlu0 %1570
        %v1572 = vsel %vm1482, %v1544, -inf
        %1573 = vmax.xlane.f32.xlu0 %v1572
        %v1574 = vpop.xlane.xlu0 %1573
        %v1575 = vsel %vm1482, %v1549, -inf
        %1576 = vmax.xlane.f32.xlu0 %v1575
        %v1577 = vpop.xlane.xlu0 %1576
        %v1578 = vsel %vm1482, %v1552, -inf
        %1579 = vmax.xlane.f32.xlu0 %v1578
        %v1580 = vpop.xlane.xlu0 %1579
        %v1581 = vsel %vm1482, %v1557, -inf
        %1582 = vmax.xlane.f32.xlu0 %v1581
        %v1583 = vpop.xlane.xlu0 %1582
        %v1584 = vsel %vm1482, %v1560, -inf
        %1585 = vmax.xlane.f32.xlu0 %v1584
        %v1586 = vpop.xlane.xlu0 %1585
        %v1587 = vsub.f32 %v1533, %v1565
        %v1588 = vsub.f32 %v1536, %v1568
        %v1589 = vsub.f32 %v1541, %v1571
        %v1590 = vsub.f32 %v1544, %v1574
        %v1591 = vsub.f32 %v1549, %v1577
        %v1592 = vsub.f32 %v1552, %v1580
        %v1593 = vsub.f32 %v1557, %v1583
        %v1594 = vsub.f32 %v1560, %v1586
        %v1595 = vmul.f32 %v1587, 1.442695
        %v1596 = vpow.pop %v1595
        %v1597 = vmul.f32 %v1588, 1.442695
        %v1598 = vpow.pop %v1597
        %v1599 = vmul.f32 %v1589, 1.442695
        %v1600 = vpow.pop %v1599
        %v1601 = vmul.f32 %v1590, 1.442695
        %v1602 = vpow.pop %v1601
        %v1603 = vmul.f32 %v1591, 1.442695
        %v1604 = vpow.pop %v1603
        %v1605 = vmul.f32 %v1592, 1.442695
        %v1606 = vpow.pop %v1605
        %v1607 = vmul.f32 %v1593, 1.442695
        %v1608 = vpow.pop %v1607
        %v1609 = vmul.f32 %v1594, 1.442695
        %v1610 = vpow.pop %v1609
        %v1611 = vsel %vm1482, %v1596, 0.0
        %1612 = vadd.xlane.f32.xlu0 %v1611
        %v1613 = vpop.xlane.xlu0 %1612
        %v1614 = vsel %vm1482, %v1598, 0.0
        %1615 = vadd.xlane.f32.xlu0 %v1614
        %v1616 = vpop.xlane.xlu0 %1615
        %v1617 = vsel %vm1482, %v1600, 0.0
        %1618 = vadd.xlane.f32.xlu0 %v1617
        %v1619 = vpop.xlane.xlu0 %1618
        %v1620 = vsel %vm1482, %v1602, 0.0
        %1621 = vadd.xlane.f32.xlu0 %v1620
        %v1622 = vpop.xlane.xlu0 %1621
        %v1623 = vsel %vm1482, %v1604, 0.0
        %1624 = vadd.xlane.f32.xlu0 %v1623
        %v1625 = vpop.xlane.xlu0 %1624
        %v1626 = vsel %vm1482, %v1606, 0.0
        %1627 = vadd.xlane.f32.xlu0 %v1626
        %v1628 = vpop.xlane.xlu0 %1627
        %v1629 = vsel %vm1482, %v1608, 0.0
        %1630 = vadd.xlane.f32.xlu0 %v1629
        %v1631 = vpop.xlane.xlu0 %1630
        %v1632 = vsel %vm1482, %v1610, 0.0
        %1633 = vadd.xlane.f32.xlu0 %v1632
        %v1634 = vpop.xlane.xlu0 %1633
        %v1635 = vrcp.pop %v1613
        %v1636 = vrcp.pop %v1616
        %v1637 = vrcp.pop %v1619
        %v1638 = vrcp.pop %v1622
        %v1639 = vrcp.pop %v1625
        %v1640 = vrcp.pop %v1628
        %v1641 = vrcp.pop %v1631
        %v1642 = vrcp.pop %v1634
        %v1643 = vmul.f32 %v1596, %v1635
        %v1644 = vmul.f32 %v1598, %v1636
        %v1645 = vmul.f32 %v1600, %v1637
        %v1646 = vmul.f32 %v1602, %v1638
        %v1647 = vmul.f32 %v1604, %v1639
        %v1648 = vmul.f32 %v1606, %v1640
        %v1649 = vmul.f32 %v1608, %v1641
        %v1650 = vmul.f32 %v1610, %v1642
        %v1651 = vpack.c.bf16 %v1644, %v1643
        %v1652 = vpack.c.bf16 %v1646, %v1645
        %v1653 = vpack.c.bf16 %v1648, %v1647
        %v1654 = vpack.c.bf16 %v1650, %v1649
        %1656 = vrot.lane.b32.xlu0 %v1481, 96
        %v1657 = vpop.permute.xlu0 %1656
        %v1659 = vsel %vm1482, %v1651, 0
        %v1662 = vsel %vm1482, %v1652, 0
        %v1665 = vsel %vm1482, %v1653, 0
        %v1668 = vsel %vm1482, %v1654, 0
        %vm1670 = vcmask 1043456
        %v1672 = vsel %vm1670, %v1657, 0
        %1674 = vmatprep.subr.bf16.mxu0 0
        %1675 = vmatpush1.bf16.msra.mxu0 %v1672
        %1676 = vmatprep.subr.bf16.mxu0 0
        %1677 = vmatpush1.bf16.msra.mxu0 0
        %1678 = vmatprep.subr.bf16.mxu0 0
        %1679 = vmatpush1.bf16.msra.mxu0 0
        %1680 = vmatprep.subr.bf16.mxu0 0
        %1681 = vmatpush1.bf16.msra.mxu0 0
        %1682 = vmatprep.subr.bf16.mxu0 0
        %1683 = vmatpush1.bf16.msra.mxu0 0
        %1684 = vmatprep.subr.bf16.mxu0 0
        %1685 = vmatpush1.bf16.msra.mxu0 0
        %1686 = vmatprep.subr.bf16.mxu0 0
        %1687 = vmatpush1.bf16.msra.mxu0 0
        %1688 = vmatprep.subr.bf16.mxu0 0
        %1689 = vmatpush1.bf16.msra.mxu0 0
        %1690 = vmatprep.subr.bf16.mxu0 0
        %1691 = vmatpush1.bf16.msra.mxu0 0
        %1692 = vmatprep.subr.bf16.mxu0 0
        %1693 = vmatpush1.bf16.msra.mxu0 0
        %1694 = vmatprep.subr.bf16.mxu0 0
        %1695 = vmatpush1.bf16.msra.mxu0 0
        %1696 = vmatprep.subr.bf16.mxu0 0
        %1697 = vmatpush1.bf16.msra.mxu0 0
        %1698 = vmatprep.subr.bf16.mxu0 0
        %1699 = vmatpush1.bf16.msra.mxu0 0
        %1700 = vmatprep.subr.bf16.mxu0 0
        %1701 = vmatpush1.bf16.msra.mxu0 0
        %1702 = vmatprep.subr.bf16.mxu0 0
        %1703 = vmatpush1.bf16.msra.mxu0 0
        %1704 = vmatprep.subr.bf16.mxu0 0
        %1705 = vmatpush1.bf16.msra.mxu0 0
        %1706 = vmatprep.mubr.bf16.mxu0 0
        %1707 = vmatmul.mubr.bf16.gmra.mrb[0].mxu0 %v1659
        %v1708 = vpop.f32.mrb[0].mxu0
        %v1709 = vadd.f32 0.0, %v1708
        %v1710 = vpop.f32.mrb[0].mxu0
        %v1711 = vpop.f32.mrb[0].mxu0
        %v1712 = vadd.f32 0.0, %v1711
        %v1713 = vpop.f32.mrb[0].mxu0
        %1714 = vmatprep.mubr.bf16.mxu0 0
        %1715 = vmatmul.mubr.bf16.gmra.mrb[0].mxu0 %v1662
        %v1716 = vpop.f32.mrb[0].mxu0
        %v1717 = vadd.f32 0.0, %v1716
        %v1718 = vpop.f32.mrb[0].mxu0
        %v1719 = vpop.f32.mrb[0].mxu0
        %v1720 = vadd.f32 0.0, %v1719
        %v1721 = vpop.f32.mrb[0].mxu0
        %1722 = vmatprep.mubr.bf16.mxu0 0
        %1723 = vmatmul.mubr.bf16.gmra.mrb[0].mxu0 %v1665
        %v1724 = vpop.f32.mrb[0].mxu0
        %v1725 = vadd.f32 0.0, %v1724
        %v1726 = vpop.f32.mrb[0].mxu0
        %v1727 = vpop.f32.mrb[0].mxu0
        %v1728 = vadd.f32 0.0, %v1727
        %v1729 = vpop.f32.mrb[0].mxu0
        %1730 = vmatprep.mubr.bf16.mxu0 0
        %1731 = vmatmul.mubr.bf16.gmra.mrb[0].mxu0 %v1668
        %v1732 = vpop.f32.mrb[0].mxu0
        %v1733 = vadd.f32 0.0, %v1732
        %v1734 = vpop.f32.mrb[0].mxu0
        %v1735 = vpop.f32.mrb[0].mxu0
        %v1736 = vadd.f32 0.0, %v1735
        %v1737 = vpop.f32.mrb[0].mxu0
        %1738 = vdwg.mxu0
        %1739 = vst.msk [vmem:[#allocation2] sm:$0xff] %vm1482, %v1709
        %1740 = vst.msk [vmem:[#allocation2 + $0x8] sm:$0xff] %vm1482, %v1712
        %1741 = vst.msk [vmem:[#allocation2 + $0x10] sm:$0xff] %vm1482, %v1717
        %1742 = vst.msk [vmem:[#allocation2 + $0x18] sm:$0xff] %vm1482, %v1720
        %1743 = vst.msk [vmem:[#allocation2 + $0x20] sm:$0xff] %vm1482, %v1725
        %1744 = vst.msk [vmem:[#allocation2 + $0x28] sm:$0xff] %vm1482, %v1728
        %1745 = vst.msk [vmem:[#allocation2 + $0x30] sm:$0xff] %vm1482, %v1733
        %1746 = vst.msk [vmem:[#allocation2 + $0x38] sm:$0xff] %vm1482, %v1736
        %1751 = vrot.lane.b32.xlu0 %v1473, 120
        %v1752 = vpop.permute.xlu0 %1751
        %1753 = vrot.lane.b32.xlu0 %v1474, 120
        %v1754 = vpop.permute.xlu0 %1753
        %1755 = vrot.lane.b32.xlu0 %v1475, 120
        %v1756 = vpop.permute.xlu0 %1755
        %1757 = vrot.lane.b32.xlu0 %v1476, 120
        %v1758 = vpop.permute.xlu0 %1757
        %1759 = vrot.lane.b32.xlu0 %v1481, 120
        %v1760 = vpop.permute.xlu0 %1759
        %v1762 = vsel %vm1482, %v1752, 0
        %v1765 = vsel %vm1482, %v1754, 0
        %v1768 = vsel %vm1482, %v1756, 0
        %v1771 = vsel %vm1482, %v1758, 0
        %v1774 = vsel %vm1482, %v1760, 0
        %1776 = vmatprep.subr.bf16.mxu0 0
        %1777 = vmatpush1.bf16.xpose.msra.mxu0 %v1774
        %1778 = vmatprep.subr.bf16.mxu0 0
        %1779 = vmatpush1.bf16.xpose.msra.mxu0 0
        %1780 = vmatprep.subr.bf16.mxu0 0
        %1781 = vmatpush1.bf16.xpose.msra.mxu0 0
        %1782 = vmatprep.subr.bf16.mxu0 0
        %1783 = vmatpush1.bf16.xpose.msra.mxu0 0
        %1784 = vmatprep.subr.bf16.mxu0 0
        %1785 = vmatpush1.bf16.xpose.msra.mxu0 0
        %1786 = vmatprep.subr.bf16.mxu0 0
        %1787 = vmatpush1.bf16.xpose.msra.mxu0 0
        %1788 = vmatprep.subr.bf16.mxu0 0
        %1789 = vmatpush1.bf16.xpose.msra.mxu0 0
        %1790 = vmatprep.subr.bf16.mxu0 0
        %1791 = vmatpush1.bf16.xpose.msra.mxu0 0
        %1792 = vmatprep.subr.bf16.mxu0 0
        %1793 = vmatpush1.bf16.xpose.msra.mxu0 0
        %1794 = vmatprep.subr.bf16.mxu0 0
        %1795 = vmatpush1.bf16.xpose.msra.mxu0 0
        %1796 = vmatprep.subr.bf16.mxu0 0
        %1797 = vmatpush1.bf16.xpose.msra.mxu0 0
        %1798 = vmatprep.subr.bf16.mxu0 0
        %1799 = vmatpush1.bf16.xpose.msra.mxu0 0
        %1800 = vmatprep.subr.bf16.mxu0 0
        %1801 = vmatpush1.bf16.xpose.msra.mxu0 0
        %1802 = vmatprep.subr.bf16.mxu0 0
        %1803 = vmatpush1.bf16.xpose.msra.mxu0 0
        %1804 = vmatprep.subr.bf16.mxu0 0
        %1805 = vmatpush1.bf16.xpose.msra.mxu0 0
        %1806 = vmatprep.subr.bf16.mxu0 0
        %1807 = vmatpush1.bf16.xpose.msra.mxu0 0
        %1808 = vmatprep.mubr.bf16.mxu0 0
        %1809 = vmatmul.mubr.bf16.gmra.mrb[0].mxu0 %v1762
        %v1810 = vpop.f32.mrb[0].mxu0
        %v1811 = vadd.f32 0.0, %v1810
        %v1812 = vpop.f32.mrb[0].mxu0
        %v1813 = vpop.f32.mrb[0].mxu0
        %v1814 = vadd.f32 0.0, %v1813
        %v1815 = vpop.f32.mrb[0].mxu0
        %1816 = vmatprep.mubr.bf16.mxu0 0
        %1817 = vmatmul.mubr.bf16.gmra.mrb[0].mxu0 %v1765
        %v1818 = vpop.f32.mrb[0].mxu0
        %v1819 = vadd.f32 0.0, %v1818
        %v1820 = vpop.f32.mrb[0].mxu0
        %v1821 = vpop.f32.mrb[0].mxu0
        %v1822 = vadd.f32 0.0, %v1821
        %v1823 = vpop.f32.mrb[0].mxu0
        %1824 = vmatprep.mubr.bf16.mxu0 0
        %1825 = vmatmul.mubr.bf16.gmra.mrb[0].mxu0 %v1768
        %v1826 = vpop.f32.mrb[0].mxu0
        %v1827 = vadd.f32 0.0, %v1826
        %v1828 = vpop.f32.mrb[0].mxu0
        %v1829 = vpop.f32.mrb[0].mxu0
        %v1830 = vadd.f32 0.0, %v1829
        %v1831 = vpop.f32.mrb[0].mxu0
        %1832 = vmatprep.mubr.bf16.mxu0 0
        %1833 = vmatmul.mubr.bf16.gmra.mrb[0].mxu0 %v1771
        %v1834 = vpop.f32.mrb[0].mxu0
        %v1835 = vadd.f32 0.0, %v1834
        %v1836 = vpop.f32.mrb[0].mxu0
        %v1837 = vpop.f32.mrb[0].mxu0
        %v1838 = vadd.f32 0.0, %v1837
        %v1839 = vpop.f32.mrb[0].mxu0
        %1840 = vdwg.mxu0
        %v1841 = vsel %vm1482, %v1811, -inf
        %1842 = vmax.xlane.f32.xlu0 %v1841
        %v1843 = vpop.xlane.xlu0 %1842
        %v1844 = vsel %vm1482, %v1814, -inf
        %1845 = vmax.xlane.f32.xlu0 %v1844
        %v1846 = vpop.xlane.xlu0 %1845
        %v1847 = vsel %vm1482, %v1819, -inf
        %1848 = vmax.xlane.f32.xlu0 %v1847
        %v1849 = vpop.xlane.xlu0 %1848
        %v1850 = vsel %vm1482, %v1822, -inf
        %1851 = vmax.xlane.f32.xlu0 %v1850
        %v1852 = vpop.xlane.xlu0 %1851
        %v1853 = vsel %vm1482, %v1827, -inf
        %1854 = vmax.xlane.f32.xlu0 %v1853
        %v1855 = vpop.xlane.xlu0 %1854
        %v1856 = vsel %vm1482, %v1830, -inf
        %1857 = vmax.xlane.f32.xlu0 %v1856
        %v1858 = vpop.xlane.xlu0 %1857
        %v1859 = vsel %vm1482, %v1835, -inf
        %1860 = vmax.xlane.f32.xlu0 %v1859
        %v1861 = vpop.xlane.xlu0 %1860
        %v1862 = vsel %vm1482, %v1838, -inf
        %1863 = vmax.xlane.f32.xlu0 %v1862
        %v1864 = vpop.xlane.xlu0 %1863
        %v1865 = vsub.f32 %v1811, %v1843
        %v1866 = vsub.f32 %v1814, %v1846
        %v1867 = vsub.f32 %v1819, %v1849
        %v1868 = vsub.f32 %v1822, %v1852
        %v1869 = vsub.f32 %v1827, %v1855
        %v1870 = vsub.f32 %v1830, %v1858
        %v1871 = vsub.f32 %v1835, %v1861
        %v1872 = vsub.f32 %v1838, %v1864
        %v1873 = vmul.f32 %v1865, 1.442695
        %v1874 = vpow.pop %v1873
        %v1875 = vmul.f32 %v1866, 1.442695
        %v1876 = vpow.pop %v1875
        %v1877 = vmul.f32 %v1867, 1.442695
        %v1878 = vpow.pop %v1877
        %v1879 = vmul.f32 %v1868, 1.442695
        %v1880 = vpow.pop %v1879
        %v1881 = vmul.f32 %v1869, 1.442695
        %v1882 = vpow.pop %v1881
        %v1883 = vmul.f32 %v1870, 1.442695
        %v1884 = vpow.pop %v1883
        %v1885 = vmul.f32 %v1871, 1.442695
        %v1886 = vpow.pop %v1885
        %v1887 = vmul.f32 %v1872, 1.442695
        %v1888 = vpow.pop %v1887
        %v1889 = vsel %vm1482, %v1874, 0.0
        %1890 = vadd.xlane.f32.xlu0 %v1889
        %v1891 = vpop.xlane.xlu0 %1890
        %v1892 = vsel %vm1482, %v1876, 0.0
        %1893 = vadd.xlane.f32.xlu0 %v1892
        %v1894 = vpop.xlane.xlu0 %1893
        %v1895 = vsel %vm1482, %v1878, 0.0
        %1896 = vadd.xlane.f32.xlu0 %v1895
        %v1897 = vpop.xlane.xlu0 %1896
        %v1898 = vsel %vm1482, %v1880, 0.0
        %1899 = vadd.xlane.f32.xlu0 %v1898
        %v1900 = vpop.xlane.xlu0 %1899
        %v1901 = vsel %vm1482, %v1882, 0.0
        %1902 = vadd.xlane.f32.xlu0 %v1901
        %v1903 = vpop.xlane.xlu0 %1902
        %v1904 = vsel %vm1482, %v1884, 0.0
        %1905 = vadd.xlane.f32.xlu0 %v1904
        %v1906 = vpop.xlane.xlu0 %1905
        %v1907 = vsel %vm1482, %v1886, 0.0
        %1908 = vadd.xlane.f32.xlu0 %v1907
        %v1909 = vpop.xlane.xlu0 %1908
        %v1910 = vsel %vm1482, %v1888, 0.0
        %1911 = vadd.xlane.f32.xlu0 %v1910
        %v1912 = vpop.xlane.xlu0 %1911
        %v1913 = vrcp.pop %v1891
        %v1914 = vrcp.pop %v1894
        %v1915 = vrcp.pop %v1897
        %v1916 = vrcp.pop %v1900
        %v1917 = vrcp.pop %v1903
        %v1918 = vrcp.pop %v1906
        %v1919 = vrcp.pop %v1909
        %v1920 = vrcp.pop %v1912
        %v1921 = vmul.f32 %v1874, %v1913
        %v1922 = vmul.f32 %v1876, %v1914
        %v1923 = vmul.f32 %v1878, %v1915
        %v1924 = vmul.f32 %v1880, %v1916
        %v1925 = vmul.f32 %v1882, %v1917
        %v1926 = vmul.f32 %v1884, %v1918
        %v1927 = vmul.f32 %v1886, %v1919
        %v1928 = vmul.f32 %v1888, %v1920
        %v1929 = vpack.c.bf16 %v1922, %v1921
        %v1930 = vpack.c.bf16 %v1924, %v1923
        %v1931 = vpack.c.bf16 %v1926, %v1925
        %v1932 = vpack.c.bf16 %v1928, %v1927
        %1933 = vrot.lane.b32.xlu0 %v1481, 88
        %v1934 = vpop.permute.xlu0 %1933
        %v1936 = vsel %vm1482, %v1929, 0
        %v1939 = vsel %vm1482, %v1930, 0
        %v1942 = vsel %vm1482, %v1931, 0
        %v1945 = vsel %vm1482, %v1932, 0
        %v1948 = vsel %vm1670, %v1934, 0
        %1950 = vmatprep.subr.bf16.mxu0 0
        %1951 = vmatpush1.bf16.msra.mxu0 %v1948
        %1952 = vmatprep.subr.bf16.mxu0 0
        %1953 = vmatpush1.bf16.msra.mxu0 0
        %1954 = vmatprep.subr.bf16.mxu0 0
        %1955 = vmatpush1.bf16.msra.mxu0 0
        %1956 = vmatprep.subr.bf16.mxu0 0
        %1957 = vmatpush1.bf16.msra.mxu0 0
        %1958 = vmatprep.subr.bf16.mxu0 0
        %1959 = vmatpush1.bf16.msra.mxu0 0
        %1960 = vmatprep.subr.bf16.mxu0 0
        %1961 = vmatpush1.bf16.msra.mxu0 0
        %1962 = vmatprep.subr.bf16.mxu0 0
        %1963 = vmatpush1.bf16.msra.mxu0 0
        %1964 = vmatprep.subr.bf16.mxu0 0
        %1965 = vmatpush1.bf16.msra.mxu0 0
        %1966 = vmatprep.subr.bf16.mxu0 0
        %1967 = vmatpush1.bf16.msra.mxu0 0
        %1968 = vmatprep.subr.bf16.mxu0 0
        %1969 = vmatpush1.bf16.msra.mxu0 0
        %1970 = vmatprep.subr.bf16.mxu0 0
        %1971 = vmatpush1.bf16.msra.mxu0 0
        %1972 = vmatprep.subr.bf16.mxu0 0
        %1973 = vmatpush1.bf16.msra.mxu0 0
        %1974 = vmatprep.subr.bf16.mxu0 0
        %1975 = vmatpush1.bf16.msra.mxu0 0
        %1976 = vmatprep.subr.bf16.mxu0 0
        %1977 = vmatpush1.bf16.msra.mxu0 0
        %1978 = vmatprep.subr.bf16.mxu0 0
        %1979 = vmatpush1.bf16.msra.mxu0 0
        %1980 = vmatprep.subr.bf16.mxu0 0
        %1981 = vmatpush1.bf16.msra.mxu0 0
        %1982 = vmatprep.mubr.bf16.mxu0 0
        %1983 = vmatmul.mubr.bf16.gmra.mrb[0].mxu0 %v1936
        %v1984 = vpop.f32.mrb[0].mxu0
        %v1985 = vadd.f32 0.0, %v1984
        %v1986 = vpop.f32.mrb[0].mxu0
        %v1987 = vpop.f32.mrb[0].mxu0
        %v1988 = vadd.f32 0.0, %v1987
        %v1989 = vpop.f32.mrb[0].mxu0
        %1990 = vmatprep.mubr.bf16.mxu0 0
        %1991 = vmatmul.mubr.bf16.gmra.mrb[0].mxu0 %v1939
        %v1992 = vpop.f32.mrb[0].mxu0
        %v1993 = vadd.f32 0.0, %v1992
        %v1994 = vpop.f32.mrb[0].mxu0
        %v1995 = vpop.f32.mrb[0].mxu0
        %v1996 = vadd.f32 0.0, %v1995
        %v1997 = vpop.f32.mrb[0].mxu0
        %1998 = vmatprep.mubr.bf16.mxu0 0
        %1999 = vmatmul.mubr.bf16.gmra.mrb[0].mxu0 %v1942
        %v2000 = vpop.f32.mrb[0].mxu0
        %v2001 = vadd.f32 0.0, %v2000
        %v2002 = vpop.f32.mrb[0].mxu0
        %v2003 = vpop.f32.mrb[0].mxu0
        %v2004 = vadd.f32 0.0, %v2003
        %v2005 = vpop.f32.mrb[0].mxu0
        %2006 = vmatprep.mubr.bf16.mxu0 0
        %2007 = vmatmul.mubr.bf16.gmra.mrb[0].mxu0 %v1945
        %v2008 = vpop.f32.mrb[0].mxu0
        %v2009 = vadd.f32 0.0, %v2008
        %v2010 = vpop.f32.mrb[0].mxu0
        %v2011 = vpop.f32.mrb[0].mxu0
        %v2012 = vadd.f32 0.0, %v2011
        %v2013 = vpop.f32.mrb[0].mxu0
        %2014 = vdwg.mxu0
        %2023 = vrot.lane.b32.xlu0 %v1985, 8
        %v2024 = vpop.permute.xlu0 %2023
        %2025 = vrot.lane.b32.xlu0 %v1988, 8
        %v2026 = vpop.permute.xlu0 %2025
        %2027 = vrot.lane.b32.xlu0 %v1993, 8
        %v2028 = vpop.permute.xlu0 %2027
        %2029 = vrot.lane.b32.xlu0 %v1996, 8
        %v2030 = vpop.permute.xlu0 %2029
        %2031 = vrot.lane.b32.xlu0 %v2001, 8
        %v2032 = vpop.permute.xlu0 %2031
        %2033 = vrot.lane.b32.xlu0 %v2004, 8
        %v2034 = vpop.permute.xlu0 %2033
        %2035 = vrot.lane.b32.xlu0 %v2009, 8
        %v2036 = vpop.permute.xlu0 %2035
        %2037 = vrot.lane.b32.xlu0 %v2012, 8
        %v2038 = vpop.permute.xlu0 %2037
        %vm2047 = vcmask 130112
        %2048 = vst.msk [vmem:[#allocation2] sm:$0xff] %vm2047, %v2024
        %2049 = vst.msk [vmem:[#allocation2 + $0x8] sm:$0xff] %vm2047, %v2026
        %2050 = vst.msk [vmem:[#allocation2 + $0x10] sm:$0xff] %vm2047, %v2028
        %2051 = vst.msk [vmem:[#allocation2 + $0x18] sm:$0xff] %vm2047, %v2030
        %2052 = vst.msk [vmem:[#allocation2 + $0x20] sm:$0xff] %vm2047, %v2032
        %2053 = vst.msk [vmem:[#allocation2 + $0x28] sm:$0xff] %vm2047, %v2034
        %2054 = vst.msk [vmem:[#allocation2 + $0x30] sm:$0xff] %vm2047, %v2036
        %2055 = vst.msk [vmem:[#allocation2 + $0x38] sm:$0xff] %vm2047, %v2038
        %2056 = vrot.lane.b32.xlu0 %v1473, 112
        %v2057 = vpop.permute.xlu0 %2056
        %2058 = vrot.lane.b32.xlu0 %v1474, 112
        %v2059 = vpop.permute.xlu0 %2058
        %2060 = vrot.lane.b32.xlu0 %v1475, 112
        %v2061 = vpop.permute.xlu0 %2060
        %2062 = vrot.lane.b32.xlu0 %v1476, 112
        %v2063 = vpop.permute.xlu0 %2062
        %2064 = vrot.lane.b32.xlu0 %v1481, 112
        %v2065 = vpop.permute.xlu0 %2064
        %v2067 = vsel %vm1482, %v2057, 0
        %v2070 = vsel %vm1482, %v2059, 0
        %v2073 = vsel %vm1482, %v2061, 0
        %v2076 = vsel %vm1482, %v2063, 0
        %v2079 = vsel %vm1482, %v2065, 0
        %2081 = vmatprep.subr.bf16.mxu0 0
        %2082 = vmatpush1.bf16.xpose.msra.mxu0 %v2079
        %2083 = vmatprep.subr.bf16.mxu0 0
        %2084 = vmatpush1.bf16.xpose.msra.mxu0 0
        %2085 = vmatprep.subr.bf16.mxu0 0
        %2086 = vmatpush1.bf16.xpose.msra.mxu0 0
        %2087 = vmatprep.subr.bf16.mxu0 0
        %2088 = vmatpush1.bf16.xpose.msra.mxu0 0
        %2089 = vmatprep.subr.bf16.mxu0 0
        %2090 = vmatpush1.bf16.xpose.msra.mxu0 0
        %2091 = vmatprep.subr.bf16.mxu0 0
        %2092 = vmatpush1.bf16.xpose.msra.mxu0 0
        %2093 = vmatprep.subr.bf16.mxu0 0
        %2094 = vmatpush1.bf16.xpose.msra.mxu0 0
        %2095 = vmatprep.subr.bf16.mxu0 0
        %2096 = vmatpush1.bf16.xpose.msra.mxu0 0
        %2097 = vmatprep.subr.bf16.mxu0 0
        %2098 = vmatpush1.bf16.xpose.msra.mxu0 0
        %2099 = vmatprep.subr.bf16.mxu0 0
        %2100 = vmatpush1.bf16.xpose.msra.mxu0 0
        %2101 = vmatprep.subr.bf16.mxu0 0
        %2102 = vmatpush1.bf16.xpose.msra.mxu0 0
        %2103 = vmatprep.subr.bf16.mxu0 0
        %2104 = vmatpush1.bf16.xpose.msra.mxu0 0
        %2105 = vmatprep.subr.bf16.mxu0 0
        %2106 = vmatpush1.bf16.xpose.msra.mxu0 0
        %2107 = vmatprep.subr.bf16.mxu0 0
        %2108 = vmatpush1.bf16.xpose.msra.mxu0 0
        %2109 = vmatprep.subr.bf16.mxu0 0
        %2110 = vmatpush1.bf16.xpose.msra.mxu0 0
        %2111 = vmatprep.subr.bf16.mxu0 0
        %2112 = vmatpush1.bf16.xpose.msra.mxu0 0
        %2113 = vmatprep.mubr.bf16.mxu0 0
        %2114 = vmatmul.mubr.bf16.gmra.mrb[0].mxu0 %v2067
        %v2115 = vpop.f32.mrb[0].mxu0
        %v2116 = vadd.f32 0.0, %v2115
        %v2117 = vpop.f32.mrb[0].mxu0
        %v2118 = vpop.f32.mrb[0].mxu0
        %v2119 = vadd.f32 0.0, %v2118
        %v2120 = vpop.f32.mrb[0].mxu0
        %2121 = vmatprep.mubr.bf16.mxu0 0
        %2122 = vmatmul.mubr.bf16.gmra.mrb[0].mxu0 %v2070
        %v2123 = vpop.f32.mrb[0].mxu0
        %v2124 = vadd.f32 0.0, %v2123
        %v2125 = vpop.f32.mrb[0].mxu0
        %v2126 = vpop.f32.mrb[0].mxu0
        %v2127 = vadd.f32 0.0, %v2126
        %v2128 = vpop.f32.mrb[0].mxu0
        %2129 = vmatprep.mubr.bf16.mxu0 0
        %2130 = vmatmul.mubr.bf16.gmra.mrb[0].mxu0 %v2073
        %v2131 = vpop.f32.mrb[0].mxu0
        %v2132 = vadd.f32 0.0, %v2131
        %v2133 = vpop.f32.mrb[0].mxu0
        %v2134 = vpop.f32.mrb[0].mxu0
        %v2135 = vadd.f32 0.0, %v2134
        %v2136 = vpop.f32.mrb[0].mxu0
        %2137 = vmatprep.mubr.bf16.mxu0 0
        %2138 = vmatmul.mubr.bf16.gmra.mrb[0].mxu0 %v2076
        %v2139 = vpop.f32.mrb[0].mxu0
        %v2140 = vadd.f32 0.0, %v2139
        %v2141 = vpop.f32.mrb[0].mxu0
        %v2142 = vpop.f32.mrb[0].mxu0
        %v2143 = vadd.f32 0.0, %v2142
        %v2144 = vpop.f32.mrb[0].mxu0
        %2145 = vdwg.mxu0
        %v2146 = vsel %vm1482, %v2116, -inf
        %2147 = vmax.xlane.f32.xlu0 %v2146
        %v2148 = vpop.xlane.xlu0 %2147
        %v2149 = vsel %vm1482, %v2119, -inf
        %2150 = vmax.xlane.f32.xlu0 %v2149
        %v2151 = vpop.xlane.xlu0 %2150
        %v2152 = vsel %vm1482, %v2124, -inf
        %2153 = vmax.xlane.f32.xlu0 %v2152
        %v2154 = vpop.xlane.xlu0 %2153
        %v2155 = vsel %vm1482, %v2127, -inf
        %2156 = vmax.xlane.f32.xlu0 %v2155
        %v2157 = vpop.xlane.xlu0 %2156
        %v2158 = vsel %vm1482, %v2132, -inf
        %2159 = vmax.xlane.f32.xlu0 %v2158
        %v2160 = vpop.xlane.xlu0 %2159
        %v2161 = vsel %vm1482, %v2135, -inf
        %2162 = vmax.xlane.f32.xlu0 %v2161
        %v2163 = vpop.xlane.xlu0 %2162
        %v2164 = vsel %vm1482, %v2140, -inf
        %2165 = vmax.xlane.f32.xlu0 %v2164
        %v2166 = vpop.xlane.xlu0 %2165
        %v2167 = vsel %vm1482, %v2143, -inf
        %2168 = vmax.xlane.f32.xlu0 %v2167
        %v2169 = vpop.xlane.xlu0 %2168
        %v2170 = vsub.f32 %v2116, %v2148
        %v2171 = vsub.f32 %v2119, %v2151
        %v2172 = vsub.f32 %v2124, %v2154
        %v2173 = vsub.f32 %v2127, %v2157
        %v2174 = vsub.f32 %v2132, %v2160
        %v2175 = vsub.f32 %v2135, %v2163
        %v2176 = vsub.f32 %v2140, %v2166
        %v2177 = vsub.f32 %v2143, %v2169
        %v2178 = vmul.f32 %v2170, 1.442695
        %v2179 = vpow.pop %v2178
        %v2180 = vmul.f32 %v2171, 1.442695
        %v2181 = vpow.pop %v2180
        %v2182 = vmul.f32 %v2172, 1.442695
        %v2183 = vpow.pop %v2182
        %v2184 = vmul.f32 %v2173, 1.442695
        %v2185 = vpow.pop %v2184
        %v2186 = vmul.f32 %v2174, 1.442695
        %v2187 = vpow.pop %v2186
        %v2188 = vmul.f32 %v2175, 1.442695
        %v2189 = vpow.pop %v2188
        %v2190 = vmul.f32 %v2176, 1.442695
        %v2191 = vpow.pop %v2190
        %v2192 = vmul.f32 %v2177, 1.442695
        %v2193 = vpow.pop %v2192
        %v2194 = vsel %vm1482, %v2179, 0.0
        %2195 = vadd.xlane.f32.xlu0 %v2194
        %v2196 = vpop.xlane.xlu0 %2195
        %v2197 = vsel %vm1482, %v2181, 0.0
        %2198 = vadd.xlane.f32.xlu0 %v2197
        %v2199 = vpop.xlane.xlu0 %2198
        %v2200 = vsel %vm1482, %v2183, 0.0
        %2201 = vadd.xlane.f32.xlu0 %v2200
        %v2202 = vpop.xlane.xlu0 %2201
        %v2203 = vsel %vm1482, %v2185, 0.0
        %2204 = vadd.xlane.f32.xlu0 %v2203
        %v2205 = vpop.xlane.xlu0 %2204
        %v2206 = vsel %vm1482, %v2187, 0.0
        %2207 = vadd.xlane.f32.xlu0 %v2206
        %v2208 = vpop.xlane.xlu0 %2207
        %v2209 = vsel %vm1482, %v2189, 0.0
        %2210 = vadd.xlane.f32.xlu0 %v2209
        %v2211 = vpop.xlane.xlu0 %2210
        %v2212 = vsel %vm1482, %v2191, 0.0
        %2213 = vadd.xlane.f32.xlu0 %v2212
        %v2214 = vpop.xlane.xlu0 %2213
        %v2215 = vsel %vm1482, %v2193, 0.0
        %2216 = vadd.xlane.f32.xlu0 %v2215
        %v2217 = vpop.xlane.xlu0 %2216
        %v2218 = vrcp.pop %v2196
        %v2219 = vrcp.pop %v2199
        %v2220 = vrcp.pop %v2202
        %v2221 = vrcp.pop %v2205
        %v2222 = vrcp.pop %v2208
        %v2223 = vrcp.pop %v2211
        %v2224 = vrcp.pop %v2214
        %v2225 = vrcp.pop %v2217
        %v2226 = vmul.f32 %v2179, %v2218
        %v2227 = vmul.f32 %v2181, %v2219
        %v2228 = vmul.f32 %v2183, %v2220
        %v2229 = vmul.f32 %v2185, %v2221
        %v2230 = vmul.f32 %v2187, %v2222
        %v2231 = vmul.f32 %v2189, %v2223
        %v2232 = vmul.f32 %v2191, %v2224
        %v2233 = vmul.f32 %v2193, %v2225
        %v2234 = vpack.c.bf16 %v2227, %v2226
        %v2235 = vpack.c.bf16 %v2229, %v2228
        %v2236 = vpack.c.bf16 %v2231, %v2230
        %v2237 = vpack.c.bf16 %v2233, %v2232
        %2238 = vrot.lane.b32.xlu0 %v1481, 80
        %v2239 = vpop.permute.xlu0 %2238
        %v2241 = vsel %vm1482, %v2234, 0
        %v2244 = vsel %vm1482, %v2235, 0
        %v2247 = vsel %vm1482, %v2236, 0
        %v2250 = vsel %vm1482, %v2237, 0
        %v2253 = vsel %vm1670, %v2239, 0
        %2255 = vmatprep.subr.bf16.mxu0 0
        %2256 = vmatpush1.bf16.msra.mxu0 %v2253
        %2257 = vmatprep.subr.bf16.mxu0 0
        %2258 = vmatpush1.bf16.msra.mxu0 0
        %2259 = vmatprep.subr.bf16.mxu0 0
        %2260 = vmatpush1.bf16.msra.mxu0 0
        %2261 = vmatprep.subr.bf16.mxu0 0
        %2262 = vmatpush1.bf16.msra.mxu0 0
        %2263 = vmatprep.subr.bf16.mxu0 0
        %2264 = vmatpush1.bf16.msra.mxu0 0
        %2265 = vmatprep.subr.bf16.mxu0 0
        %2266 = vmatpush1.bf16.msra.mxu0 0
        %2267 = vmatprep.subr.bf16.mxu0 0
        %2268 = vmatpush1.bf16.msra.mxu0 0
        %2269 = vmatprep.subr.bf16.mxu0 0
        %2270 = vmatpush1.bf16.msra.mxu0 0
        %2271 = vmatprep.subr.bf16.mxu0 0
        %2272 = vmatpush1.bf16.msra.mxu0 0
        %2273 = vmatprep.subr.bf16.mxu0 0
        %2274 = vmatpush1.bf16.msra.mxu0 0
        %2275 = vmatprep.subr.bf16.mxu0 0
        %2276 = vmatpush1.bf16.msra.mxu0 0
        %2277 = vmatprep.subr.bf16.mxu0 0
        %2278 = vmatpush1.bf16.msra.mxu0 0
        %2279 = vmatprep.subr.bf16.mxu0 0
        %2280 = vmatpush1.bf16.msra.mxu0 0
        %2281 = vmatprep.subr.bf16.mxu0 0
        %2282 = vmatpush1.bf16.msra.mxu0 0
        %2283 = vmatprep.subr.bf16.mxu0 0
        %2284 = vmatpush1.bf16.msra.mxu0 0
        %2285 = vmatprep.subr.bf16.mxu0 0
        %2286 = vmatpush1.bf16.msra.mxu0 0
        %2287 = vmatprep.mubr.bf16.mxu0 0
        %2288 = vmatmul.mubr.bf16.gmra.mrb[0].mxu0 %v2241
        %v2289 = vpop.f32.mrb[0].mxu0
        %v2290 = vadd.f32 0.0, %v2289
        %v2291 = vpop.f32.mrb[0].mxu0
        %v2292 = vpop.f32.mrb[0].mxu0
        %v2293 = vadd.f32 0.0, %v2292
        %v2294 = vpop.f32.mrb[0].mxu0
        %2295 = vmatprep.mubr.bf16.mxu0 0
        %2296 = vmatmul.mubr.bf16.gmra.mrb[0].mxu0 %v2244
        %v2297 = vpop.f32.mrb[0].mxu0
        %v2298 = vadd.f32 0.0, %v2297
        %v2299 = vpop.f32.mrb[0].mxu0
        %v2300 = vpop.f32.mrb[0].mxu0
        %v2301 = vadd.f32 0.0, %v2300
        %v2302 = vpop.f32.mrb[0].mxu0
        %2303 = vmatprep.mubr.bf16.mxu0 0
        %2304 = vmatmul.mubr.bf16.gmra.mrb[0].mxu0 %v2247
        %v2305 = vpop.f32.mrb[0].mxu0
        %v2306 = vadd.f32 0.0, %v2305
        %v2307 = vpop.f32.mrb[0].mxu0
        %v2308 = vpop.f32.mrb[0].mxu0
        %v2309 = vadd.f32 0.0, %v2308
        %v2310 = vpop.f32.mrb[0].mxu0
        %2311 = vmatprep.mubr.bf16.mxu0 0
        %2312 = vmatmul.mubr.bf16.gmra.mrb[0].mxu0 %v2250
        %v2313 = vpop.f32.mrb[0].mxu0
        %v2314 = vadd.f32 0.0, %v2313
        %v2315 = vpop.f32.mrb[0].mxu0
        %v2316 = vpop.f32.mrb[0].mxu0
        %v2317 = vadd.f32 0.0, %v2316
        %v2318 = vpop.f32.mrb[0].mxu0
        %2319 = vdwg.mxu0
        %2328 = vrot.lane.b32.xlu0 %v2290, 16
        %v2329 = vpop.permute.xlu0 %2328
        %2330 = vrot.lane.b32.xlu0 %v2293, 16
        %v2331 = vpop.permute.xlu0 %2330
        %2332 = vrot.lane.b32.xlu0 %v2298, 16
        %v2333 = vpop.permute.xlu0 %2332
        %2334 = vrot.lane.b32.xlu0 %v2301, 16
        %v2335 = vpop.permute.xlu0 %2334
        %2336 = vrot.lane.b32.xlu0 %v2306, 16
        %v2337 = vpop.permute.xlu0 %2336
        %2338 = vrot.lane.b32.xlu0 %v2309, 16
        %v2339 = vpop.permute.xlu0 %2338
        %2340 = vrot.lane.b32.xlu0 %v2314, 16
        %v2341 = vpop.permute.xlu0 %2340
        %2342 = vrot.lane.b32.xlu0 %v2317, 16
        %v2343 = vpop.permute.xlu0 %2342
        %vm2352 = vcmask 195712
        %2353 = vst.msk [vmem:[#allocation2] sm:$0xff] %vm2352, %v2329
        %2354 = vst.msk [vmem:[#allocation2 + $0x8] sm:$0xff] %vm2352, %v2331
        %2355 = vst.msk [vmem:[#allocation2 + $0x10] sm:$0xff] %vm2352, %v2333
        %2356 = vst.msk [vmem:[#allocation2 + $0x18] sm:$0xff] %vm2352, %v2335
        %2357 = vst.msk [vmem:[#allocation2 + $0x20] sm:$0xff] %vm2352, %v2337
        %2358 = vst.msk [vmem:[#allocation2 + $0x28] sm:$0xff] %vm2352, %v2339
        %2359 = vst.msk [vmem:[#allocation2 + $0x30] sm:$0xff] %vm2352, %v2341
        %2360 = vst.msk [vmem:[#allocation2 + $0x38] sm:$0xff] %vm2352, %v2343
        %2361 = vrot.lane.b32.xlu0 %v1473, 104
        %v2362 = vpop.permute.xlu0 %2361
        %2363 = vrot.lane.b32.xlu0 %v1474, 104
        %v2364 = vpop.permute.xlu0 %2363
        %2365 = vrot.lane.b32.xlu0 %v1475, 104
        %v2366 = vpop.permute.xlu0 %2365
        %2367 = vrot.lane.b32.xlu0 %v1476, 104
        %v2368 = vpop.permute.xlu0 %2367
        %2369 = vrot.lane.b32.xlu0 %v1481, 104
        %v2370 = vpop.permute.xlu0 %2369
        %v2372 = vsel %vm1482, %v2362, 0
        %v2375 = vsel %vm1482, %v2364, 0
        %v2378 = vsel %vm1482, %v2366, 0
        %v2381 = vsel %vm1482, %v2368, 0
        %v2384 = vsel %vm1482, %v2370, 0
        %2386 = vmatprep.subr.bf16.mxu0 0
        %2387 = vmatpush1.bf16.xpose.msra.mxu0 %v2384
        %2388 = vmatprep.subr.bf16.mxu0 0
        %2389 = vmatpush1.bf16.xpose.msra.mxu0 0
        %2390 = vmatprep.subr.bf16.mxu0 0
        %2391 = vmatpush1.bf16.xpose.msra.mxu0 0
        %2392 = vmatprep.subr.bf16.mxu0 0
        %2393 = vmatpush1.bf16.xpose.msra.mxu0 0
        %2394 = vmatprep.subr.bf16.mxu0 0
        %2395 = vmatpush1.bf16.xpose.msra.mxu0 0
        %2396 = vmatprep.subr.bf16.mxu0 0
        %2397 = vmatpush1.bf16.xpose.msra.mxu0 0
        %2398 = vmatprep.subr.bf16.mxu0 0
        %2399 = vmatpush1.bf16.xpose.msra.mxu0 0
        %2400 = vmatprep.subr.bf16.mxu0 0
        %2401 = vmatpush1.bf16.xpose.msra.mxu0 0
        %2402 = vmatprep.subr.bf16.mxu0 0
        %2403 = vmatpush1.bf16.xpose.msra.mxu0 0
        %2404 = vmatprep.subr.bf16.mxu0 0
        %2405 = vmatpush1.bf16.xpose.msra.mxu0 0
        %2406 = vmatprep.subr.bf16.mxu0 0
        %2407 = vmatpush1.bf16.xpose.msra.mxu0 0
        %2408 = vmatprep.subr.bf16.mxu0 0
        %2409 = vmatpush1.bf16.xpose.msra.mxu0 0
        %2410 = vmatprep.subr.bf16.mxu0 0
        %2411 = vmatpush1.bf16.xpose.msra.mxu0 0
        %2412 = vmatprep.subr.bf16.mxu0 0
        %2413 = vmatpush1.bf16.xpose.msra.mxu0 0
        %2414 = vmatprep.subr.bf16.mxu0 0
        %2415 = vmatpush1.bf16.xpose.msra.mxu0 0
        %2416 = vmatprep.subr.bf16.mxu0 0
        %2417 = vmatpush1.bf16.xpose.msra.mxu0 0
        %2418 = vmatprep.mubr.bf16.mxu0 0
        %2419 = vmatmul.mubr.bf16.gmra.mrb[0].mxu0 %v2372
        %v2420 = vpop.f32.mrb[0].mxu0
        %v2421 = vadd.f32 0.0, %v2420
        %v2422 = vpop.f32.mrb[0].mxu0
        %v2423 = vpop.f32.mrb[0].mxu0
        %v2424 = vadd.f32 0.0, %v2423
        %v2425 = vpop.f32.mrb[0].mxu0
        %2426 = vmatprep.mubr.bf16.mxu0 0
        %2427 = vmatmul.mubr.bf16.gmra.mrb[0].mxu0 %v2375
        %v2428 = vpop.f32.mrb[0].mxu0
        %v2429 = vadd.f32 0.0, %v2428
        %v2430 = vpop.f32.mrb[0].mxu0
        %v2431 = vpop.f32.mrb[0].mxu0
        %v2432 = vadd.f32 0.0, %v2431
        %v2433 = vpop.f32.mrb[0].mxu0
        %2434 = vmatprep.mubr.bf16.mxu0 0
        %2435 = vmatmul.mubr.bf16.gmra.mrb[0].mxu0 %v2378
        %v2436 = vpop.f32.mrb[0].mxu0
        %v2437 = vadd.f32 0.0, %v2436
        %v2438 = vpop.f32.mrb[0].mxu0
        %v2439 = vpop.f32.mrb[0].mxu0
        %v2440 = vadd.f32 0.0, %v2439
        %v2441 = vpop.f32.mrb[0].mxu0
        %2442 = vmatprep.mubr.bf16.mxu0 0
        %2443 = vmatmul.mubr.bf16.gmra.mrb[0].mxu0 %v2381
        %v2444 = vpop.f32.mrb[0].mxu0
        %v2445 = vadd.f32 0.0, %v2444
        %v2446 = vpop.f32.mrb[0].mxu0
        %v2447 = vpop.f32.mrb[0].mxu0
        %v2448 = vadd.f32 0.0, %v2447
        %v2449 = vpop.f32.mrb[0].mxu0
        %2450 = vdwg.mxu0
        %v2451 = vsel %vm1482, %v2421, -inf
        %2452 = vmax.xlane.f32.xlu0 %v2451
        %v2453 = vpop.xlane.xlu0 %2452
        %v2454 = vsel %vm1482, %v2424, -inf
        %2455 = vmax.xlane.f32.xlu0 %v2454
        %v2456 = vpop.xlane.xlu0 %2455
        %v2457 = vsel %vm1482, %v2429, -inf
        %2458 = vmax.xlane.f32.xlu0 %v2457
        %v2459 = vpop.xlane.xlu0 %2458
        %v2460 = vsel %vm1482, %v2432, -inf
        %2461 = vmax.xlane.f32.xlu0 %v2460
        %v2462 = vpop.xlane.xlu0 %2461
        %v2463 = vsel %vm1482, %v2437, -inf
        %2464 = vmax.xlane.f32.xlu0 %v2463
        %v2465 = vpop.xlane.xlu0 %2464
        %v2466 = vsel %vm1482, %v2440, -inf
        %2467 = vmax.xlane.f32.xlu0 %v2466
        %v2468 = vpop.xlane.xlu0 %2467
        %v2469 = vsel %vm1482, %v2445, -inf
        %2470 = vmax.xlane.f32.xlu0 %v2469
        %v2471 = vpop.xlane.xlu0 %2470
        %v2472 = vsel %vm1482, %v2448, -inf
        %2473 = vmax.xlane.f32.xlu0 %v2472
        %v2474 = vpop.xlane.xlu0 %2473
        %v2475 = vsub.f32 %v2421, %v2453
        %v2476 = vsub.f32 %v2424, %v2456
        %v2477 = vsub.f32 %v2429, %v2459
        %v2478 = vsub.f32 %v2432, %v2462
        %v2479 = vsub.f32 %v2437, %v2465
        %v2480 = vsub.f32 %v2440, %v2468
        %v2481 = vsub.f32 %v2445, %v2471
        %v2482 = vsub.f32 %v2448, %v2474
        %v2483 = vmul.f32 %v2475, 1.442695
        %v2484 = vpow.pop %v2483
        %v2485 = vmul.f32 %v2476, 1.442695
        %v2486 = vpow.pop %v2485
        %v2487 = vmul.f32 %v2477, 1.442695
        %v2488 = vpow.pop %v2487
        %v2489 = vmul.f32 %v2478, 1.442695
        %v2490 = vpow.pop %v2489
        %v2491 = vmul.f32 %v2479, 1.442695
        %v2492 = vpow.pop %v2491
        %v2493 = vmul.f32 %v2480, 1.442695
        %v2494 = vpow.pop %v2493
        %v2495 = vmul.f32 %v2481, 1.442695
        %v2496 = vpow.pop %v2495
        %v2497 = vmul.f32 %v2482, 1.442695
        %v2498 = vpow.pop %v2497
        %v2499 = vsel %vm1482, %v2484, 0.0
        %2500 = vadd.xlane.f32.xlu0 %v2499
        %v2501 = vpop.xlane.xlu0 %2500
        %v2502 = vsel %vm1482, %v2486, 0.0
        %2503 = vadd.xlane.f32.xlu0 %v2502
        %v2504 = vpop.xlane.xlu0 %2503
        %v2505 = vsel %vm1482, %v2488, 0.0
        %2506 = vadd.xlane.f32.xlu0 %v2505
        %v2507 = vpop.xlane.xlu0 %2506
        %v2508 = vsel %vm1482, %v2490, 0.0
        %2509 = vadd.xlane.f32.xlu0 %v2508
        %v2510 = vpop.xlane.xlu0 %2509
        %v2511 = vsel %vm1482, %v2492, 0.0
        %2512 = vadd.xlane.f32.xlu0 %v2511
        %v2513 = vpop.xlane.xlu0 %2512
        %v2514 = vsel %vm1482, %v2494, 0.0
        %2515 = vadd.xlane.f32.xlu0 %v2514
        %v2516 = vpop.xlane.xlu0 %2515
        %v2517 = vsel %vm1482, %v2496, 0.0
        %2518 = vadd.xlane.f32.xlu0 %v2517
        %v2519 = vpop.xlane.xlu0 %2518
        %v2520 = vsel %vm1482, %v2498, 0.0
        %2521 = vadd.xlane.f32.xlu0 %v2520
        %v2522 = vpop.xlane.xlu0 %2521
        %v2523 = vrcp.pop %v2501
        %v2524 = vrcp.pop %v2504
        %v2525 = vrcp.pop %v2507
        %v2526 = vrcp.pop %v2510
        %v2527 = vrcp.pop %v2513
        %v2528 = vrcp.pop %v2516
        %v2529 = vrcp.pop %v2519
        %v2530 = vrcp.pop %v2522
        %v2531 = vmul.f32 %v2484, %v2523
        %v2532 = vmul.f32 %v2486, %v2524
        %v2533 = vmul.f32 %v2488, %v2525
        %v2534 = vmul.f32 %v2490, %v2526
        %v2535 = vmul.f32 %v2492, %v2527
        %v2536 = vmul.f32 %v2494, %v2528
        %v2537 = vmul.f32 %v2496, %v2529
        %v2538 = vmul.f32 %v2498, %v2530
        %v2539 = vpack.c.bf16 %v2532, %v2531
        %v2540 = vpack.c.bf16 %v2534, %v2533
        %v2541 = vpack.c.bf16 %v2536, %v2535
        %v2542 = vpack.c.bf16 %v2538, %v2537
        %2543 = vrot.lane.b32.xlu0 %v1481, 72
        %v2544 = vpop.permute.xlu0 %2543
        %v2546 = vsel %vm1482, %v2539, 0
        %v2549 = vsel %vm1482, %v2540, 0
        %v2552 = vsel %vm1482, %v2541, 0
        %v2555 = vsel %vm1482, %v2542, 0
        %v2558 = vsel %vm1670, %v2544, 0
        %2560 = vmatprep.subr.bf16.mxu0 0
        %2561 = vmatpush1.bf16.msra.mxu0 %v2558
        %2562 = vmatprep.subr.bf16.mxu0 0
        %2563 = vmatpush1.bf16.msra.mxu0 0
        %2564 = vmatprep.subr.bf16.mxu0 0
        %2565 = vmatpush1.bf16.msra.mxu0 0
        %2566 = vmatprep.subr.bf16.mxu0 0
        %2567 = vmatpush1.bf16.msra.mxu0 0
        %2568 = vmatprep.subr.bf16.mxu0 0
        %2569 = vmatpush1.bf16.msra.mxu0 0
        %2570 = vmatprep.subr.bf16.mxu0 0
        %2571 = vmatpush1.bf16.msra.mxu0 0
        %2572 = vmatprep.subr.bf16.mxu0 0
        %2573 = vmatpush1.bf16.msra.mxu0 0
        %2574 = vmatprep.subr.bf16.mxu0 0
        %2575 = vmatpush1.bf16.msra.mxu0 0
        %2576 = vmatprep.subr.bf16.mxu0 0
        %2577 = vmatpush1.bf16.msra.mxu0 0
        %2578 = vmatprep.subr.bf16.mxu0 0
        %2579 = vmatpush1.bf16.msra.mxu0 0
        %2580 = vmatprep.subr.bf16.mxu0 0
        %2581 = vmatpush1.bf16.msra.mxu0 0
        %2582 = vmatprep.subr.bf16.mxu0 0
        %2583 = vmatpush1.bf16.msra.mxu0 0
        %2584 = vmatprep.subr.bf16.mxu0 0
        %2585 = vmatpush1.bf16.msra.mxu0 0
        %2586 = vmatprep.subr.bf16.mxu0 0
        %2587 = vmatpush1.bf16.msra.mxu0 0
        %2588 = vmatprep.subr.bf16.mxu0 0
        %2589 = vmatpush1.bf16.msra.mxu0 0
        %2590 = vmatprep.subr.bf16.mxu0 0
        %2591 = vmatpush1.bf16.msra.mxu0 0
        %2592 = vmatprep.mubr.bf16.mxu0 0
        %2593 = vmatmul.mubr.bf16.gmra.mrb[0].mxu0 %v2546
        %v2594 = vpop.f32.mrb[0].mxu0
        %v2595 = vadd.f32 0.0, %v2594
        %v2596 = vpop.f32.mrb[0].mxu0
        %v2597 = vpop.f32.mrb[0].mxu0
        %v2598 = vadd.f32 0.0, %v2597
        %v2599 = vpop.f32.mrb[0].mxu0
        %2600 = vmatprep.mubr.bf16.mxu0 0
        %2601 = vmatmul.mubr.bf16.gmra.mrb[0].mxu0 %v2549
        %v2602 = vpop.f32.mrb[0].mxu0
        %v2603 = vadd.f32 0.0, %v2602
        %v2604 = vpop.f32.mrb[0].mxu0
        %v2605 = vpop.f32.mrb[0].mxu0
        %v2606 = vadd.f32 0.0, %v2605
        %v2607 = vpop.f32.mrb[0].mxu0
        %2608 = vmatprep.mubr.bf16.mxu0 0
        %2609 = vmatmul.mubr.bf16.gmra.mrb[0].mxu0 %v2552
        %v2610 = vpop.f32.mrb[0].mxu0
        %v2611 = vadd.f32 0.0, %v2610
        %v2612 = vpop.f32.mrb[0].mxu0
        %v2613 = vpop.f32.mrb[0].mxu0
        %v2614 = vadd.f32 0.0, %v2613
        %v2615 = vpop.f32.mrb[0].mxu0
        %2616 = vmatprep.mubr.bf16.mxu0 0
        %2617 = vmatmul.mubr.bf16.gmra.mrb[0].mxu0 %v2555
        %v2618 = vpop.f32.mrb[0].mxu0
        %v2619 = vadd.f32 0.0, %v2618
        %v2620 = vpop.f32.mrb[0].mxu0
        %v2621 = vpop.f32.mrb[0].mxu0
        %v2622 = vadd.f32 0.0, %v2621
        %v2623 = vpop.f32.mrb[0].mxu0
        %2624 = vdwg.mxu0
        %2633 = vrot.lane.b32.xlu0 %v2595, 24
        %v2634 = vpop.permute.xlu0 %2633
        %2635 = vrot.lane.b32.xlu0 %v2598, 24
        %v2636 = vpop.permute.xlu0 %2635
        %2637 = vrot.lane.b32.xlu0 %v2603, 24
        %v2638 = vpop.permute.xlu0 %2637
        %2639 = vrot.lane.b32.xlu0 %v2606, 24
        %v2640 = vpop.permute.xlu0 %2639
        %2641 = vrot.lane.b32.xlu0 %v2611, 24
        %v2642 = vpop.permute.xlu0 %2641
        %2643 = vrot.lane.b32.xlu0 %v2614, 24
        %v2644 = vpop.permute.xlu0 %2643
        %2645 = vrot.lane.b32.xlu0 %v2619, 24
        %v2646 = vpop.permute.xlu0 %2645
        %2647 = vrot.lane.b32.xlu0 %v2622, 24
        %v2648 = vpop.permute.xlu0 %2647
        %vm2657 = vcmask 261312
        %2658 = vst.msk [vmem:[#allocation2] sm:$0xff] %vm2657, %v2634
        %2659 = vst.msk [vmem:[#allocation2 + $0x8] sm:$0xff] %vm2657, %v2636
        %2660 = vst.msk [vmem:[#allocation2 + $0x10] sm:$0xff] %vm2657, %v2638
        %2661 = vst.msk [vmem:[#allocation2 + $0x18] sm:$0xff] %vm2657, %v2640
        %2662 = vst.msk [vmem:[#allocation2 + $0x20] sm:$0xff] %vm2657, %v2642
        %2663 = vst.msk [vmem:[#allocation2 + $0x28] sm:$0xff] %vm2657, %v2644
        %2664 = vst.msk [vmem:[#allocation2 + $0x30] sm:$0xff] %vm2657, %v2646
        %2665 = vst.msk [vmem:[#allocation2 + $0x38] sm:$0xff] %vm2657, %v2648
        %v2666 = vrot.slane %v1481, 4
        %v2668 = vsel %vm1482, %v1477, 0
        %v2671 = vsel %vm1482, %v1478, 0
        %v2674 = vsel %vm1482, %v1479, 0
        %v2677 = vsel %vm1482, %v1480, 0
        %v2680 = vsel %vm1482, %v2666, 0
        %2682 = vmatprep.subr.bf16.mxu0 0
        %2683 = vmatpush1.bf16.xpose.msra.mxu0 %v2680
        %2684 = vmatprep.subr.bf16.mxu0 0
        %2685 = vmatpush1.bf16.xpose.msra.mxu0 0
        %2686 = vmatprep.subr.bf16.mxu0 0
        %2687 = vmatpush1.bf16.xpose.msra.mxu0 0
        %2688 = vmatprep.subr.bf16.mxu0 0
        %2689 = vmatpush1.bf16.xpose.msra.mxu0 0
        %2690 = vmatprep.subr.bf16.mxu0 0
        %2691 = vmatpush1.bf16.xpose.msra.mxu0 0
        %2692 = vmatprep.subr.bf16.mxu0 0
        %2693 = vmatpush1.bf16.xpose.msra.mxu0 0
        %2694 = vmatprep.subr.bf16.mxu0 0
        %2695 = vmatpush1.bf16.xpose.msra.mxu0 0
        %2696 = vmatprep.subr.bf16.mxu0 0
        %2697 = vmatpush1.bf16.xpose.msra.mxu0 0
        %2698 = vmatprep.subr.bf16.mxu0 0
        %2699 = vmatpush1.bf16.xpose.msra.mxu0 0
        %2700 = vmatprep.subr.bf16.mxu0 0
        %2701 = vmatpush1.bf16.xpose.msra.mxu0 0
        %2702 = vmatprep.subr.bf16.mxu0 0
        %2703 = vmatpush1.bf16.xpose.msra.mxu0 0
        %2704 = vmatprep.subr.bf16.mxu0 0
        %2705 = vmatpush1.bf16.xpose.msra.mxu0 0
        %2706 = vmatprep.subr.bf16.mxu0 0
        %2707 = vmatpush1.bf16.xpose.msra.mxu0 0
        %2708 = vmatprep.subr.bf16.mxu0 0
        %2709 = vmatpush1.bf16.xpose.msra.mxu0 0
        %2710 = vmatprep.subr.bf16.mxu0 0
        %2711 = vmatpush1.bf16.xpose.msra.mxu0 0
        %2712 = vmatprep.subr.bf16.mxu0 0
        %2713 = vmatpush1.bf16.xpose.msra.mxu0 0
        %2714 = vmatprep.mubr.bf16.mxu0 0
        %2715 = vmatmul.mubr.bf16.gmra.mrb[0].mxu0 %v2668
        %v2716 = vpop.f32.mrb[0].mxu0
        %v2717 = vadd.f32 0.0, %v2716
        %v2718 = vpop.f32.mrb[0].mxu0
        %v2719 = vpop.f32.mrb[0].mxu0
        %v2720 = vadd.f32 0.0, %v2719
        %v2721 = vpop.f32.mrb[0].mxu0
        %2722 = vmatprep.mubr.bf16.mxu0 0
        %2723 = vmatmul.mubr.bf16.gmra.mrb[0].mxu0 %v2671
        %v2724 = vpop.f32.mrb[0].mxu0
        %v2725 = vadd.f32 0.0, %v2724
        %v2726 = vpop.f32.mrb[0].mxu0
        %v2727 = vpop.f32.mrb[0].mxu0
        %v2728 = vadd.f32 0.0, %v2727
        %v2729 = vpop.f32.mrb[0].mxu0
        %2730 = vmatprep.mubr.bf16.mxu0 0
        %2731 = vmatmul.mubr.bf16.gmra.mrb[0].mxu0 %v2674
        %v2732 = vpop.f32.mrb[0].mxu0
        %v2733 = vadd.f32 0.0, %v2732
        %v2734 = vpop.f32.mrb[0].mxu0
        %v2735 = vpop.f32.mrb[0].mxu0
        %v2736 = vadd.f32 0.0, %v2735
        %v2737 = vpop.f32.mrb[0].mxu0
        %2738 = vmatprep.mubr.bf16.mxu0 0
        %2739 = vmatmul.mubr.bf16.gmra.mrb[0].mxu0 %v2677
        %v2740 = vpop.f32.mrb[0].mxu0
        %v2741 = vadd.f32 0.0, %v2740
        %v2742 = vpop.f32.mrb[0].mxu0
        %v2743 = vpop.f32.mrb[0].mxu0
        %v2744 = vadd.f32 0.0, %v2743
        %v2745 = vpop.f32.mrb[0].mxu0
        %2746 = vdwg.mxu0
        %v2747 = vsel %vm1482, %v2717, -inf
        %2748 = vmax.xlane.f32.xlu0 %v2747
        %v2749 = vpop.xlane.xlu0 %2748
        %v2750 = vsel %vm1482, %v2720, -inf
        %2751 = vmax.xlane.f32.xlu0 %v2750
        %v2752 = vpop.xlane.xlu0 %2751
        %v2753 = vsel %vm1482, %v2725, -inf
        %2754 = vmax.xlane.f32.xlu0 %v2753
        %v2755 = vpop.xlane.xlu0 %2754
        %v2756 = vsel %vm1482, %v2728, -inf
        %2757 = vmax.xlane.f32.xlu0 %v2756
        %v2758 = vpop.xlane.xlu0 %2757
        %v2759 = vsel %vm1482, %v2733, -inf
        %2760 = vmax.xlane.f32.xlu0 %v2759
        %v2761 = vpop.xlane.xlu0 %2760
        %v2762 = vsel %vm1482, %v2736, -inf
        %2763 = vmax.xlane.f32.xlu0 %v2762
        %v2764 = vpop.xlane.xlu0 %2763
        %v2765 = vsel %vm1482, %v2741, -inf
        %2766 = vmax.xlane.f32.xlu0 %v2765
        %v2767 = vpop.xlane.xlu0 %2766
        %v2768 = vsel %vm1482, %v2744, -inf
        %2769 = vmax.xlane.f32.xlu0 %v2768
        %v2770 = vpop.xlane.xlu0 %2769
        %v2771 = vsub.f32 %v2717, %v2749
        %v2772 = vsub.f32 %v2720, %v2752
        %v2773 = vsub.f32 %v2725, %v2755
        %v2774 = vsub.f32 %v2728, %v2758
        %v2775 = vsub.f32 %v2733, %v2761
        %v2776 = vsub.f32 %v2736, %v2764
        %v2777 = vsub.f32 %v2741, %v2767
        %v2778 = vsub.f32 %v2744, %v2770
        %v2779 = vmul.f32 %v2771, 1.442695
        %v2780 = vpow.pop %v2779
        %v2781 = vmul.f32 %v2772, 1.442695
        %v2782 = vpow.pop %v2781
        %v2783 = vmul.f32 %v2773, 1.442695
        %v2784 = vpow.pop %v2783
        %v2785 = vmul.f32 %v2774, 1.442695
        %v2786 = vpow.pop %v2785
        %v2787 = vmul.f32 %v2775, 1.442695
        %v2788 = vpow.pop %v2787
        %v2789 = vmul.f32 %v2776, 1.442695
        %v2790 = vpow.pop %v2789
        %v2791 = vmul.f32 %v2777, 1.442695
        %v2792 = vpow.pop %v2791
        %v2793 = vmul.f32 %v2778, 1.442695
        %v2794 = vpow.pop %v2793
        %v2795 = vsel %vm1482, %v2780, 0.0
        %2796 = vadd.xlane.f32.xlu0 %v2795
        %v2797 = vpop.xlane.xlu0 %2796
        %v2798 = vsel %vm1482, %v2782, 0.0
        %2799 = vadd.xlane.f32.xlu0 %v2798
        %v2800 = vpop.xlane.xlu0 %2799
        %v2801 = vsel %vm1482, %v2784, 0.0
        %2802 = vadd.xlane.f32.xlu0 %v2801
        %v2803 = vpop.xlane.xlu0 %2802
        %v2804 = vsel %vm1482, %v2786, 0.0
        %2805 = vadd.xlane.f32.xlu0 %v2804
        %v2806 = vpop.xlane.xlu0 %2805
        %v2807 = vsel %vm1482, %v2788, 0.0
        %2808 = vadd.xlane.f32.xlu0 %v2807
        %v2809 = vpop.xlane.xlu0 %2808
        %v2810 = vsel %vm1482, %v2790, 0.0
        %2811 = vadd.xlane.f32.xlu0 %v2810
        %v2812 = vpop.xlane.xlu0 %2811
        %v2813 = vsel %vm1482, %v2792, 0.0
        %2814 = vadd.xlane.f32.xlu0 %v2813
        %v2815 = vpop.xlane.xlu0 %2814
        %v2816 = vsel %vm1482, %v2794, 0.0
        %2817 = vadd.xlane.f32.xlu0 %v2816
        %v2818 = vpop.xlane.xlu0 %2817
        %v2819 = vrcp.pop %v2797
        %v2820 = vrcp.pop %v2800
        %v2821 = vrcp.pop %v2803
        %v2822 = vrcp.pop %v2806
        %v2823 = vrcp.pop %v2809
        %v2824 = vrcp.pop %v2812
        %v2825 = vrcp.pop %v2815
        %v2826 = vrcp.pop %v2818
        %v2827 = vmul.f32 %v2780, %v2819
        %v2828 = vmul.f32 %v2782, %v2820
        %v2829 = vmul.f32 %v2784, %v2821
        %v2830 = vmul.f32 %v2786, %v2822
        %v2831 = vmul.f32 %v2788, %v2823
        %v2832 = vmul.f32 %v2790, %v2824
        %v2833 = vmul.f32 %v2792, %v2825
        %v2834 = vmul.f32 %v2794, %v2826
        %v2835 = vpack.c.bf16 %v2828, %v2827
        %v2836 = vpack.c.bf16 %v2830, %v2829
        %v2837 = vpack.c.bf16 %v2832, %v2831
        %v2838 = vpack.c.bf16 %v2834, %v2833
        %2839 = vrot.lane.b32.xlu0 %v2666, 96
        %v2840 = vpop.permute.xlu0 %2839
        %v2842 = vsel %vm1482, %v2835, 0
        %v2845 = vsel %vm1482, %v2836, 0
        %v2848 = vsel %vm1482, %v2837, 0
        %v2851 = vsel %vm1482, %v2838, 0
        %v2854 = vsel %vm1670, %v2840, 0
        %2856 = vmatprep.subr.bf16.mxu0 0
        %2857 = vmatpush1.bf16.msra.mxu0 %v2854
        %2858 = vmatprep.subr.bf16.mxu0 0
        %2859 = vmatpush1.bf16.msra.mxu0 0
        %2860 = vmatprep.subr.bf16.mxu0 0
        %2861 = vmatpush1.bf16.msra.mxu0 0
        %2862 = vmatprep.subr.bf16.mxu0 0
        %2863 = vmatpush1.bf16.msra.mxu0 0
        %2864 = vmatprep.subr.bf16.mxu0 0
        %2865 = vmatpush1.bf16.msra.mxu0 0
        %2866 = vmatprep.subr.bf16.mxu0 0
        %2867 = vmatpush1.bf16.msra.mxu0 0
        %2868 = vmatprep.subr.bf16.mxu0 0
        %2869 = vmatpush1.bf16.msra.mxu0 0
        %2870 = vmatprep.subr.bf16.mxu0 0
        %2871 = vmatpush1.bf16.msra.mxu0 0
        %2872 = vmatprep.subr.bf16.mxu0 0
        %2873 = vmatpush1.bf16.msra.mxu0 0
        %2874 = vmatprep.subr.bf16.mxu0 0
        %2875 = vmatpush1.bf16.msra.mxu0 0
        %2876 = vmatprep.subr.bf16.mxu0 0
        %2877 = vmatpush1.bf16.msra.mxu0 0
        %2878 = vmatprep.subr.bf16.mxu0 0
        %2879 = vmatpush1.bf16.msra.mxu0 0
        %2880 = vmatprep.subr.bf16.mxu0 0
        %2881 = vmatpush1.bf16.msra.mxu0 0
        %2882 = vmatprep.subr.bf16.mxu0 0
        %2883 = vmatpush1.bf16.msra.mxu0 0
        %2884 = vmatprep.subr.bf16.mxu0 0
        %2885 = vmatpush1.bf16.msra.mxu0 0
        %2886 = vmatprep.subr.bf16.mxu0 0
        %2887 = vmatpush1.bf16.msra.mxu0 0
        %2888 = vmatprep.mubr.bf16.mxu0 0
        %2889 = vmatmul.mubr.bf16.gmra.mrb[0].mxu0 %v2842
        %v2890 = vpop.f32.mrb[0].mxu0
        %v2891 = vadd.f32 0.0, %v2890
        %v2892 = vpop.f32.mrb[0].mxu0
        %v2893 = vpop.f32.mrb[0].mxu0
        %v2894 = vadd.f32 0.0, %v2893
        %v2895 = vpop.f32.mrb[0].mxu0
        %2896 = vmatprep.mubr.bf16.mxu0 0
        %2897 = vmatmul.mubr.bf16.gmra.mrb[0].mxu0 %v2845
        %v2898 = vpop.f32.mrb[0].mxu0
        %v2899 = vadd.f32 0.0, %v2898
        %v2900 = vpop.f32.mrb[0].mxu0
        %v2901 = vpop.f32.mrb[0].mxu0
        %v2902 = vadd.f32 0.0, %v2901
        %v2903 = vpop.f32.mrb[0].mxu0
        %2904 = vmatprep.mubr.bf16.mxu0 0
        %2905 = vmatmul.mubr.bf16.gmra.mrb[0].mxu0 %v2848
        %v2906 = vpop.f32.mrb[0].mxu0
        %v2907 = vadd.f32 0.0, %v2906
        %v2908 = vpop.f32.mrb[0].mxu0
        %v2909 = vpop.f32.mrb[0].mxu0
        %v2910 = vadd.f32 0.0, %v2909
        %v2911 = vpop.f32.mrb[0].mxu0
        %2912 = vmatprep.mubr.bf16.mxu0 0
        %2913 = vmatmul.mubr.bf16.gmra.mrb[0].mxu0 %v2851
        %v2914 = vpop.f32.mrb[0].mxu0
        %v2915 = vadd.f32 0.0, %v2914
        %v2916 = vpop.f32.mrb[0].mxu0
        %v2917 = vpop.f32.mrb[0].mxu0
        %v2918 = vadd.f32 0.0, %v2917
        %v2919 = vpop.f32.mrb[0].mxu0
        %2920 = vdwg.mxu0
        %2921 = vst.msk [vmem:[#allocation2 + $0x40] sm:$0xff] %vm1482, %v2891
        %2922 = vst.msk [vmem:[#allocation2 + $0x48] sm:$0xff] %vm1482, %v2894
        %2923 = vst.msk [vmem:[#allocation2 + $0x50] sm:$0xff] %vm1482, %v2899
        %2924 = vst.msk [vmem:[#allocation2 + $0x58] sm:$0xff] %vm1482, %v2902
        %2925 = vst.msk [vmem:[#allocation2 + $0x60] sm:$0xff] %vm1482, %v2907
        %2926 = vst.msk [vmem:[#allocation2 + $0x68] sm:$0xff] %vm1482, %v2910
        %2927 = vst.msk [vmem:[#allocation2 + $0x70] sm:$0xff] %vm1482, %v2915
        %2928 = vst.msk [vmem:[#allocation2 + $0x78] sm:$0xff] %vm1482, %v2918
        %2933 = vrot.lane.b32.xlu0 %v1477, 120
        %v2934 = vpop.permute.xlu0 %2933
        %2935 = vrot.lane.b32.xlu0 %v1478, 120
        %v2936 = vpop.permute.xlu0 %2935
        %2937 = vrot.lane.b32.xlu0 %v1479, 120
        %v2938 = vpop.permute.xlu0 %2937
        %2939 = vrot.lane.b32.xlu0 %v1480, 120
        %v2940 = vpop.permute.xlu0 %2939
        %2941 = vrot.lane.b32.xlu0 %v2666, 120
        %v2942 = vpop.permute.xlu0 %2941
        %v2944 = vsel %vm1482, %v2934, 0
        %v2947 = vsel %vm1482, %v2936, 0
        %v2950 = vsel %vm1482, %v2938, 0
        %v2953 = vsel %vm1482, %v2940, 0
        %v2956 = vsel %vm1482, %v2942, 0
        %2958 = vmatprep.subr.bf16.mxu0 0
        %2959 = vmatpush1.bf16.xpose.msra.mxu0 %v2956
        %2960 = vmatprep.subr.bf16.mxu0 0
        %2961 = vmatpush1.bf16.xpose.msra.mxu0 0
        %2962 = vmatprep.subr.bf16.mxu0 0
        %2963 = vmatpush1.bf16.xpose.msra.mxu0 0
        %2964 = vmatprep.subr.bf16.mxu0 0
        %2965 = vmatpush1.bf16.xpose.msra.mxu0 0
        %2966 = vmatprep.subr.bf16.mxu0 0
        %2967 = vmatpush1.bf16.xpose.msra.mxu0 0
        %2968 = vmatprep.subr.bf16.mxu0 0
        %2969 = vmatpush1.bf16.xpose.msra.mxu0 0
        %2970 = vmatprep.subr.bf16.mxu0 0
        %2971 = vmatpush1.bf16.xpose.msra.mxu0 0
        %2972 = vmatprep.subr.bf16.mxu0 0
        %2973 = vmatpush1.bf16.xpose.msra.mxu0 0
        %2974 = vmatprep.subr.bf16.mxu0 0
        %2975 = vmatpush1.bf16.xpose.msra.mxu0 0
        %2976 = vmatprep.subr.bf16.mxu0 0
        %2977 = vmatpush1.bf16.xpose.msra.mxu0 0
        %2978 = vmatprep.subr.bf16.mxu0 0
        %2979 = vmatpush1.bf16.xpose.msra.mxu0 0
        %2980 = vmatprep.subr.bf16.mxu0 0
        %2981 = vmatpush1.bf16.xpose.msra.mxu0 0
        %2982 = vmatprep.subr.bf16.mxu0 0
        %2983 = vmatpush1.bf16.xpose.msra.mxu0 0
        %2984 = vmatprep.subr.bf16.mxu0 0
        %2985 = vmatpush1.bf16.xpose.msra.mxu0 0
        %2986 = vmatprep.subr.bf16.mxu0 0
        %2987 = vmatpush1.bf16.xpose.msra.mxu0 0
        %2988 = vmatprep.subr.bf16.mxu0 0
        %2989 = vmatpush1.bf16.xpose.msra.mxu0 0
        %2990 = vmatprep.mubr.bf16.mxu0 0
        %2991 = vmatmul.mubr.bf16.gmra.mrb[0].mxu0 %v2944
        %v2992 = vpop.f32.mrb[0].mxu0
        %v2993 = vadd.f32 0.0, %v2992
        %v2994 = vpop.f32.mrb[0].mxu0
        %v2995 = vpop.f32.mrb[0].mxu0
        %v2996 = vadd.f32 0.0, %v2995
        %v2997 = vpop.f32.mrb[0].mxu0
        %2998 = vmatprep.mubr.bf16.mxu0 0
        %2999 = vmatmul.mubr.bf16.gmra.mrb[0].mxu0 %v2947
        %v3000 = vpop.f32.mrb[0].mxu0
        %v3001 = vadd.f32 0.0, %v3000
        %v3002 = vpop.f32.mrb[0].mxu0
        %v3003 = vpop.f32.mrb[0].mxu0
        %v3004 = vadd.f32 0.0, %v3003
        %v3005 = vpop.f32.mrb[0].mxu0
        %3006 = vmatprep.mubr.bf16.mxu0 0
        %3007 = vmatmul.mubr.bf16.gmra.mrb[0].mxu0 %v2950
        %v3008 = vpop.f32.mrb[0].mxu0
        %v3009 = vadd.f32 0.0, %v3008
        %v3010 = vpop.f32.mrb[0].mxu0
        %v3011 = vpop.f32.mrb[0].mxu0
        %v3012 = vadd.f32 0.0, %v3011
        %v3013 = vpop.f32.mrb[0].mxu0
        %3014 = vmatprep.mubr.bf16.mxu0 0
        %3015 = vmatmul.mubr.bf16.gmra.mrb[0].mxu0 %v2953
        %v3016 = vpop.f32.mrb[0].mxu0
        %v3017 = vadd.f32 0.0, %v3016
        %v3018 = vpop.f32.mrb[0].mxu0
        %v3019 = vpop.f32.mrb[0].mxu0
        %v3020 = vadd.f32 0.0, %v3019
        %v3021 = vpop.f32.mrb[0].mxu0
        %3022 = vdwg.mxu0
        %v3023 = vsel %vm1482, %v2993, -inf
        %3024 = vmax.xlane.f32.xlu0 %v3023
        %v3025 = vpop.xlane.xlu0 %3024
        %v3026 = vsel %vm1482, %v2996, -inf
        %3027 = vmax.xlane.f32.xlu0 %v3026
        %v3028 = vpop.xlane.xlu0 %3027
        %v3029 = vsel %vm1482, %v3001, -inf
        %3030 = vmax.xlane.f32.xlu0 %v3029
        %v3031 = vpop.xlane.xlu0 %3030
        %v3032 = vsel %vm1482, %v3004, -inf
        %3033 = vmax.xlane.f32.xlu0 %v3032
        %v3034 = vpop.xlane.xlu0 %3033
        %v3035 = vsel %vm1482, %v3009, -inf
        %3036 = vmax.xlane.f32.xlu0 %v3035
        %v3037 = vpop.xlane.xlu0 %3036
        %v3038 = vsel %vm1482, %v3012, -inf
        %3039 = vmax.xlane.f32.xlu0 %v3038
        %v3040 = vpop.xlane.xlu0 %3039
        %v3041 = vsel %vm1482, %v3017, -inf
        %3042 = vmax.xlane.f32.xlu0 %v3041
        %v3043 = vpop.xlane.xlu0 %3042
        %v3044 = vsel %vm1482, %v3020, -inf
        %3045 = vmax.xlane.f32.xlu0 %v3044
        %v3046 = vpop.xlane.xlu0 %3045
        %v3047 = vsub.f32 %v2993, %v3025
        %v3048 = vsub.f32 %v2996, %v3028
        %v3049 = vsub.f32 %v3001, %v3031
        %v3050 = vsub.f32 %v3004, %v3034
        %v3051 = vsub.f32 %v3009, %v3037
        %v3052 = vsub.f32 %v3012, %v3040
        %v3053 = vsub.f32 %v3017, %v3043
        %v3054 = vsub.f32 %v3020, %v3046
        %v3055 = vmul.f32 %v3047, 1.442695
        %v3056 = vpow.pop %v3055
        %v3057 = vmul.f32 %v3048, 1.442695
        %v3058 = vpow.pop %v3057
        %v3059 = vmul.f32 %v3049, 1.442695
        %v3060 = vpow.pop %v3059
        %v3061 = vmul.f32 %v3050, 1.442695
        %v3062 = vpow.pop %v3061
        %v3063 = vmul.f32 %v3051, 1.442695
        %v3064 = vpow.pop %v3063
        %v3065 = vmul.f32 %v3052, 1.442695
        %v3066 = vpow.pop %v3065
        %v3067 = vmul.f32 %v3053, 1.442695
        %v3068 = vpow.pop %v3067
        %v3069 = vmul.f32 %v3054, 1.442695
        %v3070 = vpow.pop %v3069
        %v3071 = vsel %vm1482, %v3056, 0.0
        %3072 = vadd.xlane.f32.xlu0 %v3071
        %v3073 = vpop.xlane.xlu0 %3072
        %v3074 = vsel %vm1482, %v3058, 0.0
        %3075 = vadd.xlane.f32.xlu0 %v3074
        %v3076 = vpop.xlane.xlu0 %3075
        %v3077 = vsel %vm1482, %v3060, 0.0
        %3078 = vadd.xlane.f32.xlu0 %v3077
        %v3079 = vpop.xlane.xlu0 %3078
        %v3080 = vsel %vm1482, %v3062, 0.0
        %3081 = vadd.xlane.f32.xlu0 %v3080
        %v3082 = vpop.xlane.xlu0 %3081
        %v3083 = vsel %vm1482, %v3064, 0.0
        %3084 = vadd.xlane.f32.xlu0 %v3083
        %v3085 = vpop.xlane.xlu0 %3084
        %v3086 = vsel %vm1482, %v3066, 0.0
        %3087 = vadd.xlane.f32.xlu0 %v3086
        %v3088 = vpop.xlane.xlu0 %3087
        %v3089 = vsel %vm1482, %v3068, 0.0
        %3090 = vadd.xlane.f32.xlu0 %v3089
        %v3091 = vpop.xlane.xlu0 %3090
        %v3092 = vsel %vm1482, %v3070, 0.0
        %3093 = vadd.xlane.f32.xlu0 %v3092
        %v3094 = vpop.xlane.xlu0 %3093
        %v3095 = vrcp.pop %v3073
        %v3096 = vrcp.pop %v3076
        %v3097 = vrcp.pop %v3079
        %v3098 = vrcp.pop %v3082
        %v3099 = vrcp.pop %v3085
        %v3100 = vrcp.pop %v3088
        %v3101 = vrcp.pop %v3091
        %v3102 = vrcp.pop %v3094
        %v3103 = vmul.f32 %v3056, %v3095
        %v3104 = vmul.f32 %v3058, %v3096
        %v3105 = vmul.f32 %v3060, %v3097
        %v3106 = vmul.f32 %v3062, %v3098
        %v3107 = vmul.f32 %v3064, %v3099
        %v3108 = vmul.f32 %v3066, %v3100
        %v3109 = vmul.f32 %v3068, %v3101
        %v3110 = vmul.f32 %v3070, %v3102
        %v3111 = vpack.c.bf16 %v3104, %v3103
        %v3112 = vpack.c.bf16 %v3106, %v3105
        %v3113 = vpack.c.bf16 %v3108, %v3107
        %v3114 = vpack.c.bf16 %v3110, %v3109
        %3115 = vrot.lane.b32.xlu0 %v2666, 88
        %v3116 = vpop.permute.xlu0 %3115
        %v3118 = vsel %vm1482, %v3111, 0
        %v3121 = vsel %vm1482, %v3112, 0
        %v3124 = vsel %vm1482, %v3113, 0
        %v3127 = vsel %vm1482, %v3114, 0
        %v3130 = vsel %vm1670, %v3116, 0
        %3132 = vmatprep.subr.bf16.mxu0 0
        %3133 = vmatpush1.bf16.msra.mxu0 %v3130
        %3134 = vmatprep.subr.bf16.mxu0 0
        %3135 = vmatpush1.bf16.msra.mxu0 0
        %3136 = vmatprep.subr.bf16.mxu0 0
        %3137 = vmatpush1.bf16.msra.mxu0 0
        %3138 = vmatprep.subr.bf16.mxu0 0
        %3139 = vmatpush1.bf16.msra.mxu0 0
        %3140 = vmatprep.subr.bf16.mxu0 0
        %3141 = vmatpush1.bf16.msra.mxu0 0
        %3142 = vmatprep.subr.bf16.mxu0 0
        %3143 = vmatpush1.bf16.msra.mxu0 0
        %3144 = vmatprep.subr.bf16.mxu0 0
        %3145 = vmatpush1.bf16.msra.mxu0 0
        %3146 = vmatprep.subr.bf16.mxu0 0
        %3147 = vmatpush1.bf16.msra.mxu0 0
        %3148 = vmatprep.subr.bf16.mxu0 0
        %3149 = vmatpush1.bf16.msra.mxu0 0
        %3150 = vmatprep.subr.bf16.mxu0 0
        %3151 = vmatpush1.bf16.msra.mxu0 0
        %3152 = vmatprep.subr.bf16.mxu0 0
        %3153 = vmatpush1.bf16.msra.mxu0 0
        %3154 = vmatprep.subr.bf16.mxu0 0
        %3155 = vmatpush1.bf16.msra.mxu0 0
        %3156 = vmatprep.subr.bf16.mxu0 0
        %3157 = vmatpush1.bf16.msra.mxu0 0
        %3158 = vmatprep.subr.bf16.mxu0 0
        %3159 = vmatpush1.bf16.msra.mxu0 0
        %3160 = vmatprep.subr.bf16.mxu0 0
        %3161 = vmatpush1.bf16.msra.mxu0 0
        %3162 = vmatprep.subr.bf16.mxu0 0
        %3163 = vmatpush1.bf16.msra.mxu0 0
        %3164 = vmatprep.mubr.bf16.mxu0 0
        %3165 = vmatmul.mubr.bf16.gmra.mrb[0].mxu0 %v3118
        %v3166 = vpop.f32.mrb[0].mxu0
        %v3167 = vadd.f32 0.0, %v3166
        %v3168 = vpop.f32.mrb[0].mxu0
        %v3169 = vpop.f32.mrb[0].mxu0
        %v3170 = vadd.f32 0.0, %v3169
        %v3171 = vpop.f32.mrb[0].mxu0
        %3172 = vmatprep.mubr.bf16.mxu0 0
        %3173 = vmatmul.mubr.bf16.gmra.mrb[0].mxu0 %v3121
        %v3174 = vpop.f32.mrb[0].mxu0
        %v3175 = vadd.f32 0.0, %v3174
        %v3176 = vpop.f32.mrb[0].mxu0
        %v3177 = vpop.f32.mrb[0].mxu0
        %v3178 = vadd.f32 0.0, %v3177
        %v3179 = vpop.f32.mrb[0].mxu0
        %3180 = vmatprep.mubr.bf16.mxu0 0
        %3181 = vmatmul.mubr.bf16.gmra.mrb[0].mxu0 %v3124
        %v3182 = vpop.f32.mrb[0].mxu0
        %v3183 = vadd.f32 0.0, %v3182
        %v3184 = vpop.f32.mrb[0].mxu0
        %v3185 = vpop.f32.mrb[0].mxu0
        %v3186 = vadd.f32 0.0, %v3185
        %v3187 = vpop.f32.mrb[0].mxu0
        %3188 = vmatprep.mubr.bf16.mxu0 0
        %3189 = vmatmul.mubr.bf16.gmra.mrb[0].mxu0 %v3127
        %v3190 = vpop.f32.mrb[0].mxu0
        %v3191 = vadd.f32 0.0, %v3190
        %v3192 = vpop.f32.mrb[0].mxu0
        %v3193 = vpop.f32.mrb[0].mxu0
        %v3194 = vadd.f32 0.0, %v3193
        %v3195 = vpop.f32.mrb[0].mxu0
        %3196 = vdwg.mxu0
        %3205 = vrot.lane.b32.xlu0 %v3167, 8
        %v3206 = vpop.permute.xlu0 %3205
        %3207 = vrot.lane.b32.xlu0 %v3170, 8
        %v3208 = vpop.permute.xlu0 %3207
        %3209 = vrot.lane.b32.xlu0 %v3175, 8
        %v3210 = vpop.permute.xlu0 %3209
        %3211 = vrot.lane.b32.xlu0 %v3178, 8
        %v3212 = vpop.permute.xlu0 %3211
        %3213 = vrot.lane.b32.xlu0 %v3183, 8
        %v3214 = vpop.permute.xlu0 %3213
        %3215 = vrot.lane.b32.xlu0 %v3186, 8
        %v3216 = vpop.permute.xlu0 %3215
        %3217 = vrot.lane.b32.xlu0 %v3191, 8
        %v3218 = vpop.permute.xlu0 %3217
        %3219 = vrot.lane.b32.xlu0 %v3194, 8
        %v3220 = vpop.permute.xlu0 %3219
        %3229 = vst.msk [vmem:[#allocation2 + $0x40] sm:$0xff] %vm2047, %v3206
        %3230 = vst.msk [vmem:[#allocation2 + $0x48] sm:$0xff] %vm2047, %v3208
        %3231 = vst.msk [vmem:[#allocation2 + $0x50] sm:$0xff] %vm2047, %v3210
        %3232 = vst.msk [vmem:[#allocation2 + $0x58] sm:$0xff] %vm2047, %v3212
        %3233 = vst.msk [vmem:[#allocation2 + $0x60] sm:$0xff] %vm2047, %v3214
        %3234 = vst.msk [vmem:[#allocation2 + $0x68] sm:$0xff] %vm2047, %v3216
        %3235 = vst.msk [vmem:[#allocation2 + $0x70] sm:$0xff] %vm2047, %v3218
        %3236 = vst.msk [vmem:[#allocation2 + $0x78] sm:$0xff] %vm2047, %v3220
        %3237 = vrot.lane.b32.xlu0 %v1477, 112
        %v3238 = vpop.permute.xlu0 %3237
        %3239 = vrot.lane.b32.xlu0 %v1478, 112
        %v3240 = vpop.permute.xlu0 %3239
        %3241 = vrot.lane.b32.xlu0 %v1479, 112
        %v3242 = vpop.permute.xlu0 %3241
        %3243 = vrot.lane.b32.xlu0 %v1480, 112
        %v3244 = vpop.permute.xlu0 %3243
        %3245 = vrot.lane.b32.xlu0 %v2666, 112
        %v3246 = vpop.permute.xlu0 %3245
        %v3248 = vsel %vm1482, %v3238, 0
        %v3251 = vsel %vm1482, %v3240, 0
        %v3254 = vsel %vm1482, %v3242, 0
        %v3257 = vsel %vm1482, %v3244, 0
        %v3260 = vsel %vm1482, %v3246, 0
        %3262 = vmatprep.subr.bf16.mxu0 0
        %3263 = vmatpush1.bf16.xpose.msra.mxu0 %v3260
        %3264 = vmatprep.subr.bf16.mxu0 0
        %3265 = vmatpush1.bf16.xpose.msra.mxu0 0
        %3266 = vmatprep.subr.bf16.mxu0 0
        %3267 = vmatpush1.bf16.xpose.msra.mxu0 0
        %3268 = vmatprep.subr.bf16.mxu0 0
        %3269 = vmatpush1.bf16.xpose.msra.mxu0 0
        %3270 = vmatprep.subr.bf16.mxu0 0
        %3271 = vmatpush1.bf16.xpose.msra.mxu0 0
        %3272 = vmatprep.subr.bf16.mxu0 0
        %3273 = vmatpush1.bf16.xpose.msra.mxu0 0
        %3274 = vmatprep.subr.bf16.mxu0 0
        %3275 = vmatpush1.bf16.xpose.msra.mxu0 0
        %3276 = vmatprep.subr.bf16.mxu0 0
        %3277 = vmatpush1.bf16.xpose.msra.mxu0 0
        %3278 = vmatprep.subr.bf16.mxu0 0
        %3279 = vmatpush1.bf16.xpose.msra.mxu0 0
        %3280 = vmatprep.subr.bf16.mxu0 0
        %3281 = vmatpush1.bf16.xpose.msra.mxu0 0
        %3282 = vmatprep.subr.bf16.mxu0 0
        %3283 = vmatpush1.bf16.xpose.msra.mxu0 0
        %3284 = vmatprep.subr.bf16.mxu0 0
        %3285 = vmatpush1.bf16.xpose.msra.mxu0 0
        %3286 = vmatprep.subr.bf16.mxu0 0
        %3287 = vmatpush1.bf16.xpose.msra.mxu0 0
        %3288 = vmatprep.subr.bf16.mxu0 0
        %3289 = vmatpush1.bf16.xpose.msra.mxu0 0
        %3290 = vmatprep.subr.bf16.mxu0 0
        %3291 = vmatpush1.bf16.xpose.msra.mxu0 0
        %3292 = vmatprep.subr.bf16.mxu0 0
        %3293 = vmatpush1.bf16.xpose.msra.mxu0 0
        %3294 = vmatprep.mubr.bf16.mxu0 0
        %3295 = vmatmul.mubr.bf16.gmra.mrb[0].mxu0 %v3248
        %v3296 = vpop.f32.mrb[0].mxu0
        %v3297 = vadd.f32 0.0, %v3296
        %v3298 = vpop.f32.mrb[0].mxu0
        %v3299 = vpop.f32.mrb[0].mxu0
        %v3300 = vadd.f32 0.0, %v3299
        %v3301 = vpop.f32.mrb[0].mxu0
        %3302 = vmatprep.mubr.bf16.mxu0 0
        %3303 = vmatmul.mubr.bf16.gmra.mrb[0].mxu0 %v3251
        %v3304 = vpop.f32.mrb[0].mxu0
        %v3305 = vadd.f32 0.0, %v3304
        %v3306 = vpop.f32.mrb[0].mxu0
        %v3307 = vpop.f32.mrb[0].mxu0
        %v3308 = vadd.f32 0.0, %v3307
        %v3309 = vpop.f32.mrb[0].mxu0
        %3310 = vmatprep.mubr.bf16.mxu0 0
        %3311 = vmatmul.mubr.bf16.gmra.mrb[0].mxu0 %v3254
        %v3312 = vpop.f32.mrb[0].mxu0
        %v3313 = vadd.f32 0.0, %v3312
        %v3314 = vpop.f32.mrb[0].mxu0
        %v3315 = vpop.f32.mrb[0].mxu0
        %v3316 = vadd.f32 0.0, %v3315
        %v3317 = vpop.f32.mrb[0].mxu0
        %3318 = vmatprep.mubr.bf16.mxu0 0
        %3319 = vmatmul.mubr.bf16.gmra.mrb[0].mxu0 %v3257
        %v3320 = vpop.f32.mrb[0].mxu0
        %v3321 = vadd.f32 0.0, %v3320
        %v3322 = vpop.f32.mrb[0].mxu0
        %v3323 = vpop.f32.mrb[0].mxu0
        %v3324 = vadd.f32 0.0, %v3323
        %v3325 = vpop.f32.mrb[0].mxu0
        %3326 = vdwg.mxu0
        %v3327 = vsel %vm1482, %v3297, -inf
        %3328 = vmax.xlane.f32.xlu0 %v3327
        %v3329 = vpop.xlane.xlu0 %3328
        %v3330 = vsel %vm1482, %v3300, -inf
        %3331 = vmax.xlane.f32.xlu0 %v3330
        %v3332 = vpop.xlane.xlu0 %3331
        %v3333 = vsel %vm1482, %v3305, -inf
        %3334 = vmax.xlane.f32.xlu0 %v3333
        %v3335 = vpop.xlane.xlu0 %3334
        %v3336 = vsel %vm1482, %v3308, -inf
        %3337 = vmax.xlane.f32.xlu0 %v3336
        %v3338 = vpop.xlane.xlu0 %3337
        %v3339 = vsel %vm1482, %v3313, -inf
        %3340 = vmax.xlane.f32.xlu0 %v3339
        %v3341 = vpop.xlane.xlu0 %3340
        %v3342 = vsel %vm1482, %v3316, -inf
        %3343 = vmax.xlane.f32.xlu0 %v3342
        %v3344 = vpop.xlane.xlu0 %3343
        %v3345 = vsel %vm1482, %v3321, -inf
        %3346 = vmax.xlane.f32.xlu0 %v3345
        %v3347 = vpop.xlane.xlu0 %3346
        %v3348 = vsel %vm1482, %v3324, -inf
        %3349 = vmax.xlane.f32.xlu0 %v3348
        %v3350 = vpop.xlane.xlu0 %3349
        %v3351 = vsub.f32 %v3297, %v3329
        %v3352 = vsub.f32 %v3300, %v3332
        %v3353 = vsub.f32 %v3305, %v3335
        %v3354 = vsub.f32 %v3308, %v3338
        %v3355 = vsub.f32 %v3313, %v3341
        %v3356 = vsub.f32 %v3316, %v3344
        %v3357 = vsub.f32 %v3321, %v3347
        %v3358 = vsub.f32 %v3324, %v3350
        %v3359 = vmul.f32 %v3351, 1.442695
        %v3360 = vpow.pop %v3359
        %v3361 = vmul.f32 %v3352, 1.442695
        %v3362 = vpow.pop %v3361
        %v3363 = vmul.f32 %v3353, 1.442695
        %v3364 = vpow.pop %v3363
        %v3365 = vmul.f32 %v3354, 1.442695
        %v3366 = vpow.pop %v3365
        %v3367 = vmul.f32 %v3355, 1.442695
        %v3368 = vpow.pop %v3367
        %v3369 = vmul.f32 %v3356, 1.442695
        %v3370 = vpow.pop %v3369
        %v3371 = vmul.f32 %v3357, 1.442695
        %v3372 = vpow.pop %v3371
        %v3373 = vmul.f32 %v3358, 1.442695
        %v3374 = vpow.pop %v3373
        %v3375 = vsel %vm1482, %v3360, 0.0
        %3376 = vadd.xlane.f32.xlu0 %v3375
        %v3377 = vpop.xlane.xlu0 %3376
        %v3378 = vsel %vm1482, %v3362, 0.0
        %3379 = vadd.xlane.f32.xlu0 %v3378
        %v3380 = vpop.xlane.xlu0 %3379
        %v3381 = vsel %vm1482, %v3364, 0.0
        %3382 = vadd.xlane.f32.xlu0 %v3381
        %v3383 = vpop.xlane.xlu0 %3382
        %v3384 = vsel %vm1482, %v3366, 0.0
        %3385 = vadd.xlane.f32.xlu0 %v3384
        %v3386 = vpop.xlane.xlu0 %3385
        %v3387 = vsel %vm1482, %v3368, 0.0
        %3388 = vadd.xlane.f32.xlu0 %v3387
        %v3389 = vpop.xlane.xlu0 %3388
        %v3390 = vsel %vm1482, %v3370, 0.0
        %3391 = vadd.xlane.f32.xlu0 %v3390
        %v3392 = vpop.xlane.xlu0 %3391
        %v3393 = vsel %vm1482, %v3372, 0.0
        %3394 = vadd.xlane.f32.xlu0 %v3393
        %v3395 = vpop.xlane.xlu0 %3394
        %v3396 = vsel %vm1482, %v3374, 0.0
        %3397 = vadd.xlane.f32.xlu0 %v3396
        %v3398 = vpop.xlane.xlu0 %3397
        %v3399 = vrcp.pop %v3377
        %v3400 = vrcp.pop %v3380
        %v3401 = vrcp.pop %v3383
        %v3402 = vrcp.pop %v3386
        %v3403 = vrcp.pop %v3389
        %v3404 = vrcp.pop %v3392
        %v3405 = vrcp.pop %v3395
        %v3406 = vrcp.pop %v3398
        %v3407 = vmul.f32 %v3360, %v3399
        %v3408 = vmul.f32 %v3362, %v3400
        %v3409 = vmul.f32 %v3364, %v3401
        %v3410 = vmul.f32 %v3366, %v3402
        %v3411 = vmul.f32 %v3368, %v3403
        %v3412 = vmul.f32 %v3370, %v3404
        %v3413 = vmul.f32 %v3372, %v3405
        %v3414 = vmul.f32 %v3374, %v3406
        %v3415 = vpack.c.bf16 %v3408, %v3407
        %v3416 = vpack.c.bf16 %v3410, %v3409
        %v3417 = vpack.c.bf16 %v3412, %v3411
        %v3418 = vpack.c.bf16 %v3414, %v3413
        %3419 = vrot.lane.b32.xlu0 %v2666, 80
        %v3420 = vpop.permute.xlu0 %3419
        %v3422 = vsel %vm1482, %v3415, 0
        %v3425 = vsel %vm1482, %v3416, 0
        %v3428 = vsel %vm1482, %v3417, 0
        %v3431 = vsel %vm1482, %v3418, 0
        %v3434 = vsel %vm1670, %v3420, 0
        %3436 = vmatprep.subr.bf16.mxu0 0
        %3437 = vmatpush1.bf16.msra.mxu0 %v3434
        %3438 = vmatprep.subr.bf16.mxu0 0
        %3439 = vmatpush1.bf16.msra.mxu0 0
        %3440 = vmatprep.subr.bf16.mxu0 0
        %3441 = vmatpush1.bf16.msra.mxu0 0
        %3442 = vmatprep.subr.bf16.mxu0 0
        %3443 = vmatpush1.bf16.msra.mxu0 0
        %3444 = vmatprep.subr.bf16.mxu0 0
        %3445 = vmatpush1.bf16.msra.mxu0 0
        %3446 = vmatprep.subr.bf16.mxu0 0
        %3447 = vmatpush1.bf16.msra.mxu0 0
        %3448 = vmatprep.subr.bf16.mxu0 0
        %3449 = vmatpush1.bf16.msra.mxu0 0
        %3450 = vmatprep.subr.bf16.mxu0 0
        %3451 = vmatpush1.bf16.msra.mxu0 0
        %3452 = vmatprep.subr.bf16.mxu0 0
        %3453 = vmatpush1.bf16.msra.mxu0 0
        %3454 = vmatprep.subr.bf16.mxu0 0
        %3455 = vmatpush1.bf16.msra.mxu0 0
        %3456 = vmatprep.subr.bf16.mxu0 0
        %3457 = vmatpush1.bf16.msra.mxu0 0
        %3458 = vmatprep.subr.bf16.mxu0 0
        %3459 = vmatpush1.bf16.msra.mxu0 0
        %3460 = vmatprep.subr.bf16.mxu0 0
        %3461 = vmatpush1.bf16.msra.mxu0 0
        %3462 = vmatprep.subr.bf16.mxu0 0
        %3463 = vmatpush1.bf16.msra.mxu0 0
        %3464 = vmatprep.subr.bf16.mxu0 0
        %3465 = vmatpush1.bf16.msra.mxu0 0
        %3466 = vmatprep.subr.bf16.mxu0 0
        %3467 = vmatpush1.bf16.msra.mxu0 0
        %3468 = vmatprep.mubr.bf16.mxu0 0
        %3469 = vmatmul.mubr.bf16.gmra.mrb[0].mxu0 %v3422
        %v3470 = vpop.f32.mrb[0].mxu0
        %v3471 = vadd.f32 0.0, %v3470
        %v3472 = vpop.f32.mrb[0].mxu0
        %v3473 = vpop.f32.mrb[0].mxu0
        %v3474 = vadd.f32 0.0, %v3473
        %v3475 = vpop.f32.mrb[0].mxu0
        %3476 = vmatprep.mubr.bf16.mxu0 0
        %3477 = vmatmul.mubr.bf16.gmra.mrb[0].mxu0 %v3425
        %v3478 = vpop.f32.mrb[0].mxu0
        %v3479 = vadd.f32 0.0, %v3478
        %v3480 = vpop.f32.mrb[0].mxu0
        %v3481 = vpop.f32.mrb[0].mxu0
        %v3482 = vadd.f32 0.0, %v3481
        %v3483 = vpop.f32.mrb[0].mxu0
        %3484 = vmatprep.mubr.bf16.mxu0 0
        %3485 = vmatmul.mubr.bf16.gmra.mrb[0].mxu0 %v3428
        %v3486 = vpop.f32.mrb[0].mxu0
        %v3487 = vadd.f32 0.0, %v3486
        %v3488 = vpop.f32.mrb[0].mxu0
        %v3489 = vpop.f32.mrb[0].mxu0
        %v3490 = vadd.f32 0.0, %v3489
        %v3491 = vpop.f32.mrb[0].mxu0
        %3492 = vmatprep.mubr.bf16.mxu0 0
        %3493 = vmatmul.mubr.bf16.gmra.mrb[0].mxu0 %v3431
        %v3494 = vpop.f32.mrb[0].mxu0
        %v3495 = vadd.f32 0.0, %v3494
        %v3496 = vpop.f32.mrb[0].mxu0
        %v3497 = vpop.f32.mrb[0].mxu0
        %v3498 = vadd.f32 0.0, %v3497
        %v3499 = vpop.f32.mrb[0].mxu0
        %3500 = vdwg.mxu0
        %3509 = vrot.lane.b32.xlu0 %v3471, 16
        %v3510 = vpop.permute.xlu0 %3509
        %3511 = vrot.lane.b32.xlu0 %v3474, 16
        %v3512 = vpop.permute.xlu0 %3511
        %3513 = vrot.lane.b32.xlu0 %v3479, 16
        %v3514 = vpop.permute.xlu0 %3513
        %3515 = vrot.lane.b32.xlu0 %v3482, 16
        %v3516 = vpop.permute.xlu0 %3515
        %3517 = vrot.lane.b32.xlu0 %v3487, 16
        %v3518 = vpop.permute.xlu0 %3517
        %3519 = vrot.lane.b32.xlu0 %v3490, 16
        %v3520 = vpop.permute.xlu0 %3519
        %3521 = vrot.lane.b32.xlu0 %v3495, 16
        %v3522 = vpop.permute.xlu0 %3521
        %3523 = vrot.lane.b32.xlu0 %v3498, 16
        %v3524 = vpop.permute.xlu0 %3523
        %3533 = vst.msk [vmem:[#allocation2 + $0x40] sm:$0xff] %vm2352, %v3510
        %3534 = vst.msk [vmem:[#allocation2 + $0x48] sm:$0xff] %vm2352, %v3512
        %3535 = vst.msk [vmem:[#allocation2 + $0x50] sm:$0xff] %vm2352, %v3514
        %3536 = vst.msk [vmem:[#allocation2 + $0x58] sm:$0xff] %vm2352, %v3516
        %3537 = vst.msk [vmem:[#allocation2 + $0x60] sm:$0xff] %vm2352, %v3518
        %3538 = vst.msk [vmem:[#allocation2 + $0x68] sm:$0xff] %vm2352, %v3520
        %3539 = vst.msk [vmem:[#allocation2 + $0x70] sm:$0xff] %vm2352, %v3522
        %3540 = vst.msk [vmem:[#allocation2 + $0x78] sm:$0xff] %vm2352, %v3524
        %3541 = vrot.lane.b32.xlu0 %v1477, 104
        %v3542 = vpop.permute.xlu0 %3541
        %3543 = vrot.lane.b32.xlu0 %v1478, 104
        %v3544 = vpop.permute.xlu0 %3543
        %3545 = vrot.lane.b32.xlu0 %v1479, 104
        %v3546 = vpop.permute.xlu0 %3545
        %3547 = vrot.lane.b32.xlu0 %v1480, 104
        %v3548 = vpop.permute.xlu0 %3547
        %3549 = vrot.lane.b32.xlu0 %v2666, 104
        %v3550 = vpop.permute.xlu0 %3549
        %v3552 = vsel %vm1482, %v3542, 0
        %v3555 = vsel %vm1482, %v3544, 0
        %v3558 = vsel %vm1482, %v3546, 0
        %v3561 = vsel %vm1482, %v3548, 0
        %v3564 = vsel %vm1482, %v3550, 0
        %3566 = vmatprep.subr.bf16.mxu0 0
        %3567 = vmatpush1.bf16.xpose.msra.mxu0 %v3564
        %3568 = vmatprep.subr.bf16.mxu0 0
        %3569 = vmatpush1.bf16.xpose.msra.mxu0 0
        %3570 = vmatprep.subr.bf16.mxu0 0
        %3571 = vmatpush1.bf16.xpose.msra.mxu0 0
        %3572 = vmatprep.subr.bf16.mxu0 0
        %3573 = vmatpush1.bf16.xpose.msra.mxu0 0
        %3574 = vmatprep.subr.bf16.mxu0 0
        %3575 = vmatpush1.bf16.xpose.msra.mxu0 0
        %3576 = vmatprep.subr.bf16.mxu0 0
        %3577 = vmatpush1.bf16.xpose.msra.mxu0 0
        %3578 = vmatprep.subr.bf16.mxu0 0
        %3579 = vmatpush1.bf16.xpose.msra.mxu0 0
        %3580 = vmatprep.subr.bf16.mxu0 0
        %3581 = vmatpush1.bf16.xpose.msra.mxu0 0
        %3582 = vmatprep.subr.bf16.mxu0 0
        %3583 = vmatpush1.bf16.xpose.msra.mxu0 0
        %3584 = vmatprep.subr.bf16.mxu0 0
        %3585 = vmatpush1.bf16.xpose.msra.mxu0 0
        %3586 = vmatprep.subr.bf16.mxu0 0
        %3587 = vmatpush1.bf16.xpose.msra.mxu0 0
        %3588 = vmatprep.subr.bf16.mxu0 0
        %3589 = vmatpush1.bf16.xpose.msra.mxu0 0
        %3590 = vmatprep.subr.bf16.mxu0 0
        %3591 = vmatpush1.bf16.xpose.msra.mxu0 0
        %3592 = vmatprep.subr.bf16.mxu0 0
        %3593 = vmatpush1.bf16.xpose.msra.mxu0 0
        %3594 = vmatprep.subr.bf16.mxu0 0
        %3595 = vmatpush1.bf16.xpose.msra.mxu0 0
        %3596 = vmatprep.subr.bf16.mxu0 0
        %3597 = vmatpush1.bf16.xpose.msra.mxu0 0
        %3598 = vmatprep.mubr.bf16.mxu0 0
        %3599 = vmatmul.mubr.bf16.gmra.mrb[0].mxu0 %v3552
        %v3600 = vpop.f32.mrb[0].mxu0
        %v3601 = vadd.f32 0.0, %v3600
        %v3602 = vpop.f32.mrb[0].mxu0
        %v3603 = vpop.f32.mrb[0].mxu0
        %v3604 = vadd.f32 0.0, %v3603
        %v3605 = vpop.f32.mrb[0].mxu0
        %3606 = vmatprep.mubr.bf16.mxu0 0
        %3607 = vmatmul.mubr.bf16.gmra.mrb[0].mxu0 %v3555
        %v3608 = vpop.f32.mrb[0].mxu0
        %v3609 = vadd.f32 0.0, %v3608
        %v3610 = vpop.f32.mrb[0].mxu0
        %v3611 = vpop.f32.mrb[0].mxu0
        %v3612 = vadd.f32 0.0, %v3611
        %v3613 = vpop.f32.mrb[0].mxu0
        %3614 = vmatprep.mubr.bf16.mxu0 0
        %3615 = vmatmul.mubr.bf16.gmra.mrb[0].mxu0 %v3558
        %v3616 = vpop.f32.mrb[0].mxu0
        %v3617 = vadd.f32 0.0, %v3616
        %v3618 = vpop.f32.mrb[0].mxu0
        %v3619 = vpop.f32.mrb[0].mxu0
        %v3620 = vadd.f32 0.0, %v3619
        %v3621 = vpop.f32.mrb[0].mxu0
        %3622 = vmatprep.mubr.bf16.mxu0 0
        %3623 = vmatmul.mubr.bf16.gmra.mrb[0].mxu0 %v3561
        %v3624 = vpop.f32.mrb[0].mxu0
        %v3625 = vadd.f32 0.0, %v3624
        %v3626 = vpop.f32.mrb[0].mxu0
        %v3627 = vpop.f32.mrb[0].mxu0
        %v3628 = vadd.f32 0.0, %v3627
        %v3629 = vpop.f32.mrb[0].mxu0
        %3630 = vdwg.mxu0
        %v3631 = vsel %vm1482, %v3601, -inf
        %3632 = vmax.xlane.f32.xlu0 %v3631
        %v3633 = vpop.xlane.xlu0 %3632
        %v3634 = vsel %vm1482, %v3604, -inf
        %3635 = vmax.xlane.f32.xlu0 %v3634
        %v3636 = vpop.xlane.xlu0 %3635
        %v3637 = vsel %vm1482, %v3609, -inf
        %3638 = vmax.xlane.f32.xlu0 %v3637
        %v3639 = vpop.xlane.xlu0 %3638
        %v3640 = vsel %vm1482, %v3612, -inf
        %3641 = vmax.xlane.f32.xlu0 %v3640
        %v3642 = vpop.xlane.xlu0 %3641
        %v3643 = vsel %vm1482, %v3617, -inf
        %3644 = vmax.xlane.f32.xlu0 %v3643
        %v3645 = vpop.xlane.xlu0 %3644
        %v3646 = vsel %vm1482, %v3620, -inf
        %3647 = vmax.xlane.f32.xlu0 %v3646
        %v3648 = vpop.xlane.xlu0 %3647
        %v3649 = vsel %vm1482, %v3625, -inf
        %3650 = vmax.xlane.f32.xlu0 %v3649
        %v3651 = vpop.xlane.xlu0 %3650
        %v3652 = vsel %vm1482, %v3628, -inf
        %3653 = vmax.xlane.f32.xlu0 %v3652
        %v3654 = vpop.xlane.xlu0 %3653
        %v3655 = vsub.f32 %v3601, %v3633
        %v3656 = vsub.f32 %v3604, %v3636
        %v3657 = vsub.f32 %v3609, %v3639
        %v3658 = vsub.f32 %v3612, %v3642
        %v3659 = vsub.f32 %v3617, %v3645
        %v3660 = vsub.f32 %v3620, %v3648
        %v3661 = vsub.f32 %v3625, %v3651
        %v3662 = vsub.f32 %v3628, %v3654
        %v3663 = vmul.f32 %v3655, 1.442695
        %v3664 = vpow.pop %v3663
        %v3665 = vmul.f32 %v3656, 1.442695
        %v3666 = vpow.pop %v3665
        %v3667 = vmul.f32 %v3657, 1.442695
        %v3668 = vpow.pop %v3667
        %v3669 = vmul.f32 %v3658, 1.442695
        %v3670 = vpow.pop %v3669
        %v3671 = vmul.f32 %v3659, 1.442695
        %v3672 = vpow.pop %v3671
        %v3673 = vmul.f32 %v3660, 1.442695
        %v3674 = vpow.pop %v3673
        %v3675 = vmul.f32 %v3661, 1.442695
        %v3676 = vpow.pop %v3675
        %v3677 = vmul.f32 %v3662, 1.442695
        %v3678 = vpow.pop %v3677
        %v3679 = vsel %vm1482, %v3664, 0.0
        %3680 = vadd.xlane.f32.xlu0 %v3679
        %v3681 = vpop.xlane.xlu0 %3680
        %v3682 = vsel %vm1482, %v3666, 0.0
        %3683 = vadd.xlane.f32.xlu0 %v3682
        %v3684 = vpop.xlane.xlu0 %3683
        %v3685 = vsel %vm1482, %v3668, 0.0
        %3686 = vadd.xlane.f32.xlu0 %v3685
        %v3687 = vpop.xlane.xlu0 %3686
        %v3688 = vsel %vm1482, %v3670, 0.0
        %3689 = vadd.xlane.f32.xlu0 %v3688
        %v3690 = vpop.xlane.xlu0 %3689
        %v3691 = vsel %vm1482, %v3672, 0.0
        %3692 = vadd.xlane.f32.xlu0 %v3691
        %v3693 = vpop.xlane.xlu0 %3692
        %v3694 = vsel %vm1482, %v3674, 0.0
        %3695 = vadd.xlane.f32.xlu0 %v3694
        %v3696 = vpop.xlane.xlu0 %3695
        %v3697 = vsel %vm1482, %v3676, 0.0
        %3698 = vadd.xlane.f32.xlu0 %v3697
        %v3699 = vpop.xlane.xlu0 %3698
        %v3700 = vsel %vm1482, %v3678, 0.0
        %3701 = vadd.xlane.f32.xlu0 %v3700
        %v3702 = vpop.xlane.xlu0 %3701
        %v3703 = vrcp.pop %v3681
        %v3704 = vrcp.pop %v3684
        %v3705 = vrcp.pop %v3687
        %v3706 = vrcp.pop %v3690
        %v3707 = vrcp.pop %v3693
        %v3708 = vrcp.pop %v3696
        %v3709 = vrcp.pop %v3699
        %v3710 = vrcp.pop %v3702
        %v3711 = vmul.f32 %v3664, %v3703
        %v3712 = vmul.f32 %v3666, %v3704
        %v3713 = vmul.f32 %v3668, %v3705
        %v3714 = vmul.f32 %v3670, %v3706
        %v3715 = vmul.f32 %v3672, %v3707
        %v3716 = vmul.f32 %v3674, %v3708
        %v3717 = vmul.f32 %v3676, %v3709
        %v3718 = vmul.f32 %v3678, %v3710
        %v3719 = vpack.c.bf16 %v3712, %v3711
        %v3720 = vpack.c.bf16 %v3714, %v3713
        %v3721 = vpack.c.bf16 %v3716, %v3715
        %v3722 = vpack.c.bf16 %v3718, %v3717
        %3723 = vrot.lane.b32.xlu0 %v2666, 72
        %v3724 = vpop.permute.xlu0 %3723
        %v3726 = vsel %vm1482, %v3719, 0
        %v3729 = vsel %vm1482, %v3720, 0
        %v3732 = vsel %vm1482, %v3721, 0
        %v3735 = vsel %vm1482, %v3722, 0
        %v3738 = vsel %vm1670, %v3724, 0
        %3740 = vmatprep.subr.bf16.mxu0 0
        %3741 = vmatpush1.bf16.msra.mxu0 %v3738
        %3742 = vmatprep.subr.bf16.mxu0 0
        %3743 = vmatpush1.bf16.msra.mxu0 0
        %3744 = vmatprep.subr.bf16.mxu0 0
        %3745 = vmatpush1.bf16.msra.mxu0 0
        %3746 = vmatprep.subr.bf16.mxu0 0
        %3747 = vmatpush1.bf16.msra.mxu0 0
        %3748 = vmatprep.subr.bf16.mxu0 0
        %3749 = vmatpush1.bf16.msra.mxu0 0
        %3750 = vmatprep.subr.bf16.mxu0 0
        %3751 = vmatpush1.bf16.msra.mxu0 0
        %3752 = vmatprep.subr.bf16.mxu0 0
        %3753 = vmatpush1.bf16.msra.mxu0 0
        %3754 = vmatprep.subr.bf16.mxu0 0
        %3755 = vmatpush1.bf16.msra.mxu0 0
        %3756 = vmatprep.subr.bf16.mxu0 0
        %3757 = vmatpush1.bf16.msra.mxu0 0
        %3758 = vmatprep.subr.bf16.mxu0 0
        %3759 = vmatpush1.bf16.msra.mxu0 0
        %3760 = vmatprep.subr.bf16.mxu0 0
        %3761 = vmatpush1.bf16.msra.mxu0 0
        %3762 = vmatprep.subr.bf16.mxu0 0
        %3763 = vmatpush1.bf16.msra.mxu0 0
        %3764 = vmatprep.subr.bf16.mxu0 0
        %3765 = vmatpush1.bf16.msra.mxu0 0
        %3766 = vmatprep.subr.bf16.mxu0 0
        %3767 = vmatpush1.bf16.msra.mxu0 0
        %3768 = vmatprep.subr.bf16.mxu0 0
        %3769 = vmatpush1.bf16.msra.mxu0 0
        %3770 = vmatprep.subr.bf16.mxu0 0
        %3771 = vmatpush1.bf16.msra.mxu0 0
        %3772 = vmatprep.mubr.bf16.mxu0 0
        %3773 = vmatmul.mubr.bf16.gmra.mrb[0].mxu0 %v3726
        %v3774 = vpop.f32.mrb[0].mxu0
        %v3775 = vadd.f32 0.0, %v3774
        %v3776 = vpop.f32.mrb[0].mxu0
        %v3777 = vpop.f32.mrb[0].mxu0
        %v3778 = vadd.f32 0.0, %v3777
        %v3779 = vpop.f32.mrb[0].mxu0
        %3780 = vmatprep.mubr.bf16.mxu0 0
        %3781 = vmatmul.mubr.bf16.gmra.mrb[0].mxu0 %v3729
        %v3782 = vpop.f32.mrb[0].mxu0
        %v3783 = vadd.f32 0.0, %v3782
        %v3784 = vpop.f32.mrb[0].mxu0
        %v3785 = vpop.f32.mrb[0].mxu0
        %v3786 = vadd.f32 0.0, %v3785
        %v3787 = vpop.f32.mrb[0].mxu0
        %3788 = vmatprep.mubr.bf16.mxu0 0
        %3789 = vmatmul.mubr.bf16.gmra.mrb[0].mxu0 %v3732
        %v3790 = vpop.f32.mrb[0].mxu0
        %v3791 = vadd.f32 0.0, %v3790
        %v3792 = vpop.f32.mrb[0].mxu0
        %v3793 = vpop.f32.mrb[0].mxu0
        %v3794 = vadd.f32 0.0, %v3793
        %v3795 = vpop.f32.mrb[0].mxu0
        %3796 = vmatprep.mubr.bf16.mxu0 0
        %3797 = vmatmul.mubr.bf16.gmra.mrb[0].mxu0 %v3735
        %v3798 = vpop.f32.mrb[0].mxu0
        %v3799 = vadd.f32 0.0, %v3798
        %v3800 = vpop.f32.mrb[0].mxu0
        %v3801 = vpop.f32.mrb[0].mxu0
        %v3802 = vadd.f32 0.0, %v3801
        %v3803 = vpop.f32.mrb[0].mxu0
        %3804 = vdwg.mxu0
        %3813 = vrot.lane.b32.xlu0 %v3775, 24
        %v3814 = vpop.permute.xlu0 %3813
        %3815 = vrot.lane.b32.xlu0 %v3778, 24
        %v3816 = vpop.permute.xlu0 %3815
        %3817 = vrot.lane.b32.xlu0 %v3783, 24
        %v3818 = vpop.permute.xlu0 %3817
        %3819 = vrot.lane.b32.xlu0 %v3786, 24
        %v3820 = vpop.permute.xlu0 %3819
        %3821 = vrot.lane.b32.xlu0 %v3791, 24
        %v3822 = vpop.permute.xlu0 %3821
        %3823 = vrot.lane.b32.xlu0 %v3794, 24
        %v3824 = vpop.permute.xlu0 %3823
        %3825 = vrot.lane.b32.xlu0 %v3799, 24
        %v3826 = vpop.permute.xlu0 %3825
        %3827 = vrot.lane.b32.xlu0 %v3802, 24
        %v3828 = vpop.permute.xlu0 %3827
        %3837 = vst.msk [vmem:[#allocation2 + $0x40] sm:$0xff] %vm2657, %v3814
        %3838 = vst.msk [vmem:[#allocation2 + $0x48] sm:$0xff] %vm2657, %v3816
        %3839 = vst.msk [vmem:[#allocation2 + $0x50] sm:$0xff] %vm2657, %v3818
        %3840 = vst.msk [vmem:[#allocation2 + $0x58] sm:$0xff] %vm2657, %v3820
        %3841 = vst.msk [vmem:[#allocation2 + $0x60] sm:$0xff] %vm2657, %v3822
        %3842 = vst.msk [vmem:[#allocation2 + $0x68] sm:$0xff] %vm2657, %v3824
        %3843 = vst.msk [vmem:[#allocation2 + $0x70] sm:$0xff] %vm2657, %v3826
        %3844 = vst.msk [vmem:[#allocation2 + $0x78] sm:$0xff] %vm2657, %v3828
        %v3845 = vld [vmem:[#allocation2] sm:$0xff]
        %v3846 = vld [vmem:[#allocation2 + $0x8] sm:$0xff]
        %v3847 = vld [vmem:[#allocation2 + $0x10] sm:$0xff]
        %v3848 = vld [vmem:[#allocation2 + $0x18] sm:$0xff]
        %v3849 = vld [vmem:[#allocation2 + $0x20] sm:$0xff]
        %v3850 = vld [vmem:[#allocation2 + $0x28] sm:$0xff]
        %v3851 = vld [vmem:[#allocation2 + $0x30] sm:$0xff]
        %v3852 = vld [vmem:[#allocation2 + $0x38] sm:$0xff]
        %v3853 = vld [vmem:[#allocation2 + $0x40] sm:$0xff]
        %v3854 = vld [vmem:[#allocation2 + $0x48] sm:$0xff]
        %v3855 = vld [vmem:[#allocation2 + $0x50] sm:$0xff]
        %v3856 = vld [vmem:[#allocation2 + $0x58] sm:$0xff]
        %v3857 = vld [vmem:[#allocation2 + $0x60] sm:$0xff]
        %v3858 = vld [vmem:[#allocation2 + $0x68] sm:$0xff]
        %v3859 = vld [vmem:[#allocation2 + $0x70] sm:$0xff]
        %v3860 = vld [vmem:[#allocation2 + $0x78] sm:$0xff]
        %v3861 = vpack.c.bf16 %v3846, %v3845
        %v3862 = vpack.c.bf16 %v3848, %v3847
        %v3863 = vpack.c.bf16 %v3850, %v3849
        %v3864 = vpack.c.bf16 %v3852, %v3851
        %v3865 = vpack.c.bf16 %v3854, %v3853
        %v3866 = vpack.c.bf16 %v3856, %v3855
        %v3867 = vpack.c.bf16 %v3858, %v3857
        %v3868 = vpack.c.bf16 %v3860, %v3859
        %v3869 = vld [vmem:[%s947] sm:$0xf]
        %v3870 = vld [vmem:[%s947 + $0x4] sm:$0xf]
        %v3871 = vld [vmem:[%s947 + $0x8] sm:$0xf]
        %v3872 = vld [vmem:[%s947 + $0xc] sm:$0xf]
        %v3873 = vld [vmem:[%s788] sm:$0x1]
        %v3875 = vlaneseq
        %v3876 = vshrl.u32 %v3875, 7
        %v3877 = vsub.s32 0, %v3876
        %v3878 = vrot.slane %v3873, %v3877
        %v3884 = vunpack.c.l.b16 %v3869
        %v3885 = vunpack.c.l.b16 %v3870
        %v3886 = vunpack.c.l.b16 %v3871
        %v3887 = vunpack.c.l.b16 %v3872
        %v3888 = vpack.c.b16 %v3885, %v3884
        %v3889 = vpack.c.b16 %v3887, %v3886
        %v3893 = vsel %vm1006, %v3861, 0
        %v3896 = vsel %vm1006, %v3862, 0
        %v3899 = vsel %vm1006, %v3863, 0
        %v3902 = vsel %vm1006, %v3864, 0
        %v3905 = vsel %vm1006, %v3865, 0
        %v3908 = vsel %vm1006, %v3866, 0
        %v3911 = vsel %vm1006, %v3867, 0
        %v3914 = vsel %vm1006, %v3868, 0
        %3916 = vmatprep.subr.bf16.mxu0 0
        %3917 = vmatpush1.bf16.msra.mxu0 %v3888
        %3918 = vmatprep.subr.bf16.mxu0 0
        %3919 = vmatpush1.bf16.msra.mxu0 %v3889
        %3920 = vmatprep.subr.bf16.mxu0 0
        %3921 = vmatpush1.bf16.msra.mxu0 0
        %3922 = vmatprep.subr.bf16.mxu0 0
        %3923 = vmatpush1.bf16.msra.mxu0 0
        %3924 = vmatprep.subr.bf16.mxu0 0
        %3925 = vmatpush1.bf16.msra.mxu0 0
        %3926 = vmatprep.subr.bf16.mxu0 0
        %3927 = vmatpush1.bf16.msra.mxu0 0
        %3928 = vmatprep.subr.bf16.mxu0 0
        %3929 = vmatpush1.bf16.msra.mxu0 0
        %3930 = vmatprep.subr.bf16.mxu0 0
        %3931 = vmatpush1.bf16.msra.mxu0 0
        %3932 = vmatprep.subr.bf16.mxu0 0
        %3933 = vmatpush1.bf16.msra.mxu0 0
        %3934 = vmatprep.subr.bf16.mxu0 0
        %3935 = vmatpush1.bf16.msra.mxu0 0
        %3936 = vmatprep.subr.bf16.mxu0 0
        %3937 = vmatpush1.bf16.msra.mxu0 0
        %3938 = vmatprep.subr.bf16.mxu0 0
        %3939 = vmatpush1.bf16.msra.mxu0 0
        %3940 = vmatprep.subr.bf16.mxu0 0
        %3941 = vmatpush1.bf16.msra.mxu0 0
        %3942 = vmatprep.subr.bf16.mxu0 0
        %3943 = vmatpush1.bf16.msra.mxu0 0
        %3944 = vmatprep.subr.bf16.mxu0 0
        %3945 = vmatpush1.bf16.msra.mxu0 0
        %3946 = vmatprep.subr.bf16.mxu0 0
        %3947 = vmatpush1.bf16.msra.mxu0 0
        %3948 = vmatprep.mubr.bf16.mxu0 0
        %3949 = vmatmul.mubr.bf16.gmra.mrb[0].mxu0 %v3893
        %v3950 = vpop.f32.mrb[0].mxu0
        %v3951 = vadd.f32 %v3878, %v3950
        %v3952 = vpop.f32.mrb[0].mxu0
        %v3953 = vpop.f32.mrb[0].mxu0
        %v3954 = vadd.f32 %v3878, %v3953
        %v3955 = vpop.f32.mrb[0].mxu0
        %3956 = vmatprep.mubr.bf16.mxu0 0
        %3957 = vmatmul.mubr.bf16.gmra.mrb[0].mxu0 %v3896
        %v3958 = vpop.f32.mrb[0].mxu0
        %v3959 = vadd.f32 %v3878, %v3958
        %v3960 = vpop.f32.mrb[0].mxu0
        %v3961 = vpop.f32.mrb[0].mxu0
        %v3962 = vadd.f32 %v3878, %v3961
        %v3963 = vpop.f32.mrb[0].mxu0
        %3964 = vmatprep.mubr.bf16.mxu0 0
        %3965 = vmatmul.mubr.bf16.gmra.mrb[0].mxu0 %v3899
        %v3966 = vpop.f32.mrb[0].mxu0
        %v3967 = vadd.f32 %v3878, %v3966
        %v3968 = vpop.f32.mrb[0].mxu0
        %v3969 = vpop.f32.mrb[0].mxu0
        %v3970 = vadd.f32 %v3878, %v3969
        %v3971 = vpop.f32.mrb[0].mxu0
        %3972 = vmatprep.mubr.bf16.mxu0 0
        %3973 = vmatmul.mubr.bf16.gmra.mrb[0].mxu0 %v3902
        %v3974 = vpop.f32.mrb[0].mxu0
        %v3975 = vadd.f32 %v3878, %v3974
        %v3976 = vpop.f32.mrb[0].mxu0
        %v3977 = vpop.f32.mrb[0].mxu0
        %v3978 = vadd.f32 %v3878, %v3977
        %v3979 = vpop.f32.mrb[0].mxu0
        %3980 = vmatprep.mubr.bf16.mxu0 0
        %3981 = vmatmul.mubr.bf16.gmra.mrb[0].mxu0 %v3905
        %v3982 = vpop.f32.mrb[0].mxu0
        %v3983 = vadd.f32 %v3878, %v3982
        %v3984 = vpop.f32.mrb[0].mxu0
        %v3985 = vpop.f32.mrb[0].mxu0
        %v3986 = vadd.f32 %v3878, %v3985
        %v3987 = vpop.f32.mrb[0].mxu0
        %3988 = vmatprep.mubr.bf16.mxu0 0
        %3989 = vmatmul.mubr.bf16.gmra.mrb[0].mxu0 %v3908
        %v3990 = vpop.f32.mrb[0].mxu0
        %v3991 = vadd.f32 %v3878, %v3990
        %v3992 = vpop.f32.mrb[0].mxu0
        %v3993 = vpop.f32.mrb[0].mxu0
        %v3994 = vadd.f32 %v3878, %v3993
        %v3995 = vpop.f32.mrb[0].mxu0
        %3996 = vmatprep.mubr.bf16.mxu0 0
        %3997 = vmatmul.mubr.bf16.gmra.mrb[0].mxu0 %v3911
        %v3998 = vpop.f32.mrb[0].mxu0
        %v3999 = vadd.f32 %v3878, %v3998
        %v4000 = vpop.f32.mrb[0].mxu0
        %v4001 = vpop.f32.mrb[0].mxu0
        %v4002 = vadd.f32 %v3878, %v4001
        %v4003 = vpop.f32.mrb[0].mxu0
        %4004 = vmatprep.mubr.bf16.mxu0 0
        %4005 = vmatmul.mubr.bf16.gmra.mrb[0].mxu0 %v3914
        %v4006 = vpop.f32.mrb[0].mxu0
        %v4007 = vadd.f32 %v3878, %v4006
        %v4008 = vpop.f32.mrb[0].mxu0
        %v4009 = vpop.f32.mrb[0].mxu0
        %v4010 = vadd.f32 %v3878, %v4009
        %v4011 = vpop.f32.mrb[0].mxu0
        %4012 = vdwg.mxu0
        %v4013 = vadd.f32 %v3951, %v986
        %v4014 = vadd.f32 %v3954, %v987
        %v4015 = vadd.f32 %v3959, %v988
        %v4016 = vadd.f32 %v3962, %v989
        %v4017 = vadd.f32 %v3967, %v990
        %v4018 = vadd.f32 %v3970, %v991
        %v4019 = vadd.f32 %v3975, %v992
        %v4020 = vadd.f32 %v3978, %v993
        %v4021 = vadd.f32 %v3983, %v994
        %v4022 = vadd.f32 %v3986, %v995
        %v4023 = vadd.f32 %v3991, %v996
        %v4024 = vadd.f32 %v3994, %v997
        %v4025 = vadd.f32 %v3999, %v998
        %v4026 = vadd.f32 %v4002, %v999
        %v4027 = vadd.f32 %v4007, %v1000
        %v4028 = vadd.f32 %v4010, %v1001
        %v4029 = vld [vmem:[%s796] sm:$0x1]
        %v4030 = vld [vmem:[%s804] sm:$0x1]
        %v4031 = vsel %vm1006, %v4013, 0.0
        %4032 = vadd.xlane.f32.xlu0 %v4031
        %v4033 = vpop.xlane.xlu0 %4032
        %v4034 = vsel %vm1006, %v4014, 0.0
        %4035 = vadd.xlane.f32.xlu0 %v4034
        %v4036 = vpop.xlane.xlu0 %4035
        %v4037 = vsel %vm1006, %v4015, 0.0
        %4038 = vadd.xlane.f32.xlu0 %v4037
        %v4039 = vpop.xlane.xlu0 %4038
        %v4040 = vsel %vm1006, %v4016, 0.0
        %4041 = vadd.xlane.f32.xlu0 %v4040
        %v4042 = vpop.xlane.xlu0 %4041
        %v4043 = vsel %vm1006, %v4017, 0.0
        %4044 = vadd.xlane.f32.xlu0 %v4043
        %v4045 = vpop.xlane.xlu0 %4044
        %v4046 = vsel %vm1006, %v4018, 0.0
        %4047 = vadd.xlane.f32.xlu0 %v4046
        %v4048 = vpop.xlane.xlu0 %4047
        %v4049 = vsel %vm1006, %v4019, 0.0
        %4050 = vadd.xlane.f32.xlu0 %v4049
        %v4051 = vpop.xlane.xlu0 %4050
        %v4052 = vsel %vm1006, %v4020, 0.0
        %4053 = vadd.xlane.f32.xlu0 %v4052
        %v4054 = vpop.xlane.xlu0 %4053
        %v4055 = vsel %vm1006, %v4021, 0.0
        %4056 = vadd.xlane.f32.xlu0 %v4055
        %v4057 = vpop.xlane.xlu0 %4056
        %v4058 = vsel %vm1006, %v4022, 0.0
        %4059 = vadd.xlane.f32.xlu0 %v4058
        %v4060 = vpop.xlane.xlu0 %4059
        %v4061 = vsel %vm1006, %v4023, 0.0
        %4062 = vadd.xlane.f32.xlu0 %v4061
        %v4063 = vpop.xlane.xlu0 %4062
        %v4064 = vsel %vm1006, %v4024, 0.0
        %4065 = vadd.xlane.f32.xlu0 %v4064
        %v4066 = vpop.xlane.xlu0 %4065
        %v4067 = vsel %vm1006, %v4025, 0.0
        %4068 = vadd.xlane.f32.xlu0 %v4067
        %v4069 = vpop.xlane.xlu0 %4068
        %v4070 = vsel %vm1006, %v4026, 0.0
        %4071 = vadd.xlane.f32.xlu0 %v4070
        %v4072 = vpop.xlane.xlu0 %4071
        %v4073 = vsel %vm1006, %v4027, 0.0
        %4074 = vadd.xlane.f32.xlu0 %v4073
        %v4075 = vpop.xlane.xlu0 %4074
        %v4076 = vsel %vm1006, %v4028, 0.0
        %4077 = vadd.xlane.f32.xlu0 %v4076
        %v4078 = vpop.xlane.xlu0 %4077
        %v4079 = vmul.f32 %v4033, %v1055
        %v4080 = vmul.f32 %v4036, %v1055
        %v4081 = vmul.f32 %v4039, %v1055
        %v4082 = vmul.f32 %v4042, %v1055
        %v4083 = vmul.f32 %v4045, %v1055
        %v4084 = vmul.f32 %v4048, %v1055
        %v4085 = vmul.f32 %v4051, %v1055
        %v4086 = vmul.f32 %v4054, %v1055
        %v4087 = vmul.f32 %v4057, %v1055
        %v4088 = vmul.f32 %v4060, %v1055
        %v4089 = vmul.f32 %v4063, %v1055
        %v4090 = vmul.f32 %v4066, %v1055
        %v4091 = vmul.f32 %v4069, %v1055
        %v4092 = vmul.f32 %v4072, %v1055
        %v4093 = vmul.f32 %v4075, %v1055
        %v4094 = vmul.f32 %v4078, %v1055
        %v4095 = vsub.f32 %v4013, %v4079
        %v4096 = vsub.f32 %v4014, %v4080
        %v4097 = vsub.f32 %v4015, %v4081
        %v4098 = vsub.f32 %v4016, %v4082
        %v4099 = vsub.f32 %v4017, %v4083
        %v4100 = vsub.f32 %v4018, %v4084
        %v4101 = vsub.f32 %v4019, %v4085
        %v4102 = vsub.f32 %v4020, %v4086
        %v4103 = vsub.f32 %v4021, %v4087
        %v4104 = vsub.f32 %v4022, %v4088
        %v4105 = vsub.f32 %v4023, %v4089
        %v4106 = vsub.f32 %v4024, %v4090
        %v4107 = vsub.f32 %v4025, %v4091
        %v4108 = vsub.f32 %v4026, %v4092
        %v4109 = vsub.f32 %v4027, %v4093
        %v4110 = vsub.f32 %v4028, %v4094
        %v4111 = vmul.f32 %v4095, %v4095
        %v4112 = vmul.f32 %v4096, %v4096
        %v4113 = vmul.f32 %v4097, %v4097
        %v4114 = vmul.f32 %v4098, %v4098
        %v4115 = vmul.f32 %v4099, %v4099
        %v4116 = vmul.f32 %v4100, %v4100
        %v4117 = vmul.f32 %v4101, %v4101
        %v4118 = vmul.f32 %v4102, %v4102
        %v4119 = vmul.f32 %v4103, %v4103
        %v4120 = vmul.f32 %v4104, %v4104
        %v4121 = vmul.f32 %v4105, %v4105
        %v4122 = vmul.f32 %v4106, %v4106
        %v4123 = vmul.f32 %v4107, %v4107
        %v4124 = vmul.f32 %v4108, %v4108
        %v4125 = vmul.f32 %v4109, %v4109
        %v4126 = vmul.f32 %v4110, %v4110
        %v4127 = vsel %vm1006, %v4111, 0.0
        %4128 = vadd.xlane.f32.xlu0 %v4127
        %v4129 = vpop.xlane.xlu0 %4128
        %v4130 = vsel %vm1006, %v4112, 0.0
        %4131 = vadd.xlane.f32.xlu0 %v4130
        %v4132 = vpop.xlane.xlu0 %4131
        %v4133 = vsel %vm1006, %v4113, 0.0
        %4134 = vadd.xlane.f32.xlu0 %v4133
        %v4135 = vpop.xlane.xlu0 %4134
        %v4136 = vsel %vm1006, %v4114, 0.0
        %4137 = vadd.xlane.f32.xlu0 %v4136
        %v4138 = vpop.xlane.xlu0 %4137
        %v4139 = vsel %vm1006, %v4115, 0.0
        %4140 = vadd.xlane.f32.xlu0 %v4139
        %v4141 = vpop.xlane.xlu0 %4140
        %v4142 = vsel %vm1006, %v4116, 0.0
        %4143 = vadd.xlane.f32.xlu0 %v4142
        %v4144 = vpop.xlane.xlu0 %4143
        %v4145 = vsel %vm1006, %v4117, 0.0
        %4146 = vadd.xlane.f32.xlu0 %v4145
        %v4147 = vpop.xlane.xlu0 %4146
        %v4148 = vsel %vm1006, %v4118, 0.0
        %4149 = vadd.xlane.f32.xlu0 %v4148
        %v4150 = vpop.xlane.xlu0 %4149
        %v4151 = vsel %vm1006, %v4119, 0.0
        %4152 = vadd.xlane.f32.xlu0 %v4151
        %v4153 = vpop.xlane.xlu0 %4152
        %v4154 = vsel %vm1006, %v4120, 0.0
        %4155 = vadd.xlane.f32.xlu0 %v4154
        %v4156 = vpop.xlane.xlu0 %4155
        %v4157 = vsel %vm1006, %v4121, 0.0
        %4158 = vadd.xlane.f32.xlu0 %v4157
        %v4159 = vpop.xlane.xlu0 %4158
        %v4160 = vsel %vm1006, %v4122, 0.0
        %4161 = vadd.xlane.f32.xlu0 %v4160
        %v4162 = vpop.xlane.xlu0 %4161
        %v4163 = vsel %vm1006, %v4123, 0.0
        %4164 = vadd.xlane.f32.xlu0 %v4163
        %v4165 = vpop.xlane.xlu0 %4164
        %v4166 = vsel %vm1006, %v4124, 0.0
        %4167 = vadd.xlane.f32.xlu0 %v4166
        %v4168 = vpop.xlane.xlu0 %4167
        %v4169 = vsel %vm1006, %v4125, 0.0
        %4170 = vadd.xlane.f32.xlu0 %v4169
        %v4171 = vpop.xlane.xlu0 %4170
        %v4172 = vsel %vm1006, %v4126, 0.0
        %4173 = vadd.xlane.f32.xlu0 %v4172
        %v4174 = vpop.xlane.xlu0 %4173
        %v4175 = vmul.f32 %v4129, %v1055
        %v4176 = vmul.f32 %v4132, %v1055
        %v4177 = vmul.f32 %v4135, %v1055
        %v4178 = vmul.f32 %v4138, %v1055
        %v4179 = vmul.f32 %v4141, %v1055
        %v4180 = vmul.f32 %v4144, %v1055
        %v4181 = vmul.f32 %v4147, %v1055
        %v4182 = vmul.f32 %v4150, %v1055
        %v4183 = vmul.f32 %v4153, %v1055
        %v4184 = vmul.f32 %v4156, %v1055
        %v4185 = vmul.f32 %v4159, %v1055
        %v4186 = vmul.f32 %v4162, %v1055
        %v4187 = vmul.f32 %v4165, %v1055
        %v4188 = vmul.f32 %v4168, %v1055
        %v4189 = vmul.f32 %v4171, %v1055
        %v4190 = vmul.f32 %v4174, %v1055
        %v4191 = vadd.f32 %v4175, 1e-05
        %v4192 = vadd.f32 %v4176, 1e-05
        %v4193 = vadd.f32 %v4177, 1e-05
        %v4194 = vadd.f32 %v4178, 1e-05
        %v4195 = vadd.f32 %v4179, 1e-05
        %v4196 = vadd.f32 %v4180, 1e-05
        %v4197 = vadd.f32 %v4181, 1e-05
        %v4198 = vadd.f32 %v4182, 1e-05
        %v4199 = vadd.f32 %v4183, 1e-05
        %v4200 = vadd.f32 %v4184, 1e-05
        %v4201 = vadd.f32 %v4185, 1e-05
        %v4202 = vadd.f32 %v4186, 1e-05
        %v4203 = vadd.f32 %v4187, 1e-05
        %v4204 = vadd.f32 %v4188, 1e-05
        %v4205 = vadd.f32 %v4189, 1e-05
        %v4206 = vadd.f32 %v4190, 1e-05
        %v4207 = vrsqrt.pop %v4191
        %v4208 = vrsqrt.pop %v4192
        %v4209 = vrsqrt.pop %v4193
        %v4210 = vrsqrt.pop %v4194
        %v4211 = vrsqrt.pop %v4195
        %v4212 = vrsqrt.pop %v4196
        %v4213 = vrsqrt.pop %v4197
        %v4214 = vrsqrt.pop %v4198
        %v4215 = vrsqrt.pop %v4199
        %v4216 = vrsqrt.pop %v4200
        %v4217 = vrsqrt.pop %v4201
        %v4218 = vrsqrt.pop %v4202
        %v4219 = vrsqrt.pop %v4203
        %v4220 = vrsqrt.pop %v4204
        %v4221 = vrsqrt.pop %v4205
        %v4222 = vrsqrt.pop %v4206
        %v4223 = vmul.f32 %v4095, %v4207
        %v4224 = vmul.f32 %v4096, %v4208
        %v4225 = vmul.f32 %v4097, %v4209
        %v4226 = vmul.f32 %v4098, %v4210
        %v4227 = vmul.f32 %v4099, %v4211
        %v4228 = vmul.f32 %v4100, %v4212
        %v4229 = vmul.f32 %v4101, %v4213
        %v4230 = vmul.f32 %v4102, %v4214
        %v4231 = vmul.f32 %v4103, %v4215
        %v4232 = vmul.f32 %v4104, %v4216
        %v4233 = vmul.f32 %v4105, %v4217
        %v4234 = vmul.f32 %v4106, %v4218
        %v4235 = vmul.f32 %v4107, %v4219
        %v4236 = vmul.f32 %v4108, %v4220
        %v4237 = vmul.f32 %v4109, %v4221
        %v4238 = vmul.f32 %v4110, %v4222
        %v4240 = vlaneseq
        %v4241 = vshrl.u32 %v4240, 7
        %v4242 = vsub.s32 0, %v4241
        %v4243 = vrot.slane %v4029, %v4242
        %v4245 = vmul.f32 %v4223, %v4243
        %v4246 = vmul.f32 %v4224, %v4243
        %v4247 = vmul.f32 %v4225, %v4243
        %v4248 = vmul.f32 %v4226, %v4243
        %v4249 = vmul.f32 %v4227, %v4243
        %v4250 = vmul.f32 %v4228, %v4243
        %v4251 = vmul.f32 %v4229, %v4243
        %v4252 = vmul.f32 %v4230, %v4243
        %v4253 = vmul.f32 %v4231, %v4243
        %v4254 = vmul.f32 %v4232, %v4243
        %v4255 = vmul.f32 %v4233, %v4243
        %v4256 = vmul.f32 %v4234, %v4243
        %v4257 = vmul.f32 %v4235, %v4243
        %v4258 = vmul.f32 %v4236, %v4243
        %v4259 = vmul.f32 %v4237, %v4243
        %v4260 = vmul.f32 %v4238, %v4243
        %v4262 = vlaneseq
        %v4263 = vshrl.u32 %v4262, 7
        %v4264 = vsub.s32 0, %v4263
        %v4265 = vrot.slane %v4030, %v4264
        %v4267 = vadd.f32 %v4245, %v4265
        %v4268 = vadd.f32 %v4246, %v4265
        %v4269 = vadd.f32 %v4247, %v4265
        %v4270 = vadd.f32 %v4248, %v4265
        %v4271 = vadd.f32 %v4249, %v4265
        %v4272 = vadd.f32 %v4250, %v4265
        %v4273 = vadd.f32 %v4251, %v4265
        %v4274 = vadd.f32 %v4252, %v4265
        %v4275 = vadd.f32 %v4253, %v4265
        %v4276 = vadd.f32 %v4254, %v4265
        %v4277 = vadd.f32 %v4255, %v4265
        %v4278 = vadd.f32 %v4256, %v4265
        %v4279 = vadd.f32 %v4257, %v4265
        %v4280 = vadd.f32 %v4258, %v4265
        %v4281 = vadd.f32 %v4259, %v4265
        %v4282 = vadd.f32 %v4260, %v4265
        %v4283 = vpack.c.bf16 %v4268, %v4267
        %v4284 = vpack.c.bf16 %v4270, %v4269
        %v4285 = vpack.c.bf16 %v4272, %v4271
        %v4286 = vpack.c.bf16 %v4274, %v4273
        %v4287 = vpack.c.bf16 %v4276, %v4275
        %v4288 = vpack.c.bf16 %v4278, %v4277
        %v4289 = vpack.c.bf16 %v4280, %v4279
        %v4290 = vpack.c.bf16 %v4282, %v4281
        %v4291 = vld [vmem:[%s813] sm:$0xf]
        %v4292 = vld [vmem:[%s813 + $0x4] sm:$0xf]
        %v4293 = vld [vmem:[%s813 + $0x8] sm:$0xf]
        %v4294 = vld [vmem:[%s813 + $0xc] sm:$0xf]
        %v4295 = vld [vmem:[%s821] sm:$0x1]
        %v4297 = vlaneseq
        %v4298 = vshrl.u32 %v4297, 7
        %v4299 = vsub.s32 0, %v4298
        %v4300 = vrot.slane %v4295, %v4299
        %v4306 = vunpack.c.l.b16 %v4291
        %v4307 = vunpack.c.l.b16 %v4292
        %v4308 = vunpack.c.l.b16 %v4293
        %v4309 = vunpack.c.l.b16 %v4294
        %v4310 = vpack.c.b16 %v4307, %v4306
        %v4311 = vpack.c.b16 %v4309, %v4308
        %v4315 = vsel %vm1006, %v4283, 0
        %v4318 = vsel %vm1006, %v4284, 0
        %v4321 = vsel %vm1006, %v4285, 0
        %v4324 = vsel %vm1006, %v4286, 0
        %v4327 = vsel %vm1006, %v4287, 0
        %v4330 = vsel %vm1006, %v4288, 0
        %v4333 = vsel %vm1006, %v4289, 0
        %v4336 = vsel %vm1006, %v4290, 0
        %4338 = vmatprep.subr.bf16.mxu0 0
        %4339 = vmatpush1.bf16.msra.mxu0 %v4310
        %4340 = vmatprep.subr.bf16.mxu0 0
        %4341 = vmatpush1.bf16.msra.mxu0 %v4311
        %4342 = vmatprep.subr.bf16.mxu0 0
        %4343 = vmatpush1.bf16.msra.mxu0 0
        %4344 = vmatprep.subr.bf16.mxu0 0
        %4345 = vmatpush1.bf16.msra.mxu0 0
        %4346 = vmatprep.subr.bf16.mxu0 0
        %4347 = vmatpush1.bf16.msra.mxu0 0
        %4348 = vmatprep.subr.bf16.mxu0 0
        %4349 = vmatpush1.bf16.msra.mxu0 0
        %4350 = vmatprep.subr.bf16.mxu0 0
        %4351 = vmatpush1.bf16.msra.mxu0 0
        %4352 = vmatprep.subr.bf16.mxu0 0
        %4353 = vmatpush1.bf16.msra.mxu0 0
        %4354 = vmatprep.subr.bf16.mxu0 0
        %4355 = vmatpush1.bf16.msra.mxu0 0
        %4356 = vmatprep.subr.bf16.mxu0 0
        %4357 = vmatpush1.bf16.msra.mxu0 0
        %4358 = vmatprep.subr.bf16.mxu0 0
        %4359 = vmatpush1.bf16.msra.mxu0 0
        %4360 = vmatprep.subr.bf16.mxu0 0
        %4361 = vmatpush1.bf16.msra.mxu0 0
        %4362 = vmatprep.subr.bf16.mxu0 0
        %4363 = vmatpush1.bf16.msra.mxu0 0
        %4364 = vmatprep.subr.bf16.mxu0 0
        %4365 = vmatpush1.bf16.msra.mxu0 0
        %4366 = vmatprep.subr.bf16.mxu0 0
        %4367 = vmatpush1.bf16.msra.mxu0 0
        %4368 = vmatprep.subr.bf16.mxu0 0
        %4369 = vmatpush1.bf16.msra.mxu0 0
        %4370 = vmatprep.mubr.bf16.mxu0 0
        %4371 = vmatmul.mubr.bf16.gmra.mrb[0].mxu0 %v4315
        %v4372 = vpop.f32.mrb[0].mxu0
        %v4373 = vadd.f32 %v4300, %v4372
        %v4374 = vpop.f32.mrb[0].mxu0
        %v4375 = vpop.f32.mrb[0].mxu0
        %v4376 = vadd.f32 %v4300, %v4375
        %v4377 = vpop.f32.mrb[0].mxu0
        %4378 = vmatprep.mubr.bf16.mxu0 0
        %4379 = vmatmul.mubr.bf16.gmra.mrb[0].mxu0 %v4318
        %v4380 = vpop.f32.mrb[0].mxu0
        %v4381 = vadd.f32 %v4300, %v4380
        %v4382 = vpop.f32.mrb[0].mxu0
        %v4383 = vpop.f32.mrb[0].mxu0
        %v4384 = vadd.f32 %v4300, %v4383
        %v4385 = vpop.f32.mrb[0].mxu0
        %4386 = vmatprep.mubr.bf16.mxu0 0
        %4387 = vmatmul.mubr.bf16.gmra.mrb[0].mxu0 %v4321
        %v4388 = vpop.f32.mrb[0].mxu0
        %v4389 = vadd.f32 %v4300, %v4388
        %v4390 = vpop.f32.mrb[0].mxu0
        %v4391 = vpop.f32.mrb[0].mxu0
        %v4392 = vadd.f32 %v4300, %v4391
        %v4393 = vpop.f32.mrb[0].mxu0
        %4394 = vmatprep.mubr.bf16.mxu0 0
        %4395 = vmatmul.mubr.bf16.gmra.mrb[0].mxu0 %v4324
        %v4396 = vpop.f32.mrb[0].mxu0
        %v4397 = vadd.f32 %v4300, %v4396
        %v4398 = vpop.f32.mrb[0].mxu0
        %v4399 = vpop.f32.mrb[0].mxu0
        %v4400 = vadd.f32 %v4300, %v4399
        %v4401 = vpop.f32.mrb[0].mxu0
        %4402 = vmatprep.mubr.bf16.mxu0 0
        %4403 = vmatmul.mubr.bf16.gmra.mrb[0].mxu0 %v4327
        %v4404 = vpop.f32.mrb[0].mxu0
        %v4405 = vadd.f32 %v4300, %v4404
        %v4406 = vpop.f32.mrb[0].mxu0
        %v4407 = vpop.f32.mrb[0].mxu0
        %v4408 = vadd.f32 %v4300, %v4407
        %v4409 = vpop.f32.mrb[0].mxu0
        %4410 = vmatprep.mubr.bf16.mxu0 0
        %4411 = vmatmul.mubr.bf16.gmra.mrb[0].mxu0 %v4330
        %v4412 = vpop.f32.mrb[0].mxu0
        %v4413 = vadd.f32 %v4300, %v4412
        %v4414 = vpop.f32.mrb[0].mxu0
        %v4415 = vpop.f32.mrb[0].mxu0
        %v4416 = vadd.f32 %v4300, %v4415
        %v4417 = vpop.f32.mrb[0].mxu0
        %4418 = vmatprep.mubr.bf16.mxu0 0
        %4419 = vmatmul.mubr.bf16.gmra.mrb[0].mxu0 %v4333
        %v4420 = vpop.f32.mrb[0].mxu0
        %v4421 = vadd.f32 %v4300, %v4420
        %v4422 = vpop.f32.mrb[0].mxu0
        %v4423 = vpop.f32.mrb[0].mxu0
        %v4424 = vadd.f32 %v4300, %v4423
        %v4425 = vpop.f32.mrb[0].mxu0
        %4426 = vmatprep.mubr.bf16.mxu0 0
        %4427 = vmatmul.mubr.bf16.gmra.mrb[0].mxu0 %v4336
        %v4428 = vpop.f32.mrb[0].mxu0
        %v4429 = vadd.f32 %v4300, %v4428
        %v4430 = vpop.f32.mrb[0].mxu0
        %v4431 = vpop.f32.mrb[0].mxu0
        %v4432 = vadd.f32 %v4300, %v4431
        %v4433 = vpop.f32.mrb[0].mxu0
        %4434 = vdwg.mxu0
        %v4435 = vmul.f32 %v4373, 0.5
        %v4436 = vmul.f32 %v4376, 0.5
        %v4437 = vmul.f32 %v4381, 0.5
        %v4438 = vmul.f32 %v4384, 0.5
        %v4439 = vmul.f32 %v4389, 0.5
        %v4440 = vmul.f32 %v4392, 0.5
        %v4441 = vmul.f32 %v4397, 0.5
        %v4442 = vmul.f32 %v4400, 0.5
        %v4443 = vmul.f32 %v4405, 0.5
        %v4444 = vmul.f32 %v4408, 0.5
        %v4445 = vmul.f32 %v4413, 0.5
        %v4446 = vmul.f32 %v4416, 0.5
        %v4447 = vmul.f32 %v4421, 0.5
        %v4448 = vmul.f32 %v4424, 0.5
        %v4449 = vmul.f32 %v4429, 0.5
        %v4450 = vmul.f32 %v4432, 0.5
        %v4451 = vmul.f32 %v4373, 0.70710677
        %v4452 = vmul.f32 %v4376, 0.70710677
        %v4453 = vmul.f32 %v4381, 0.70710677
        %v4454 = vmul.f32 %v4384, 0.70710677
        %v4455 = vmul.f32 %v4389, 0.70710677
        %v4456 = vmul.f32 %v4392, 0.70710677
        %v4457 = vmul.f32 %v4397, 0.70710677
        %v4458 = vmul.f32 %v4400, 0.70710677
        %v4459 = vmul.f32 %v4405, 0.70710677
        %v4460 = vmul.f32 %v4408, 0.70710677
        %v4461 = vmul.f32 %v4413, 0.70710677
        %v4462 = vmul.f32 %v4416, 0.70710677
        %v4463 = vmul.f32 %v4421, 0.70710677
        %v4464 = vmul.f32 %v4424, 0.70710677
        %v4465 = vmul.f32 %v4429, 0.70710677
        %v4466 = vmul.f32 %v4432, 0.70710677
        %v4467 = verf.f32.pop %v4451
        %v4468 = verf.f32.pop %v4452
        %v4469 = verf.f32.pop %v4453
        %v4470 = verf.f32.pop %v4454
        %v4471 = verf.f32.pop %v4455
        %v4472 = verf.f32.pop %v4456
        %v4473 = verf.f32.pop %v4457
        %v4474 = verf.f32.pop %v4458
        %v4475 = verf.f32.pop %v4459
        %v4476 = verf.f32.pop %v4460
        %v4477 = verf.f32.pop %v4461
        %v4478 = verf.f32.pop %v4462
        %v4479 = verf.f32.pop %v4463
        %v4480 = verf.f32.pop %v4464
        %v4481 = verf.f32.pop %v4465
        %v4482 = verf.f32.pop %v4466
        %v4483 = vadd.f32 %v4467, 1.0
        %v4484 = vadd.f32 %v4468, 1.0
        %v4485 = vadd.f32 %v4469, 1.0
        %v4486 = vadd.f32 %v4470, 1.0
        %v4487 = vadd.f32 %v4471, 1.0
        %v4488 = vadd.f32 %v4472, 1.0
        %v4489 = vadd.f32 %v4473, 1.0
        %v4490 = vadd.f32 %v4474, 1.0
        %v4491 = vadd.f32 %v4475, 1.0
        %v4492 = vadd.f32 %v4476, 1.0
        %v4493 = vadd.f32 %v4477, 1.0
        %v4494 = vadd.f32 %v4478, 1.0
        %v4495 = vadd.f32 %v4479, 1.0
        %v4496 = vadd.f32 %v4480, 1.0
        %v4497 = vadd.f32 %v4481, 1.0
        %v4498 = vadd.f32 %v4482, 1.0
        %v4499 = vmul.f32 %v4435, %v4483
        %v4500 = vmul.f32 %v4436, %v4484
        %v4501 = vmul.f32 %v4437, %v4485
        %v4502 = vmul.f32 %v4438, %v4486
        %v4503 = vmul.f32 %v4439, %v4487
        %v4504 = vmul.f32 %v4440, %v4488
        %v4505 = vmul.f32 %v4441, %v4489
        %v4506 = vmul.f32 %v4442, %v4490
        %v4507 = vmul.f32 %v4443, %v4491
        %v4508 = vmul.f32 %v4444, %v4492
        %v4509 = vmul.f32 %v4445, %v4493
        %v4510 = vmul.f32 %v4446, %v4494
        %v4511 = vmul.f32 %v4447, %v4495
        %v4512 = vmul.f32 %v4448, %v4496
        %v4513 = vmul.f32 %v4449, %v4497
        %v4514 = vmul.f32 %v4450, %v4498
        %v4515 = vpack.c.bf16 %v4500, %v4499
        %v4516 = vpack.c.bf16 %v4502, %v4501
        %v4517 = vpack.c.bf16 %v4504, %v4503
        %v4518 = vpack.c.bf16 %v4506, %v4505
        %v4519 = vpack.c.bf16 %v4508, %v4507
        %v4520 = vpack.c.bf16 %v4510, %v4509
        %v4521 = vpack.c.bf16 %v4512, %v4511
        %v4522 = vpack.c.bf16 %v4514, %v4513
        %v4523 = vld [vmem:[%s830] sm:$0xf]
        %v4524 = vld [vmem:[%s830 + $0x4] sm:$0xf]
        %v4525 = vld [vmem:[%s830 + $0x8] sm:$0xf]
        %v4526 = vld [vmem:[%s830 + $0xc] sm:$0xf]
        %v4527 = vld [vmem:[%s838] sm:$0x1]
        %v4529 = vlaneseq
        %v4530 = vshrl.u32 %v4529, 7
        %v4531 = vsub.s32 0, %v4530
        %v4532 = vrot.slane %v4527, %v4531
        %v4538 = vunpack.c.l.b16 %v4523
        %v4539 = vunpack.c.l.b16 %v4524
        %v4540 = vunpack.c.l.b16 %v4525
        %v4541 = vunpack.c.l.b16 %v4526
        %v4542 = vpack.c.b16 %v4539, %v4538
        %v4543 = vpack.c.b16 %v4541, %v4540
        %v4547 = vsel %vm1006, %v4515, 0
        %v4550 = vsel %vm1006, %v4516, 0
        %v4553 = vsel %vm1006, %v4517, 0
        %v4556 = vsel %vm1006, %v4518, 0
        %v4559 = vsel %vm1006, %v4519, 0
        %v4562 = vsel %vm1006, %v4520, 0
        %v4565 = vsel %vm1006, %v4521, 0
        %v4568 = vsel %vm1006, %v4522, 0
        %4570 = vmatprep.subr.bf16.mxu0 0
        %4571 = vmatpush1.bf16.msra.mxu0 %v4542
        %4572 = vmatprep.subr.bf16.mxu0 0
        %4573 = vmatpush1.bf16.msra.mxu0 %v4543
        %4574 = vmatprep.subr.bf16.mxu0 0
        %4575 = vmatpush1.bf16.msra.mxu0 0
        %4576 = vmatprep.subr.bf16.mxu0 0
        %4577 = vmatpush1.bf16.msra.mxu0 0
        %4578 = vmatprep.subr.bf16.mxu0 0
        %4579 = vmatpush1.bf16.msra.mxu0 0
        %4580 = vmatprep.subr.bf16.mxu0 0
        %4581 = vmatpush1.bf16.msra.mxu0 0
        %4582 = vmatprep.subr.bf16.mxu0 0
        %4583 = vmatpush1.bf16.msra.mxu0 0
        %4584 = vmatprep.subr.bf16.mxu0 0
        %4585 = vmatpush1.bf16.msra.mxu0 0
        %4586 = vmatprep.subr.bf16.mxu0 0
        %4587 = vmatpush1.bf16.msra.mxu0 0
        %4588 = vmatprep.subr.bf16.mxu0 0
        %4589 = vmatpush1.bf16.msra.mxu0 0
        %4590 = vmatprep.subr.bf16.mxu0 0
        %4591 = vmatpush1.bf16.msra.mxu0 0
        %4592 = vmatprep.subr.bf16.mxu0 0
        %4593 = vmatpush1.bf16.msra.mxu0 0
        %4594 = vmatprep.subr.bf16.mxu0 0
        %4595 = vmatpush1.bf16.msra.mxu0 0
        %4596 = vmatprep.subr.bf16.mxu0 0
        %4597 = vmatpush1.bf16.msra.mxu0 0
        %4598 = vmatprep.subr.bf16.mxu0 0
        %4599 = vmatpush1.bf16.msra.mxu0 0
        %4600 = vmatprep.subr.bf16.mxu0 0
        %4601 = vmatpush1.bf16.msra.mxu0 0
        %4602 = vmatprep.mubr.bf16.mxu0 0
        %4603 = vmatmul.mubr.bf16.gmra.mrb[0].mxu0 %v4547
        %v4604 = vpop.f32.mrb[0].mxu0
        %v4605 = vadd.f32 %v4532, %v4604
        %v4606 = vpop.f32.mrb[0].mxu0
        %v4607 = vpop.f32.mrb[0].mxu0
        %v4608 = vadd.f32 %v4532, %v4607
        %v4609 = vpop.f32.mrb[0].mxu0
        %4610 = vmatprep.mubr.bf16.mxu0 0
        %4611 = vmatmul.mubr.bf16.gmra.mrb[0].mxu0 %v4550
        %v4612 = vpop.f32.mrb[0].mxu0
        %v4613 = vadd.f32 %v4532, %v4612
        %v4614 = vpop.f32.mrb[0].mxu0
        %v4615 = vpop.f32.mrb[0].mxu0
        %v4616 = vadd.f32 %v4532, %v4615
        %v4617 = vpop.f32.mrb[0].mxu0
        %4618 = vmatprep.mubr.bf16.mxu0 0
        %4619 = vmatmul.mubr.bf16.gmra.mrb[0].mxu0 %v4553
        %v4620 = vpop.f32.mrb[0].mxu0
        %v4621 = vadd.f32 %v4532, %v4620
        %v4622 = vpop.f32.mrb[0].mxu0
        %v4623 = vpop.f32.mrb[0].mxu0
        %v4624 = vadd.f32 %v4532, %v4623
        %v4625 = vpop.f32.mrb[0].mxu0
        %4626 = vmatprep.mubr.bf16.mxu0 0
        %4627 = vmatmul.mubr.bf16.gmra.mrb[0].mxu0 %v4556
        %v4628 = vpop.f32.mrb[0].mxu0
        %v4629 = vadd.f32 %v4532, %v4628
        %v4630 = vpop.f32.mrb[0].mxu0
        %v4631 = vpop.f32.mrb[0].mxu0
        %v4632 = vadd.f32 %v4532, %v4631
        %v4633 = vpop.f32.mrb[0].mxu0
        %4634 = vmatprep.mubr.bf16.mxu0 0
        %4635 = vmatmul.mubr.bf16.gmra.mrb[0].mxu0 %v4559
        %v4636 = vpop.f32.mrb[0].mxu0
        %v4637 = vadd.f32 %v4532, %v4636
        %v4638 = vpop.f32.mrb[0].mxu0
        %v4639 = vpop.f32.mrb[0].mxu0
        %v4640 = vadd.f32 %v4532, %v4639
        %v4641 = vpop.f32.mrb[0].mxu0
        %4642 = vmatprep.mubr.bf16.mxu0 0
        %4643 = vmatmul.mubr.bf16.gmra.mrb[0].mxu0 %v4562
        %v4644 = vpop.f32.mrb[0].mxu0
        %v4645 = vadd.f32 %v4532, %v4644
        %v4646 = vpop.f32.mrb[0].mxu0
        %v4647 = vpop.f32.mrb[0].mxu0
        %v4648 = vadd.f32 %v4532, %v4647
        %v4649 = vpop.f32.mrb[0].mxu0
        %4650 = vmatprep.mubr.bf16.mxu0 0
        %4651 = vmatmul.mubr.bf16.gmra.mrb[0].mxu0 %v4565
        %v4652 = vpop.f32.mrb[0].mxu0
        %v4653 = vadd.f32 %v4532, %v4652
        %v4654 = vpop.f32.mrb[0].mxu0
        %v4655 = vpop.f32.mrb[0].mxu0
        %v4656 = vadd.f32 %v4532, %v4655
        %v4657 = vpop.f32.mrb[0].mxu0
        %4658 = vmatprep.mubr.bf16.mxu0 0
        %4659 = vmatmul.mubr.bf16.gmra.mrb[0].mxu0 %v4568
        %v4660 = vpop.f32.mrb[0].mxu0
        %v4661 = vadd.f32 %v4532, %v4660
        %v4662 = vpop.f32.mrb[0].mxu0
        %v4663 = vpop.f32.mrb[0].mxu0
        %v4664 = vadd.f32 %v4532, %v4663
        %v4665 = vpop.f32.mrb[0].mxu0
        %4666 = vdwg.mxu0
        %v4667 = vadd.f32 %v4605, %v4013
        %v4668 = vadd.f32 %v4608, %v4014
        %v4669 = vadd.f32 %v4613, %v4015
        %v4670 = vadd.f32 %v4616, %v4016
        %v4671 = vadd.f32 %v4621, %v4017
        %v4672 = vadd.f32 %v4624, %v4018
        %v4673 = vadd.f32 %v4629, %v4019
        %v4674 = vadd.f32 %v4632, %v4020
        %v4675 = vadd.f32 %v4637, %v4021
        %v4676 = vadd.f32 %v4640, %v4022
        %v4677 = vadd.f32 %v4645, %v4023
        %v4678 = vadd.f32 %v4648, %v4024
        %v4679 = vadd.f32 %v4653, %v4025
        %v4680 = vadd.f32 %v4656, %v4026
        %v4681 = vadd.f32 %v4661, %v4027
        %v4682 = vadd.f32 %v4664, %v4028
        %4683 = vst.msk [vmem:[#allocation20] sm:$0xff] %vm1006, %v4667
        %4684 = vst.msk [vmem:[#allocation20 + $0x8] sm:$0xff] %vm1006, %v4668
        %4685 = vst.msk [vmem:[#allocation20 + $0x10] sm:$0xff] %vm1006, %v4669
        %4686 = vst.msk [vmem:[#allocation20 + $0x18] sm:$0xff] %vm1006, %v4670
        %4687 = vst.msk [vmem:[#allocation20 + $0x20] sm:$0xff] %vm1006, %v4671
        %4688 = vst.msk [vmem:[#allocation20 + $0x28] sm:$0xff] %vm1006, %v4672
        %4689 = vst.msk [vmem:[#allocation20 + $0x30] sm:$0xff] %vm1006, %v4673
        %4690 = vst.msk [vmem:[#allocation20 + $0x38] sm:$0xff] %vm1006, %v4674
        %4691 = vst.msk [vmem:[#allocation20 + $0x40] sm:$0xff] %vm1006, %v4675
        %4692 = vst.msk [vmem:[#allocation20 + $0x48] sm:$0xff] %vm1006, %v4676
        %4693 = vst.msk [vmem:[#allocation20 + $0x50] sm:$0xff] %vm1006, %v4677
        %4694 = vst.msk [vmem:[#allocation20 + $0x58] sm:$0xff] %vm1006, %v4678
        %4695 = vst.msk [vmem:[#allocation20 + $0x60] sm:$0xff] %vm1006, %v4679
        %4696 = vst.msk [vmem:[#allocation20 + $0x68] sm:$0xff] %vm1006, %v4680
        %4697 = vst.msk [vmem:[#allocation20 + $0x70] sm:$0xff] %vm1006, %v4681
        %4698 = vst.msk [vmem:[#allocation20 + $0x78] sm:$0xff] %vm1006, %v4682
        // Predicated region
        $region145: #{cablock_forward.1} parent=83 // pred_check
          %p4699 = pneg %p449
        $region146: #{cablock_forward.1} parent=83 // pred_check_branch
          %4701 = sbr.rel (%p4699) target = $region148
        $region147: #{cablock_forward.1} parent=83 // pred_region
          %s4703 = ssub.s32 2048, 2048
          %4704 = vsyncadd [#allocation5], %s4703
          %s4705 = sshll.u32 [#allocation20], 4
          %s4706 = int_to_ptr.vmem [resolvable:$true] %s4705
          %4711 = dma.vmem_to_hbm [thread:$0]  %s4706, 2048, %s16, [#allocation5], 128, 128, 8
        $region148: #{cablock_forward.1} parent=83 // pred_fallthru
          _
        // Predicated region
        $region149: #{cablock_forward.1} parent=83 // pred_check
          %p4712 = pneg %p449
        $region150: #{cablock_forward.1} parent=83 // pred_check_branch
          %4714 = sbr.rel (%p4712) target = $region152
        $region151: #{cablock_forward.1} parent=83 // pred_region
          %4715 = dma.done [#allocation5], 2048
        $region152: #{cablock_forward.1} parent=83 // pred_fallthru
          _
      $region84: #{cablock_forward.1} parent=5 // pred_fallthru
        _
      %p4716 = scmp.le.s32.totalorder 2, %s25
      // Predicated region
      $region153: #{cablock_forward.1} parent=5 // pred_check
        %p4717 = pneg %p4716
      $region154: #{cablock_forward.1} parent=5 // pred_check_branch
        %4719 = sbr.rel (%p4717) target = $region156
      $region155: #{cablock_forward.1} parent=5 // pred_region
        %s4720 = ssub.s32 %s25, 2
      $region156: #{cablock_forward.1} parent=5 // pred_fallthru
        _
    $region6: #{cablock_forward.1} parent=1 // loop_footer
      %s29 = sadd.s32 1, %s25
    $region7: #{cablock_forward.1} parent=1 // loop_footer_branch
      %24 = sbr.rel target = $region3
    $region8: #{cablock_forward.1} parent=1 // loop_exit
      _
    %4721 = vsyncpa [#allocation4], 1
    %s4722 = scalar_lea.sflag [#allocation4], 1
    %4723 = vsyncpa %s4722, 1
    %4724 = vsyncpa [#allocation7], 1
    %4725 = vsyncpa [#allocation5], 1
    %s4726 = scalar_lea.sflag [#allocation5], 1
    %4727 = vsyncpa %s4726, 1

</llo_original>
